<compile_context>
chip_gen: v6e
topology: v6e:2x2x1
jax: 0.10.0
libtpu: 0.0.40
codegen_flags: <defaults>
</compile_context>

<pallas_src>
import functools

import jax
import jax.numpy as jnp
from jax.experimental import pallas as pl
from jax.experimental.pallas import tpu as pltpu

KSIZE = 3            # ksize=3 -> pad=1 (the PyTorch module default)
PAD = (KSIZE - 1) // 2
LANE = 128           # TPU lane width


def _round_up(x, m):
    return (x + m - 1) // m * m


def _vmem_caps():
    """(vmem_limit_bytes, per-step tile budget) derived from the chip's VMEM."""
    cap = 64 << 20                       # conservative fallback (v7x per-core)
    try:
        info = pltpu.get_tpu_info()
        cap = int(getattr(info, "vmem_capacity_bytes", cap)) or cap
    except Exception:
        pass
    # 96 MiB scoped limit on the 128 MiB parts (v5e/v6e), 48 MiB on v7x.
    vmem_limit = int(min(max(cap * 3 // 4, 32 << 20), 96 << 20))
    tile_budget = max(vmem_limit - (12 << 20), 16 << 20)
    return vmem_limit, tile_budget


def _pick_tile_h(N, H, W, Cin, co_store, cpad, in_item, out_item, budget, fused):
    """Largest even divisor of H whose live VMEM set fits `budget`, preferring
    >= 2 total grid steps (v7x dual-TC) and M = TH*W a multiple of 256 (MXU rows)."""
    Wp = W + 2 * PAD
    cands = [th for th in range(2, H + 1, 2) if H % th == 0]
    if not cands:
        return None

    def footprint(th):
        band = 2 * th * Wp * Cin * in_item                 # main band, double-buffered
        halo = 2 * 2 * Wp * Cin * in_item                  # 2-row halo, double-buffered
        wts = 2 * (9 * Cin * cpad * in_item + co_store * 4)  # weights + bias
        outb = 2 * th * W * co_store * out_item            # output tile, double-buffered
        acc = th * W * cpad * 4                            # f32 accumulator
        patch = th * W * (9 * Cin if fused else Cin) * in_item
        return band + halo + wts + outb + acc + patch + (2 << 20)

    fitting = [th for th in cands if footprint(th) <= budget] or [cands[0]]

    def score(th):
        m = th * W
        steps = N * (H // th)
        return (steps >= 2, m % 256 == 0, m % 128 == 0, th)

    return max(fitting, key=score)


def _conv_relu_kernel(xa_ref, xb_ref, w_ref, b_ref, o_ref, *, fused):
    # xa_ref: (1, TH,  W+2, Cin)  main band of the spatially padded input (compute dtype)
    # xb_ref: (1, 2,   W+2, Cin)  2-row bottom halo (first rows of the next band)
    # w_ref : (9*Cin, Cpad)       fused-K weight, N padded to Cpad (128-multiple)
    # b_ref : (1, Co)             bias, f32, at the store width
    # o_ref : (1, TH, W, Co)      output tile (Co = Cout when Cout < 128)
    _, TH, W, Co = o_ref.shape
    Cin = xa_ref.shape[-1]
    Cpad = w_ref.shape[-1]
    cdt = w_ref.dtype            # matmul operand dtype (bf16 on v6e/v7x, f32 on v5e)

    # (TH+2, W+2, Cin) halo band assembled in the compute dtype (no f32 round trip).
    band = jnp.concatenate([xa_ref[0].astype(cdt), xb_ref[0].astype(cdt)], axis=0)

    if fused:
        # Cin % 128 == 0: the 9-tap lane concat lands on 128-aligned offsets (pure
        # vreg placement) -> one MXU matmul with K = 9*Cin.
        taps = [band[kh:kh + TH, kw:kw + W, :]
                for kh in range(KSIZE) for kw in range(KSIZE)]
        patch = jnp.concatenate(taps, axis=-1).reshape(TH * W, KSIZE * KSIZE * Cin)
        acc = jnp.dot(patch, w_ref[...], preferred_element_type=jnp.float32)
    else:
        # Unaligned / small Cin: a narrow lane-concat would lower to lane-shift +
        # select packing plus a materialized patch. Instead: 9 matmuls on direct
        # shifted views (K = Cin each), accumulated in f32 registers.
        acc = None
        for kh in range(KSIZE):
            for kw in range(KSIZE):
                tap = band[kh:kh + TH, kw:kw + W, :].reshape(TH * W, Cin)
                k0 = (kh * KSIZE + kw) * Cin
                part = jnp.dot(tap, w_ref[k0:k0 + Cin, :],
                               preferred_element_type=jnp.float32)
                acc = part if acc is None else acc + part

    if Co < Cpad:                      # drop the MXU-only lane padding before the epilogue
        acc = acc[:, :Co]
    # Single fused epilogue: bias + ReLU + cast + store.
    acc = jnp.maximum(acc + b_ref[...], 0.0)
    o_ref[...] = acc.reshape(1, TH, W, Co).astype(o_ref.dtype)


def base_conv_nhwc(x_nhwc, w_oihw, bias, *, tile_h=None, compute_dtype=None):
    """Conv2d(k=3, s=1, p=1, bias) + ReLU on NHWC input; returns NHWC."""
    N, H, W, Cin = x_nhwc.shape
    Cout = w_oihw.shape[0]
    assert w_oihw.shape == (Cout, Cin, KSIZE, KSIZE)
    assert bias.shape == (Cout,)
    if compute_dtype is None:
        compute_dtype = x_nhwc.dtype
    out_dtype = x_nhwc.dtype
    in_item = jnp.dtype(compute_dtype).itemsize
    out_item = jnp.dtype(out_dtype).itemsize

    # Layout-preserving reshapes ((TH,W,C)<->(TH*W,C)) need sublane-granular W.
    # TODO(synk): pad W to the next multiple of 8 instead of asserting.
    assert W % 8 == 0, "W must be a multiple of 8 (sublane granularity)"
    assert H % 2 == 0, "H must be even (2-row bottom-halo blocks)"

    Cpad = _round_up(Cout, LANE)              # matmul N width (MXU-friendly)
    Co = Cout if Cout < LANE else Cpad        # HBM store width (no inflated writeback)
    fused = (Cin % LANE == 0)                 # fused 9*Cin concat only when lane-aligned
    Wp = W + 2 * PAD

    vmem_limit, tile_budget = _vmem_caps()
    if tile_h is None:
        TH = _pick_tile_h(N, H, W, Cin, Co, Cpad, in_item, out_item,
                          tile_budget, fused)
    else:
        TH = tile_h
    assert TH is not None and H % TH == 0 and TH % 2 == 0, \
        "tile_h must be an even divisor of H"
    nH = H // TH

    # Spatial zero pad for 'same' conv (fuses with the caller's cast/transpose).
    x_pad = jnp.pad(x_nhwc.astype(compute_dtype),
                    ((0, 0), (PAD, PAD), (PAD, PAD), (0, 0)))

    # OIHW -> (KH*KW*Cin, Cout) fused-K weight, N zero-padded to Cpad lanes.
    w_fused = jnp.transpose(w_oihw, (2, 3, 1, 0)).reshape(KSIZE * KSIZE * Cin, Cout)
    w_fused = jnp.pad(w_fused, ((0, 0), (0, Cpad - Cout))).astype(compute_dtype)
    b_vec = jnp.pad(bias.astype(jnp.float32), (0, Co - Cout)).reshape(1, Co)

    cost = pl.CostEstimate(
        flops=2 * N * H * W * KSIZE * KSIZE * Cin * Cout,
        transcendentals=0,
        bytes_accessed=(x_pad.size * in_item + w_fused.size * in_item
                        + b_vec.size * 4 + N * H * W * Co * out_item))

    kernel = functools.partial(_conv_relu_kernel, fused=fused)

    out = pl.pallas_call(
        kernel,
        out_shape=jax.ShapeDtypeStruct((N, H, W, Co), out_dtype),
        grid_spec=pltpu.PrefetchScalarGridSpec(
            num_scalar_prefetch=0,
            grid=(N, nH),
            in_specs=[
                # main TH-row band of the padded input
                pl.BlockSpec((1, TH, Wp, Cin), lambda n, h: (n, h, 0, 0)),
                # 2-row bottom halo = first 2 rows of the next band
                pl.BlockSpec((1, 2, Wp, Cin),
                             lambda n, h: (n, (h + 1) * (TH // 2), 0, 0)),
                # weight and bias: constant block index -> resident across the grid
                pl.BlockSpec((KSIZE * KSIZE * Cin, Cpad), lambda n, h: (0, 0)),
                pl.BlockSpec((1, Co), lambda n, h: (0, 0)),
            ],
            out_specs=pl.BlockSpec((1, TH, W, Co), lambda n, h: (n, h, 0, 0)),
        ),
        compiler_params=pltpu.CompilerParams(
            dimension_semantics=("parallel", "parallel"),
            vmem_limit_bytes=vmem_limit),
        cost_estimate=cost,
    )(x_pad, x_pad, w_fused, b_vec)

    if Co != Cout:                 # only when Cout >= 128 and not a 128-multiple
        out = out[..., :Cout]
    return out


@functools.partial(jax.jit, static_argnames=("tile_h", "compute_dtype"))
def base_conv(x_nchw, w_oihw, bias, *, tile_h=None, compute_dtype=None):
    """PyTorch-layout entry: NCHW in, NCHW out. compute_dtype=bf16 targets the
    v6e/v7x MXU peak (f32 accumulation); default f32 matches PyTorch exactly."""
    x_nhwc = jnp.transpose(x_nchw, (0, 2, 3, 1))
    y = base_conv_nhwc(x_nhwc, w_oihw, bias,
                       tile_h=tile_h, compute_dtype=compute_dtype)
    return jnp.transpose(y, (0, 3, 1, 2))


if __name__ == "__main__":
    # ---- Test 1: the module's shapes (small Cin/Cout -> direct-view matmul path,
    # narrow Cout=8 store). Exact f32 semantics vs XLA reference. ----
    N, Cin, Cout, H, W = 2, 4, 8, 16, 16
    key = jax.random.PRNGKey(0)
    kx, kw_, kb = jax.random.split(key, 3)

    x = jax.random.normal(kx, (N, Cin, H, W), dtype=jnp.float32)
    fan_in = Cin * KSIZE * KSIZE
    bound = 1.0 / (fan_in ** 0.5)
    w = jax.random.uniform(kw_, (Cout, Cin, KSIZE, KSIZE),
                           minval=-bound, maxval=bound, dtype=jnp.float32)
    b = jax.random.uniform(kb, (Cout,), minval=-bound, maxval=bound,
                           dtype=jnp.float32)

    ref = jax.lax.conv_general_dilated(
        x, w, window_strides=(1, 1), padding=((1, 1), (1, 1)),
        dimension_numbers=("NCHW", "OIHW", "NCHW"))
    ref = jnp.maximum(ref + b[None, :, None, None], 0.0)

    out = jax.block_until_ready(base_conv(x, w, b))
    assert out.shape == (N, Cout, H, W)
    assert jnp.allclose(out, ref, atol=1e-5, rtol=1e-5)

    # bf16 compute path (v6e/v7x MXU); f32 accumulation -> loose tolerance.
    out_bf16 = jax.block_until_ready(base_conv(x, w, b, compute_dtype=jnp.bfloat16))
    assert out_bf16.shape == (N, Cout, H, W)
    assert jnp.allclose(out_bf16, ref, atol=5e-2, rtol=5e-2)

    # ---- Test 2: lane-aligned channels (fused K=9*Cin path, lane-dense output),
    # N=1 so the TH picker keeps >= 2 grid steps (v7x dual-TC). Smoke-level tol. ----
    N2, C2, H2, W2 = 1, 128, 16, 16
    k2x, k2w, k2b = jax.random.split(jax.random.PRNGKey(1), 3)
    x2 = jax.random.normal(k2x, (N2, C2, H2, W2), dtype=jnp.float32)
    bound2 = 1.0 / ((C2 * KSIZE * KSIZE) ** 0.5)
    w2 = jax.random.uniform(k2w, (C2, C2, KSIZE, KSIZE),
                            minval=-bound2, maxval=bound2, dtype=jnp.float32)
    b2 = jax.random.uniform(k2b, (C2,), minval=-bound2, maxval=bound2,
                            dtype=jnp.float32)
    ref2 = jax.lax.conv_general_dilated(
        x2, w2, window_strides=(1, 1), padding=((1, 1), (1, 1)),
        dimension_numbers=("NCHW", "OIHW", "NCHW"))
    ref2 = jnp.maximum(ref2 + b2[None, :, None, None], 0.0)

    out2 = jax.block_until_ready(base_conv(x2, w2, b2, compute_dtype=jnp.bfloat16))
    assert out2.shape == (N2, C2, H2, W2)
    assert jnp.allclose(out2, ref2, atol=1e-1, rtol=1e-1)

    print("KERNEL_OK")
</pallas_src>

<mosaic_0001>
module attributes {stable_mosaic.version = 11 : i64} {
  func.func @_conv_relu_kernel(%arg0: i32, %arg1: i32, %arg2: memref<1x16x18x4xf32, #tpu.memory_space<vmem>>, %arg3: memref<1x2x18x4xf32, #tpu.memory_space<vmem>>, %arg4: memref<36x128xf32, #tpu.memory_space<vmem>>, %arg5: memref<1x8xf32, #tpu.memory_space<vmem>>, %arg6: memref<1x16x16x8xf32, #tpu.memory_space<vmem>>) attributes {dimension_semantics = [#tpu.dimension_semantics<parallel>, #tpu.dimension_semantics<parallel>], iteration_bounds = array<i64: 2, 1>, scalar_prefetch = 0 : i64, scratch_operands = 0 : i64, tpu.core_type = #tpu.core_type<tc>, window_params = [{transform_indices = @transform_0, window_bounds = array<i64: 1, 16, 18, 4>}, {transform_indices = @transform_1, window_bounds = array<i64: 1, 2, 18, 4>}, {pipeline_mode = #tpu.pipeline_mode<synchronous>, transform_indices = @transform_2, window_bounds = array<i64: 36, 128>}, {pipeline_mode = #tpu.pipeline_mode<synchronous>, transform_indices = @transform_3, window_bounds = array<i64: 1, 8>}, {transform_indices = @transform_4, window_bounds = array<i64: 1, 16, 16, 8>}]} {
    %c0 = arith.constant 0 : index
    %c0_0 = arith.constant 0 : index
    %c0_1 = arith.constant 0 : index
    %c0_2 = arith.constant 0 : index
    %0 = vector.load %arg2[%c0, %c0_0, %c0_1, %c0_2] : memref<1x16x18x4xf32, #tpu.memory_space<vmem>>, vector<1x16x18x4xf32>
    %1 = vector.shape_cast %0 : vector<1x16x18x4xf32> to vector<16x18x4xf32>
    %c0_3 = arith.constant 0 : index
    %c0_4 = arith.constant 0 : index
    %c0_5 = arith.constant 0 : index
    %c0_6 = arith.constant 0 : index
    %2 = vector.load %arg3[%c0_3, %c0_4, %c0_5, %c0_6] : memref<1x2x18x4xf32, #tpu.memory_space<vmem>>, vector<1x2x18x4xf32>
    %3 = vector.shape_cast %2 : vector<1x2x18x4xf32> to vector<2x18x4xf32>
    %4 = tpu.concatenate %1, %3 in 0 : vector<16x18x4xf32>, vector<2x18x4xf32> -> vector<18x18x4xf32>
    %5 = vector.extract_strided_slice %4 {offsets = [0, 0, 0], sizes = [16, 16, 4], strides = [1, 1, 1]} : vector<18x18x4xf32> to vector<16x16x4xf32>
    %6 = vector.shape_cast %5 : vector<16x16x4xf32> to vector<256x4xf32>
    %c0_7 = arith.constant 0 : index
    %c0_8 = arith.constant 0 : index
    %7 = vector.load %arg4[%c0_7, %c0_8] : memref<36x128xf32, #tpu.memory_space<vmem>>, vector<4x128xf32>
    %cst = arith.constant dense<0.000000e+00> : vector<256x128xf32>
    %8 = tpu.matmul %6, %7, %cst {dimension_numbers = #tpu.dot_dimension_numbers<[1], [0], [0], [1], [0, 0, 1, 1], [], []>} : vector<256x4xf32>, vector<4x128xf32>, vector<256x128xf32> -> vector<256x128xf32>
    %9 = vector.extract_strided_slice %4 {offsets = [0, 1, 0], sizes = [16, 16, 4], strides = [1, 1, 1]} : vector<18x18x4xf32> to vector<16x16x4xf32>
    %10 = vector.shape_cast %9 : vector<16x16x4xf32> to vector<256x4xf32>
    %c4 = arith.constant 4 : index
    %c0_9 = arith.constant 0 : index
    %11 = vector.load %arg4[%c4, %c0_9] : memref<36x128xf32, #tpu.memory_space<vmem>>, vector<4x128xf32>
    %cst_10 = arith.constant dense<0.000000e+00> : vector<256x128xf32>
    %12 = tpu.matmul %10, %11, %cst_10 {dimension_numbers = #tpu.dot_dimension_numbers<[1], [0], [0], [1], [0, 0, 1, 1], [], []>} : vector<256x4xf32>, vector<4x128xf32>, vector<256x128xf32> -> vector<256x128xf32>
    %13 = arith.addf %8, %12 : vector<256x128xf32>
    %14 = vector.extract_strided_slice %4 {offsets = [0, 2, 0], sizes = [16, 16, 4], strides = [1, 1, 1]} : vector<18x18x4xf32> to vector<16x16x4xf32>
    %15 = vector.shape_cast %14 : vector<16x16x4xf32> to vector<256x4xf32>
    %c8 = arith.constant 8 : index
    %c0_11 = arith.constant 0 : index
    %16 = vector.load %arg4[%c8, %c0_11] : memref<36x128xf32, #tpu.memory_space<vmem>>, vector<4x128xf32>
    %cst_12 = arith.constant dense<0.000000e+00> : vector<256x128xf32>
    %17 = tpu.matmul %15, %16, %cst_12 {dimension_numbers = #tpu.dot_dimension_numbers<[1], [0], [0], [1], [0, 0, 1, 1], [], []>} : vector<256x4xf32>, vector<4x128xf32>, vector<256x128xf32> -> vector<256x128xf32>
    %18 = arith.addf %13, %17 : vector<256x128xf32>
    %19 = vector.extract_strided_slice %4 {offsets = [1, 0, 0], sizes = [16, 16, 4], strides = [1, 1, 1]} : vector<18x18x4xf32> to vector<16x16x4xf32>
    %20 = vector.shape_cast %19 : vector<16x16x4xf32> to vector<256x4xf32>
    %c12 = arith.constant 12 : index
    %c0_13 = arith.constant 0 : index
    %21 = vector.load %arg4[%c12, %c0_13] : memref<36x128xf32, #tpu.memory_space<vmem>>, vector<4x128xf32>
    %cst_14 = arith.constant dense<0.000000e+00> : vector<256x128xf32>
    %22 = tpu.matmul %20, %21, %cst_14 {dimension_numbers = #tpu.dot_dimension_numbers<[1], [0], [0], [1], [0, 0, 1, 1], [], []>} : vector<256x4xf32>, vector<4x128xf32>, vector<256x128xf32> -> vector<256x128xf32>
    %23 = arith.addf %18, %22 : vector<256x128xf32>
    %24 = vector.extract_strided_slice %4 {offsets = [1, 1, 0], sizes = [16, 16, 4], strides = [1, 1, 1]} : vector<18x18x4xf32> to vector<16x16x4xf32>
    %25 = vector.shape_cast %24 : vector<16x16x4xf32> to vector<256x4xf32>
    %c16 = arith.constant 16 : index
    %c0_15 = arith.constant 0 : index
    %26 = vector.load %arg4[%c16, %c0_15] : memref<36x128xf32, #tpu.memory_space<vmem>>, vector<4x128xf32>
    %cst_16 = arith.constant dense<0.000000e+00> : vector<256x128xf32>
    %27 = tpu.matmul %25, %26, %cst_16 {dimension_numbers = #tpu.dot_dimension_numbers<[1], [0], [0], [1], [0, 0, 1, 1], [], []>} : vector<256x4xf32>, vector<4x128xf32>, vector<256x128xf32> -> vector<256x128xf32>
    %28 = arith.addf %23, %27 : vector<256x128xf32>
    %29 = vector.extract_strided_slice %4 {offsets = [1, 2, 0], sizes = [16, 16, 4], strides = [1, 1, 1]} : vector<18x18x4xf32> to vector<16x16x4xf32>
    %30 = vector.shape_cast %29 : vector<16x16x4xf32> to vector<256x4xf32>
    %c20 = arith.constant 20 : index
    %c0_17 = arith.constant 0 : index
    %31 = vector.load %arg4[%c20, %c0_17] : memref<36x128xf32, #tpu.memory_space<vmem>>, vector<4x128xf32>
    %cst_18 = arith.constant dense<0.000000e+00> : vector<256x128xf32>
    %32 = tpu.matmul %30, %31, %cst_18 {dimension_numbers = #tpu.dot_dimension_numbers<[1], [0], [0], [1], [0, 0, 1, 1], [], []>} : vector<256x4xf32>, vector<4x128xf32>, vector<256x128xf32> -> vector<256x128xf32>
    %33 = arith.addf %28, %32 : vector<256x128xf32>
    %34 = vector.extract_strided_slice %4 {offsets = [2, 0, 0], sizes = [16, 16, 4], strides = [1, 1, 1]} : vector<18x18x4xf32> to vector<16x16x4xf32>
    %35 = vector.shape_cast %34 : vector<16x16x4xf32> to vector<256x4xf32>
    %c24 = arith.constant 24 : index
    %c0_19 = arith.constant 0 : index
    %36 = vector.load %arg4[%c24, %c0_19] : memref<36x128xf32, #tpu.memory_space<vmem>>, vector<4x128xf32>
    %cst_20 = arith.constant dense<0.000000e+00> : vector<256x128xf32>
    %37 = tpu.matmul %35, %36, %cst_20 {dimension_numbers = #tpu.dot_dimension_numbers<[1], [0], [0], [1], [0, 0, 1, 1], [], []>} : vector<256x4xf32>, vector<4x128xf32>, vector<256x128xf32> -> vector<256x128xf32>
    %38 = arith.addf %33, %37 : vector<256x128xf32>
    %39 = vector.extract_strided_slice %4 {offsets = [2, 1, 0], sizes = [16, 16, 4], strides = [1, 1, 1]} : vector<18x18x4xf32> to vector<16x16x4xf32>
    %40 = vector.shape_cast %39 : vector<16x16x4xf32> to vector<256x4xf32>
    %c28 = arith.constant 28 : index
    %c0_21 = arith.constant 0 : index
    %41 = vector.load %arg4[%c28, %c0_21] : memref<36x128xf32, #tpu.memory_space<vmem>>, vector<4x128xf32>
    %cst_22 = arith.constant dense<0.000000e+00> : vector<256x128xf32>
    %42 = tpu.matmul %40, %41, %cst_22 {dimension_numbers = #tpu.dot_dimension_numbers<[1], [0], [0], [1], [0, 0, 1, 1], [], []>} : vector<256x4xf32>, vector<4x128xf32>, vector<256x128xf32> -> vector<256x128xf32>
    %43 = arith.addf %38, %42 : vector<256x128xf32>
    %44 = vector.extract_strided_slice %4 {offsets = [2, 2, 0], sizes = [16, 16, 4], strides = [1, 1, 1]} : vector<18x18x4xf32> to vector<16x16x4xf32>
    %45 = vector.shape_cast %44 : vector<16x16x4xf32> to vector<256x4xf32>
    %c32 = arith.constant 32 : index
    %c0_23 = arith.constant 0 : index
    %46 = vector.load %arg4[%c32, %c0_23] : memref<36x128xf32, #tpu.memory_space<vmem>>, vector<4x128xf32>
    %cst_24 = arith.constant dense<0.000000e+00> : vector<256x128xf32>
    %47 = tpu.matmul %45, %46, %cst_24 {dimension_numbers = #tpu.dot_dimension_numbers<[1], [0], [0], [1], [0, 0, 1, 1], [], []>} : vector<256x4xf32>, vector<4x128xf32>, vector<256x128xf32> -> vector<256x128xf32>
    %48 = arith.addf %43, %47 : vector<256x128xf32>
    %49 = vector.extract_strided_slice %48 {offsets = [0, 0], sizes = [256, 8], strides = [1, 1]} : vector<256x128xf32> to vector<256x8xf32>
    %c0_25 = arith.constant 0 : index
    %c0_26 = arith.constant 0 : index
    %50 = vector.load %arg5[%c0_25, %c0_26] : memref<1x8xf32, #tpu.memory_space<vmem>>, vector<1x8xf32>
    %51 = vector.broadcast %50 : vector<1x8xf32> to vector<256x8xf32>
    %52 = arith.addf %49, %51 : vector<256x8xf32>
    %cst_27 = arith.constant 0.000000e+00 : f32
    %53 = vector.broadcast %cst_27 : f32 to vector<256x8xf32>
    %54 = arith.maximumf %52, %53 : vector<256x8xf32>
    %55 = vector.shape_cast %54 : vector<256x8xf32> to vector<1x16x16x8xf32>
    %c0_28 = arith.constant 0 : index
    %c0_29 = arith.constant 0 : index
    %c0_30 = arith.constant 0 : index
    %c0_31 = arith.constant 0 : index
    %56 = vector.load %arg6[%c0_28, %c0_29, %c0_30, %c0_31] : memref<1x16x16x8xf32, #tpu.memory_space<vmem>>, vector<1x16x16x8xf32>
    tpu.vector_store %arg6[%c0_28, %c0_29, %c0_30, %c0_31], %55 {strides = array<i32>} : memref<1x16x16x8xf32, #tpu.memory_space<vmem>>, vector<1x16x16x8xf32>,
    return
  }
  func.func @transform_0(%arg0: i32, %arg1: i32) -> (i32, i32, i32, i32) {
    %c0_i32 = arith.constant 0 : i32
    %c0_i32_0 = arith.constant 0 : i32
    %c0_i32_1 = arith.constant 0 : i32
    return %arg0, %arg1, %c0_i32, %c0_i32_0 : i32, i32, i32, i32
  }
  func.func @transform_1(%arg0: i32, %arg1: i32) -> (i32, i32, i32, i32) {
    %c1_i32 = arith.constant 1 : i32
    %0 = arith.addi %arg1, %c1_i32 : i32
    %c8_i32 = arith.constant 8 : i32
    %1 = arith.muli %0, %c8_i32 : i32
    %c0_i32 = arith.constant 0 : i32
    %c0_i32_0 = arith.constant 0 : i32
    %c0_i32_1 = arith.constant 0 : i32
    return %arg0, %1, %c0_i32, %c0_i32_0 : i32, i32, i32, i32
  }
  func.func @transform_2(%arg0: i32, %arg1: i32) -> (i32, i32) {
    %c0_i32 = arith.constant 0 : i32
    %c0_i32_0 = arith.constant 0 : i32
    %c0_i32_1 = arith.constant 0 : i32
    return %c0_i32, %c0_i32_0 : i32, i32
  }
  func.func @transform_3(%arg0: i32, %arg1: i32) -> (i32, i32) {
    %c0_i32 = arith.constant 0 : i32
    %c0_i32_0 = arith.constant 0 : i32
    %c0_i32_1 = arith.constant 0 : i32
    return %c0_i32, %c0_i32_0 : i32, i32
  }
  func.func @transform_4(%arg0: i32, %arg1: i32) -> (i32, i32, i32, i32) {
    %c0_i32 = arith.constant 0 : i32
    %c0_i32_0 = arith.constant 0 : i32
    %c0_i32_1 = arith.constant 0 : i32
    return %arg0, %arg1, %c0_i32, %c0_i32_0 : i32, i32, i32, i32
  }
}

</mosaic_0001>

<llo_original>
// kernel: base_conv.1
$region0: #{base_conv.1}
  #allocation0 [shape = 'u32[]', space=smem, size = 0x4, offset = 0x4, fixed_abs, tag = 'smem constant byte address 0x4 - core index']
  #allocation1 [shape = 'u32[144,128]{1,0:T(1,128)}', space=vmem, size = 0x12000, scoped, tag = 'internal scratch']
  %s0 = inlined_call_operand.vmem [shape: f32[2,18,18,4], index: 0, kind: input, shape index: {}, may-alias: {0,1}]
  %s1 = inlined_call_operand.vmem [shape: f32[2,18,18,4], index: 1, kind: input, shape index: {}, may-alias: {0,1}]
  %s2 = inlined_call_operand.vmem [shape: f32[36,128], index: 2, kind: input, shape index: {}]
  %s3 = inlined_call_operand.vmem [shape: f32[1,8], index: 3, kind: input, shape index: {}]
  %s4 = inlined_call_operand.vmem [shape: f32[2,16,16,8], index: 4, kind: output, shape index: {}]
  %s5 = sld [smem:[#allocation0]]
  $region49: #{base_conv.1} parent=0
    _
  %s7 = ssub.s32 1, %s5
  %s8 = scalar_select 0, %s7, %s5
  loop: start=0, step=1, limit=4
  $region2: #{base_conv.1} parent=0 // loop_pre_header
    _
  $region3: #{base_conv.1} parent=0 // loop_header
    %s10 = sphi 0, %s14
    %p11 = scmp.ge.s32.totalorder %s10, 4
    %s17 = sphi 0, %s29
    %s18 = sphi 0, %s25
    %s19 = sphi 0, %s17
    %s20 = sphi 0, %s18
    %s21 = sphi 0, %s19
    %s22 = sphi 0, %s20
    %s34 = sphi 0, %s36
    %s37 = sphi 0, %s34
    %s38 = sphi 0, %s37
    %s54 = sphi 0, %s38
    %s66 = sphi 0, %s68
    %s69 = sphi 0, %s66
    %s70 = sphi 0, %s69
    %s86 = sphi 0, %s70
    %s90 = sphi 0, %s90
    %s92 = sphi 0, %s90
    %s93 = sphi 0, %s92
    %s107 = sphi 0, %s93
    %s111 = sphi 0, %s111
    %s113 = sphi 0, %s111
    %s114 = sphi 0, %s113
    %s128 = sphi 0, %s114
    %s136 = sphi 0, %s138
    %s139 = sphi 0, %s136
    %s140 = sphi 0, %s139
    %s156 = sphi 0, %s140
  $region4: #{base_conv.1} parent=0 // loop_header_branch
    %13 = sbr.rel (%p11) target = $region8
  $region5: #{base_conv.1} parent=0 // loop_body
    %s15 = ssub.s32 %s10, 1
    %s16 = ssub.s32 %s10, 2
    %s23 = sadd.s32 1, %s18
    %p24 = scmp.ge.s32.totalorder %s23, 1
    %s25 = scalar_select %p24, 0, %s23
    %s26 = sadd.s32 1, %s17
    %s27 = scalar_select %p24, %s26, %s17
    %p28 = scmp.ge.s32.totalorder %s27, 2
    %s29 = scalar_select %p28, 0, %s27
    %s30 = ssub.s32 %s17, %s29
    %s31 = ssub.s32 %s18, %s25
    %s32 = sor.u32 %s30, %s31
    %p33 = scmp.eq.s32.totalorder %s32, 0
    %s35 = sadd.s32 %s34, 1
    %s36 = scalar_select %p33, %s34, %s35
    %p39 = pneg %p33
    %p40 = scmp.eq.s32.totalorder %s10, 1
    %p41 = por %p39, %p40
    %p42 = scmp.ne.s32.totalorder %s34, %s37
    %p43 = scmp.eq.s32.totalorder %s10, 0
    %p44 = por %p42, %p43
    %p45 = scmp.ne.s32.totalorder %s34, %s37
    %p46 = scmp.eq.s32.totalorder %s15, 1
    %p47 = por %p45, %p46
    %p48 = scmp.ne.s32.totalorder %s37, %s38
    %p49 = scmp.eq.s32.totalorder %s15, 0
    %p50 = por %p48, %p49
    %p51 = scmp.ne.s32.totalorder %s37, %s38
    %p52 = scmp.eq.s32.totalorder %s16, 1
    %p53 = por %p51, %p52
    %p55 = scmp.ne.s32.totalorder %s38, %s54
    %p56 = scmp.eq.s32.totalorder %s16, 0
    %p57 = por %p55, %p56
    %s58 = sadd.s32 %s18, 1
    %s59 = smul.u32 %s58, 8
    %s60 = sadd.s32 %s25, 1
    %s61 = smul.u32 %s60, 8
    %s62 = ssub.s32 %s17, %s29
    %s63 = ssub.s32 %s59, %s61
    %s64 = sor.u32 %s62, %s63
    %p65 = scmp.eq.s32.totalorder %s64, 0
    %s67 = sadd.s32 %s66, 1
    %s68 = scalar_select %p65, %s66, %s67
    %p71 = pneg %p65
    %p72 = scmp.eq.s32.totalorder %s10, 1
    %p73 = por %p71, %p72
    %p74 = scmp.ne.s32.totalorder %s66, %s69
    %p75 = scmp.eq.s32.totalorder %s10, 0
    %p76 = por %p74, %p75
    %p77 = scmp.ne.s32.totalorder %s66, %s69
    %p78 = scmp.eq.s32.totalorder %s15, 1
    %p79 = por %p77, %p78
    %p80 = scmp.ne.s32.totalorder %s69, %s70
    %p81 = scmp.eq.s32.totalorder %s15, 0
    %p82 = por %p80, %p81
    %p83 = scmp.ne.s32.totalorder %s69, %s70
    %p84 = scmp.eq.s32.totalorder %s16, 1
    %p85 = por %p83, %p84
    %p87 = scmp.ne.s32.totalorder %s70, %s86
    %p88 = scmp.eq.s32.totalorder %s16, 0
    %p89 = por %p87, %p88
    %s91 = sadd.s32 %s90, 1
    %p94 = scmp.eq.s32.totalorder %s10, 1
    %p95 = scmp.ne.s32.totalorder %s90, %s92
    %p96 = scmp.eq.s32.totalorder %s10, 0
    %p97 = por %p95, %p96
    %p98 = scmp.ne.s32.totalorder %s90, %s92
    %p99 = scmp.eq.s32.totalorder %s15, 1
    %p100 = por %p98, %p99
    %p101 = scmp.ne.s32.totalorder %s92, %s93
    %p102 = scmp.eq.s32.totalorder %s15, 0
    %p103 = por %p101, %p102
    %p104 = scmp.ne.s32.totalorder %s92, %s93
    %p105 = scmp.eq.s32.totalorder %s16, 1
    %p106 = por %p104, %p105
    %p108 = scmp.ne.s32.totalorder %s93, %s107
    %p109 = scmp.eq.s32.totalorder %s16, 0
    %p110 = por %p108, %p109
    %s112 = sadd.s32 %s111, 1
    %p115 = scmp.eq.s32.totalorder %s10, 1
    %p116 = scmp.ne.s32.totalorder %s111, %s113
    %p117 = scmp.eq.s32.totalorder %s10, 0
    %p118 = por %p116, %p117
    %p119 = scmp.ne.s32.totalorder %s111, %s113
    %p120 = scmp.eq.s32.totalorder %s15, 1
    %p121 = por %p119, %p120
    %p122 = scmp.ne.s32.totalorder %s113, %s114
    %p123 = scmp.eq.s32.totalorder %s15, 0
    %p124 = por %p122, %p123
    %p125 = scmp.ne.s32.totalorder %s113, %s114
    %p126 = scmp.eq.s32.totalorder %s16, 1
    %p127 = por %p125, %p126
    %p129 = scmp.ne.s32.totalorder %s114, %s128
    %p130 = scmp.eq.s32.totalorder %s16, 0
    %p131 = por %p129, %p130
    %s132 = ssub.s32 %s17, %s29
    %s133 = ssub.s32 %s18, %s25
    %s134 = sor.u32 %s132, %s133
    %p135 = scmp.eq.s32.totalorder %s134, 0
    %s137 = sadd.s32 %s136, 1
    %s138 = scalar_select %p135, %s136, %s137
    %p141 = pneg %p135
    %p142 = scmp.eq.s32.totalorder %s10, 1
    %p143 = por %p141, %p142
    %p144 = scmp.ne.s32.totalorder %s136, %s139
    %p145 = scmp.eq.s32.totalorder %s10, 0
    %p146 = por %p144, %p145
    %p147 = scmp.ne.s32.totalorder %s136, %s139
    %p148 = scmp.eq.s32.totalorder %s15, 1
    %p149 = por %p147, %p148
    %p150 = scmp.ne.s32.totalorder %s139, %s140
    %p151 = scmp.eq.s32.totalorder %s15, 0
    %p152 = por %p150, %p151
    %p153 = scmp.ne.s32.totalorder %s139, %s140
    %p154 = scmp.eq.s32.totalorder %s16, 1
    %p155 = por %p153, %p154
    %p157 = scmp.ne.s32.totalorder %s140, %s156
    %p158 = scmp.eq.s32.totalorder %s16, 0
    %p159 = por %p157, %p158
    %p160 = scmp.le.s32.totalorder 1, %s10
    %p161 = scmp.lt.s32.totalorder %s10, 3
    %p162 = pnand %p160, %p161
    %p163 = pneg %p162
    // Predicated region
    $region9: #{base_conv.1} parent=5 // pred_check
      _
    $region10: #{base_conv.1} parent=5 // pred_check_branch
      %165 = sbr.rel (%p162) target = $region12
    $region11: #{base_conv.1} parent=5 // pred_region
      %s166 = ssub.s32 %s10, 1
      // Predicated region
      $region13: #{base_conv.1} parent=11 // pred_check
        %p167 = pneg %p103
      $region14: #{base_conv.1} parent=11 // pred_check_branch
        %169 = sbr.rel (%p167) target = $region16
      $region15: #{base_conv.1} parent=11 // pred_region
        _
      $region16: #{base_conv.1} parent=11 // pred_fallthru
        _
      // Predicated region
      $region17: #{base_conv.1} parent=11 // pred_check
        %p170 = pneg %p124
      $region18: #{base_conv.1} parent=11 // pred_check_branch
        %172 = sbr.rel (%p170) target = $region20
      $region19: #{base_conv.1} parent=11 // pred_region
        _
      $region20: #{base_conv.1} parent=11 // pred_fallthru
        _
    $region12: #{base_conv.1} parent=5 // pred_fallthru
      _
    %p173 = scmp.lt.s32.totalorder %s10, 2
    // Predicated region
    $region21: #{base_conv.1} parent=5 // pred_check
      %p174 = pneg %p173
    $region22: #{base_conv.1} parent=5 // pred_check_branch
      %176 = sbr.rel (%p174) target = $region24
    $region23: #{base_conv.1} parent=5 // pred_region
      // Predicated region
      $region25: #{base_conv.1} parent=23 // pred_check
        %p177 = pneg %p44
      $region26: #{base_conv.1} parent=23 // pred_check_branch
        %179 = sbr.rel (%p177) target = $region28
      $region27: #{base_conv.1} parent=23 // pred_region
        %s180 = smul.u32 16, %s18
        %s181 = ssub.s32 18, %s180
        %p182 = scmp.lt.s32.totalorder %s181, 16
        %s183 = scalar_select %p182, %s181, 16
        %s184 = smul.u32 128, %s183
        %s185 = smul.u32 %s184, 3
        %p186 = scmp.lt.s32.totalorder %s17, 1
        %s187 = scalar_select %p186, %s17, 1
        %p188 = scmp.lt.s32.totalorder %s180, 17
        %s189 = scalar_select %p188, %s180, 17
        %s190 = smul.addr %s189, 3
        %s191 = smul.addr %s187, 54
        %s192 = sadd.s32 %s190, %s191
        %s193 = smul.addr %s192, 8
        %s194 = scalar_lea.vmem %s0, %s193
        %s195 = smul.u32 16, %s18
        %s196 = ssub.s32 18, %s195
        %p197 = scmp.lt.s32.totalorder %s196, 16
        %s198 = scalar_select %p197, %s196, 16
        %s199 = smul.u32 128, %s198
        %s200 = smul.u32 %s199, 3
      $region28: #{base_conv.1} parent=23 // pred_fallthru
        _
      // Predicated region
      $region29: #{base_conv.1} parent=23 // pred_check
        %p201 = pneg %p76
      $region30: #{base_conv.1} parent=23 // pred_check_branch
        %203 = sbr.rel (%p201) target = $region32
      $region31: #{base_conv.1} parent=23 // pred_region
        %s204 = sadd.s32 %s18, 1
        %s205 = smul.u32 %s204, 8
        %s206 = smul.u32 2, %s205
        %p207 = scmp.lt.s32.totalorder %s17, 1
        %s208 = scalar_select %p207, %s17, 1
        %p209 = scmp.lt.s32.totalorder %s206, 17
        %s210 = scalar_select %p209, %s206, 17
        %s211 = smul.addr %s210, 3
        %s212 = smul.addr %s208, 54
        %s213 = sadd.s32 %s211, %s212
        %s214 = smul.addr %s213, 8
        %s215 = scalar_lea.vmem %s1, %s214
        %s216 = sadd.s32 %s18, 1
        %s217 = smul.u32 %s216, 8
        %s218 = smul.u32 2, %s217
      $region32: #{base_conv.1} parent=23 // pred_fallthru
        _
    $region24: #{base_conv.1} parent=5 // pred_fallthru
      _
    %p219 = scmp.le.s32.totalorder 1, %s10
    %p220 = scmp.lt.s32.totalorder %s10, 3
    %p221 = pnand %p219, %p220
    %p222 = pneg %p221
    // Predicated region
    $region33: #{base_conv.1} parent=5 // pred_check
      _
    $region34: #{base_conv.1} parent=5 // pred_check_branch
      %224 = sbr.rel (%p221) target = $region36
    $region35: #{base_conv.1} parent=5 // pred_region
      %s225 = ssub.s32 %s10, 1
      %s226 = smul.u32 16, %s20
      %s227 = ssub.s32 18, %s226
      %p228 = scmp.lt.s32.totalorder %s227, 16
      %s229 = scalar_select %p228, %s227, 16
      %s230 = smul.u32 128, %s229
      %s231 = smul.u32 %s230, 3
      %p232 = scmp.lt.s32.totalorder %s19, 1
      %s233 = scalar_select %p232, %s19, 1
      %p234 = scmp.lt.s32.totalorder %s226, 17
      %s235 = scalar_select %p234, %s226, 17
      %s236 = smul.addr %s235, 3
      %s237 = smul.addr %s233, 54
      %s238 = sadd.s32 %s236, %s237
      %s239 = smul.addr %s238, 8
      %s240 = scalar_lea.vmem %s0, %s239
      %p241 = pneg %p50
      %p242 = pneg %p47
      %s243 = sadd.s32 %s20, 1
      %s244 = smul.u32 %s243, 8
      %s245 = smul.u32 2, %s244
      %p246 = scmp.lt.s32.totalorder %s19, 1
      %s247 = scalar_select %p246, %s19, 1
      %p248 = scmp.lt.s32.totalorder %s245, 17
      %s249 = scalar_select %p248, %s245, 17
      %s250 = smul.addr %s249, 3
      %s251 = smul.addr %s247, 54
      %s252 = sadd.s32 %s250, %s251
      %s253 = smul.addr %s252, 8
      %s254 = scalar_lea.vmem %s1, %s253
      %p255 = pneg %p82
      %p256 = pneg %p79
      %p257 = pneg %p103
      %p258 = pneg %p100
      %p259 = pneg %p124
      %p260 = pneg %p121
      %p261 = pneg %p152
      %p262 = pneg %p149
      %s263 = smul.u32 16, %s20
      %p264 = scmp.lt.s32.totalorder %s19, 1
      %s265 = scalar_select %p264, %s19, 1
      %p266 = scmp.lt.s32.totalorder %s263, 15
      %s267 = scalar_select %p266, %s263, 15
      %s268 = smul.addr %s267, 2
      %s269 = smul.addr %s265, 32
      %s270 = sadd.s32 %s268, %s269
      %s271 = smul.addr %s270, 8
      %s272 = scalar_lea.vmem %s4, %s271
      %s273 = smul.u32 16, %s20
      %s274 = ssub.s32 18, %s273
      %p275 = scmp.lt.s32.totalorder %s274, 16
      %s276 = scalar_select %p275, %s274, 16
      %s277 = smul.u32 128, %s276
      %s278 = smul.u32 %s277, 3
      %p279 = scmp.lt.s32.totalorder %s19, 1
      %s280 = scalar_select %p279, %s19, 1
      %p281 = scmp.lt.s32.totalorder %s273, 17
      %s282 = scalar_select %p281, %s273, 17
      %s283 = smul.addr %s282, 3
      %s284 = smul.addr %s280, 54
      %s285 = sadd.s32 %s283, %s284
      %s286 = smul.addr %s285, 8
      %s287 = scalar_lea.vmem %s0, %s286
      %s288 = smul.u32 16, %s20
      %s289 = ssub.s32 18, %s288
      %p290 = scmp.lt.s32.totalorder %s289, 16
      %s291 = scalar_select %p290, %s289, 16
      %s292 = smul.u32 128, %s291
      %s293 = smul.u32 %s292, 3
      %s294 = sadd.s32 %s20, 1
      %s295 = smul.u32 %s294, 8
      %s296 = smul.u32 2, %s295
      %p297 = scmp.lt.s32.totalorder %s19, 1
      %s298 = scalar_select %p297, %s19, 1
      %p299 = scmp.lt.s32.totalorder %s296, 17
      %s300 = scalar_select %p299, %s296, 17
      %s301 = smul.addr %s300, 3
      %s302 = smul.addr %s298, 54
      %s303 = sadd.s32 %s301, %s302
      %s304 = smul.addr %s303, 8
      %s305 = scalar_lea.vmem %s1, %s304
      %s306 = sadd.s32 %s20, 1
      %s307 = smul.u32 %s306, 8
      %s308 = smul.u32 2, %s307
      %s309 = smul.u32 16, %s20
      %p310 = scmp.lt.s32.totalorder %s19, 1
      %s311 = scalar_select %p310, %s19, 1
      %p312 = scmp.lt.s32.totalorder %s309, 15
      %s313 = scalar_select %p312, %s309, 15
      %s314 = smul.addr %s313, 2
      %s315 = smul.addr %s311, 32
      %s316 = sadd.s32 %s314, %s315
      %s317 = smul.addr %s316, 8
      %s318 = scalar_lea.vmem %s4, %s317
      %s319 = smul.u32 16, %s20
      %v320 = vld [vmem:[%s287] sm:$0xff]
      %v321 = vld [vmem:[%s287 + $0x8] sm:$0xff]
      %v322 = vld [vmem:[%s287 + $0x10] sm:$0x3]
      %v323 = vld [vmem:[%s287 + $0x18] sm:$0xff]
      %v324 = vld [vmem:[%s287 + $0x20] sm:$0xff]
      %v325 = vld [vmem:[%s287 + $0x28] sm:$0x3]
      %v326 = vld [vmem:[%s287 + $0x30] sm:$0xff]
      %v327 = vld [vmem:[%s287 + $0x38] sm:$0xff]
      %v328 = vld [vmem:[%s287 + $0x40] sm:$0x3]
      %v329 = vld [vmem:[%s287 + $0x48] sm:$0xff]
      %v330 = vld [vmem:[%s287 + $0x50] sm:$0xff]
      %v331 = vld [vmem:[%s287 + $0x58] sm:$0x3]
      %v332 = vld [vmem:[%s287 + $0x60] sm:$0xff]
      %v333 = vld [vmem:[%s287 + $0x68] sm:$0xff]
      %v334 = vld [vmem:[%s287 + $0x70] sm:$0x3]
      %v335 = vld [vmem:[%s287 + $0x78] sm:$0xff]
      %v336 = vld [vmem:[%s287 + $0x80] sm:$0xff]
      %v337 = vld [vmem:[%s287 + $0x88] sm:$0x3]
      %v338 = vld [vmem:[%s287 + $0x90] sm:$0xff]
      %v339 = vld [vmem:[%s287 + $0x98] sm:$0xff]
      %v340 = vld [vmem:[%s287 + $0xa0] sm:$0x3]
      %v341 = vld [vmem:[%s287 + $0xa8] sm:$0xff]
      %v342 = vld [vmem:[%s287 + $0xb0] sm:$0xff]
      %v343 = vld [vmem:[%s287 + $0xb8] sm:$0x3]
      %v344 = vld [vmem:[%s287 + $0xc0] sm:$0xff]
      %v345 = vld [vmem:[%s287 + $0xc8] sm:$0xff]
      %v346 = vld [vmem:[%s287 + $0xd0] sm:$0x3]
      %v347 = vld [vmem:[%s287 + $0xd8] sm:$0xff]
      %v348 = vld [vmem:[%s287 + $0xe0] sm:$0xff]
      %v349 = vld [vmem:[%s287 + $0xe8] sm:$0x3]
      %v350 = vld [vmem:[%s287 + $0xf0] sm:$0xff]
      %v351 = vld [vmem:[%s287 + $0xf8] sm:$0xff]
      %v352 = vld [vmem:[%s287 + $0x100] sm:$0x3]
      %v353 = vld [vmem:[%s287 + $0x108] sm:$0xff]
      %v354 = vld [vmem:[%s287 + $0x110] sm:$0xff]
      %v355 = vld [vmem:[%s287 + $0x118] sm:$0x3]
      %v356 = vld [vmem:[%s287 + $0x120] sm:$0xff]
      %v357 = vld [vmem:[%s287 + $0x128] sm:$0xff]
      %v358 = vld [vmem:[%s287 + $0x130] sm:$0x3]
      %v359 = vld [vmem:[%s287 + $0x138] sm:$0xff]
      %v360 = vld [vmem:[%s287 + $0x140] sm:$0xff]
      %v361 = vld [vmem:[%s287 + $0x148] sm:$0x3]
      %v362 = vld [vmem:[%s287 + $0x150] sm:$0xff]
      %v363 = vld [vmem:[%s287 + $0x158] sm:$0xff]
      %v364 = vld [vmem:[%s287 + $0x160] sm:$0x3]
      %v365 = vld [vmem:[%s287 + $0x168] sm:$0xff]
      %v366 = vld [vmem:[%s287 + $0x170] sm:$0xff]
      %v367 = vld [vmem:[%s287 + $0x178] sm:$0x3]
      %v368 = vld [vmem:[%s305] sm:$0xff]
      %v369 = vld [vmem:[%s305 + $0x8] sm:$0xff]
      %v370 = vld [vmem:[%s305 + $0x10] sm:$0x3]
      %v371 = vld [vmem:[%s305 + $0x18] sm:$0xff]
      %v372 = vld [vmem:[%s305 + $0x20] sm:$0xff]
      %v373 = vld [vmem:[%s305 + $0x28] sm:$0x3]
      %v374 = vld [vmem:[%s2] sm:$0xf]
      %vm423 = vcmask 1046528
      %v424 = vrot.slane %v320, 1
      %v425 = vrot.slane %v321, 1
      %v426 = vsel %vm423, %v424, %v425
      %v427 = vrot.slane %v322, 1
      %v428 = vsel %vm423, %v425, %v427
      %v429 = vrot.slane %v323, 1
      %v430 = vrot.slane %v324, 1
      %v431 = vsel %vm423, %v429, %v430
      %v432 = vrot.slane %v325, 1
      %v433 = vsel %vm423, %v430, %v432
      %v434 = vrot.slane %v326, 1
      %v435 = vrot.slane %v327, 1
      %v436 = vsel %vm423, %v434, %v435
      %v437 = vrot.slane %v328, 1
      %v438 = vsel %vm423, %v435, %v437
      %v439 = vrot.slane %v329, 1
      %v440 = vrot.slane %v330, 1
      %v441 = vsel %vm423, %v439, %v440
      %v442 = vrot.slane %v331, 1
      %v443 = vsel %vm423, %v440, %v442
      %v444 = vrot.slane %v332, 1
      %v445 = vrot.slane %v333, 1
      %v446 = vsel %vm423, %v444, %v445
      %v447 = vrot.slane %v334, 1
      %v448 = vsel %vm423, %v445, %v447
      %v449 = vrot.slane %v335, 1
      %v450 = vrot.slane %v336, 1
      %v451 = vsel %vm423, %v449, %v450
      %v452 = vrot.slane %v337, 1
      %v453 = vsel %vm423, %v450, %v452
      %v454 = vrot.slane %v338, 1
      %v455 = vrot.slane %v339, 1
      %v456 = vsel %vm423, %v454, %v455
      %v457 = vrot.slane %v340, 1
      %v458 = vsel %vm423, %v455, %v457
      %v459 = vrot.slane %v341, 1
      %v460 = vrot.slane %v342, 1
      %v461 = vsel %vm423, %v459, %v460
      %v462 = vrot.slane %v343, 1
      %v463 = vsel %vm423, %v460, %v462
      %v464 = vrot.slane %v344, 1
      %v465 = vrot.slane %v345, 1
      %v466 = vsel %vm423, %v464, %v465
      %v467 = vrot.slane %v346, 1
      %v468 = vsel %vm423, %v465, %v467
      %v469 = vrot.slane %v347, 1
      %v470 = vrot.slane %v348, 1
      %v471 = vsel %vm423, %v469, %v470
      %v472 = vrot.slane %v349, 1
      %v473 = vsel %vm423, %v470, %v472
      %v474 = vrot.slane %v350, 1
      %v475 = vrot.slane %v351, 1
      %v476 = vsel %vm423, %v474, %v475
      %v477 = vrot.slane %v352, 1
      %v478 = vsel %vm423, %v475, %v477
      %v479 = vrot.slane %v353, 1
      %v480 = vrot.slane %v354, 1
      %v481 = vsel %vm423, %v479, %v480
      %v482 = vrot.slane %v355, 1
      %v483 = vsel %vm423, %v480, %v482
      %v484 = vrot.slane %v356, 1
      %v485 = vrot.slane %v357, 1
      %v486 = vsel %vm423, %v484, %v485
      %v487 = vrot.slane %v358, 1
      %v488 = vsel %vm423, %v485, %v487
      %v489 = vrot.slane %v359, 1
      %v490 = vrot.slane %v360, 1
      %v491 = vsel %vm423, %v489, %v490
      %v492 = vrot.slane %v361, 1
      %v493 = vsel %vm423, %v490, %v492
      %v494 = vrot.slane %v362, 1
      %v495 = vrot.slane %v363, 1
      %v496 = vsel %vm423, %v494, %v495
      %v497 = vrot.slane %v364, 1
      %v498 = vsel %vm423, %v495, %v497
      %v499 = vrot.slane %v365, 1
      %v500 = vrot.slane %v366, 1
      %v501 = vsel %vm423, %v499, %v500
      %v502 = vrot.slane %v367, 1
      %v503 = vsel %vm423, %v500, %v502
      %v504 = vld [vmem:[%s2 + $0x4] sm:$0xf]
      %vm505 = vcmask 31744
      %v506 = vsel %vm505, %v426, 0
      %v508 = vsel %vm505, %v428, 0
      %v510 = vsel %vm505, %v431, 0
      %v512 = vsel %vm505, %v433, 0
      %v514 = vsel %vm505, %v436, 0
      %v516 = vsel %vm505, %v438, 0
      %v518 = vsel %vm505, %v441, 0
      %v520 = vsel %vm505, %v443, 0
      %v522 = vsel %vm505, %v446, 0
      %v524 = vsel %vm505, %v448, 0
      %v526 = vsel %vm505, %v451, 0
      %v528 = vsel %vm505, %v453, 0
      %v530 = vsel %vm505, %v456, 0
      %v532 = vsel %vm505, %v458, 0
      %v534 = vsel %vm505, %v461, 0
      %v536 = vsel %vm505, %v463, 0
      %v538 = vsel %vm505, %v466, 0
      %v540 = vsel %vm505, %v468, 0
      %v542 = vsel %vm505, %v471, 0
      %v544 = vsel %vm505, %v473, 0
      %v546 = vsel %vm505, %v476, 0
      %v548 = vsel %vm505, %v478, 0
      %v550 = vsel %vm505, %v481, 0
      %v552 = vsel %vm505, %v483, 0
      %v554 = vsel %vm505, %v486, 0
      %v556 = vsel %vm505, %v488, 0
      %v558 = vsel %vm505, %v491, 0
      %v560 = vsel %vm505, %v493, 0
      %v562 = vsel %vm505, %v496, 0
      %v564 = vsel %vm505, %v498, 0
      %v566 = vsel %vm505, %v501, 0
      %v568 = vsel %vm505, %v503, 0
      %vm570 = vcmask 1043456
      %v572 = vsel %vm570, %v504, 0
      %574 = vmatprep.subr.mxu0 0.0
      %575 = vmatpush1.msra.mxu0 0.0
      %576 = vmatprep.subr.mxu0 0.0
      %577 = vmatpush1.msra.mxu0 0.0
      %578 = vmatprep.subr.mxu0 0.0
      %579 = vmatpush1.msra.mxu0 0.0
      %580 = vmatprep.subr.mxu0 0.0
      %581 = vmatpush1.msra.mxu0 0.0
      %582 = vmatprep.subr.mxu0 0.0
      %583 = vmatpush1.msra.mxu0 0.0
      %584 = vmatprep.subr.mxu0 0.0
      %585 = vmatpush1.msra.mxu0 0.0
      %586 = vmatprep.subr.mxu0 0.0
      %587 = vmatpush1.msra.mxu0 0.0
      %588 = vmatprep.subr.mxu0 0.0
      %589 = vmatpush1.msra.mxu0 0.0
      %590 = vmatprep.subr.mxu0 0.0
      %591 = vmatpush1.msra.mxu0 0.0
      %592 = vmatprep.subr.mxu0 0.0
      %593 = vmatpush1.msra.mxu0 0.0
      %594 = vmatprep.subr.mxu0 0.0
      %595 = vmatpush1.msra.mxu0 0.0
      %596 = vmatprep.subr.mxu0 0.0
      %597 = vmatpush1.msra.mxu0 0.0
      %598 = vmatprep.subr.mxu0 0.0
      %599 = vmatpush1.msra.mxu0 0.0
      %600 = vmatprep.subr.mxu0 0.0
      %601 = vmatpush1.msra.mxu0 0.0
      %602 = vmatprep.subr.mxu0 0.0
      %603 = vmatpush1.msra.mxu0 0.0
      %604 = vmatprep.subr.mxu0 0.0
      %605 = vmatpush1.msra.mxu0 %v572
      %606 = vmatprep.subr.mxu0 0.0
      %607 = vmatpush2.msra.mxu0 0.0
      %608 = vmatprep.subr.mxu0 0.0
      %609 = vmatpush2.msra.mxu0 0.0
      %610 = vmatprep.subr.mxu0 0.0
      %611 = vmatpush2.msra.mxu0 0.0
      %612 = vmatprep.subr.mxu0 0.0
      %613 = vmatpush2.msra.mxu0 0.0
      %614 = vmatprep.subr.mxu0 0.0
      %615 = vmatpush2.msra.mxu0 0.0
      %616 = vmatprep.subr.mxu0 0.0
      %617 = vmatpush2.msra.mxu0 0.0
      %618 = vmatprep.subr.mxu0 0.0
      %619 = vmatpush2.msra.mxu0 0.0
      %620 = vmatprep.subr.mxu0 0.0
      %621 = vmatpush2.msra.mxu0 0.0
      %622 = vmatprep.subr.mxu0 0.0
      %623 = vmatpush2.msra.mxu0 0.0
      %624 = vmatprep.subr.mxu0 0.0
      %625 = vmatpush2.msra.mxu0 0.0
      %626 = vmatprep.subr.mxu0 0.0
      %627 = vmatpush2.msra.mxu0 0.0
      %628 = vmatprep.subr.mxu0 0.0
      %629 = vmatpush2.msra.mxu0 0.0
      %630 = vmatprep.subr.mxu0 0.0
      %631 = vmatpush2.msra.mxu0 0.0
      %632 = vmatprep.subr.mxu0 0.0
      %633 = vmatpush2.msra.mxu0 0.0
      %634 = vmatprep.subr.mxu0 0.0
      %635 = vmatpush2.msra.mxu0 0.0
      %636 = vmatprep.subr.mxu0 0.0
      %637 = vmatpush2.msra.mxu0 0.0
      %638 = vmatprep.mubr.f32.mxu0 0.0
      %639 = vmatmul.mubr.f32.gmra.mxu0 %v506
      %v640 = vpop.f32.mrf.mxu0
      %v641 = vadd.f32 0.0, %v640
      %v642 = vpop.f32.mrf.mxu0
      %643 = vmatprep.mubr.f32.mxu0 0.0
      %644 = vmatmul.mubr.f32.gmra.mxu0 %v508
      %v645 = vpop.f32.mrf.mxu0
      %v646 = vadd.f32 0.0, %v645
      %v647 = vpop.f32.mrf.mxu0
      %648 = vmatprep.mubr.f32.mxu0 0.0
      %649 = vmatmul.mubr.f32.gmra.mxu0 %v510
      %v650 = vpop.f32.mrf.mxu0
      %v651 = vadd.f32 0.0, %v650
      %v652 = vpop.f32.mrf.mxu0
      %653 = vmatprep.mubr.f32.mxu0 0.0
      %654 = vmatmul.mubr.f32.gmra.mxu0 %v512
      %v655 = vpop.f32.mrf.mxu0
      %v656 = vadd.f32 0.0, %v655
      %v657 = vpop.f32.mrf.mxu0
      %658 = vmatprep.mubr.f32.mxu0 0.0
      %659 = vmatmul.mubr.f32.gmra.mxu0 %v514
      %v660 = vpop.f32.mrf.mxu0
      %v661 = vadd.f32 0.0, %v660
      %v662 = vpop.f32.mrf.mxu0
      %663 = vmatprep.mubr.f32.mxu0 0.0
      %664 = vmatmul.mubr.f32.gmra.mxu0 %v516
      %v665 = vpop.f32.mrf.mxu0
      %v666 = vadd.f32 0.0, %v665
      %v667 = vpop.f32.mrf.mxu0
      %668 = vmatprep.mubr.f32.mxu0 0.0
      %669 = vmatmul.mubr.f32.gmra.mxu0 %v518
      %v670 = vpop.f32.mrf.mxu0
      %v671 = vadd.f32 0.0, %v670
      %v672 = vpop.f32.mrf.mxu0
      %673 = vmatprep.mubr.f32.mxu0 0.0
      %674 = vmatmul.mubr.f32.gmra.mxu0 %v520
      %v675 = vpop.f32.mrf.mxu0
      %v676 = vadd.f32 0.0, %v675
      %v677 = vpop.f32.mrf.mxu0
      %678 = vmatprep.mubr.f32.mxu0 0.0
      %679 = vmatmul.mubr.f32.gmra.mxu0 %v522
      %v680 = vpop.f32.mrf.mxu0
      %v681 = vadd.f32 0.0, %v680
      %v682 = vpop.f32.mrf.mxu0
      %683 = vmatprep.mubr.f32.mxu0 0.0
      %684 = vmatmul.mubr.f32.gmra.mxu0 %v524
      %v685 = vpop.f32.mrf.mxu0
      %v686 = vadd.f32 0.0, %v685
      %v687 = vpop.f32.mrf.mxu0
      %688 = vmatprep.mubr.f32.mxu0 0.0
      %689 = vmatmul.mubr.f32.gmra.mxu0 %v526
      %v690 = vpop.f32.mrf.mxu0
      %v691 = vadd.f32 0.0, %v690
      %v692 = vpop.f32.mrf.mxu0
      %693 = vmatprep.mubr.f32.mxu0 0.0
      %694 = vmatmul.mubr.f32.gmra.mxu0 %v528
      %v695 = vpop.f32.mrf.mxu0
      %v696 = vadd.f32 0.0, %v695
      %v697 = vpop.f32.mrf.mxu0
      %698 = vmatprep.mubr.f32.mxu0 0.0
      %699 = vmatmul.mubr.f32.gmra.mxu0 %v530
      %v700 = vpop.f32.mrf.mxu0
      %v701 = vadd.f32 0.0, %v700
      %v702 = vpop.f32.mrf.mxu0
      %703 = vmatprep.mubr.f32.mxu0 0.0
      %704 = vmatmul.mubr.f32.gmra.mxu0 %v532
      %v705 = vpop.f32.mrf.mxu0
      %v706 = vadd.f32 0.0, %v705
      %v707 = vpop.f32.mrf.mxu0
      %708 = vmatprep.mubr.f32.mxu0 0.0
      %709 = vmatmul.mubr.f32.gmra.mxu0 %v534
      %v710 = vpop.f32.mrf.mxu0
      %v711 = vadd.f32 0.0, %v710
      %v712 = vpop.f32.mrf.mxu0
      %713 = vmatprep.mubr.f32.mxu0 0.0
      %714 = vmatmul.mubr.f32.gmra.mxu0 %v536
      %v715 = vpop.f32.mrf.mxu0
      %v716 = vadd.f32 0.0, %v715
      %v717 = vpop.f32.mrf.mxu0
      %718 = vmatprep.mubr.f32.mxu0 0.0
      %719 = vmatmul.mubr.f32.gmra.mxu0 %v538
      %v720 = vpop.f32.mrf.mxu0
      %v721 = vadd.f32 0.0, %v720
      %v722 = vpop.f32.mrf.mxu0
      %723 = vmatprep.mubr.f32.mxu0 0.0
      %724 = vmatmul.mubr.f32.gmra.mxu0 %v540
      %v725 = vpop.f32.mrf.mxu0
      %v726 = vadd.f32 0.0, %v725
      %v727 = vpop.f32.mrf.mxu0
      %728 = vmatprep.mubr.f32.mxu0 0.0
      %729 = vmatmul.mubr.f32.gmra.mxu0 %v542
      %v730 = vpop.f32.mrf.mxu0
      %v731 = vadd.f32 0.0, %v730
      %v732 = vpop.f32.mrf.mxu0
      %733 = vmatprep.mubr.f32.mxu0 0.0
      %734 = vmatmul.mubr.f32.gmra.mxu0 %v544
      %v735 = vpop.f32.mrf.mxu0
      %v736 = vadd.f32 0.0, %v735
      %v737 = vpop.f32.mrf.mxu0
      %738 = vmatprep.mubr.f32.mxu0 0.0
      %739 = vmatmul.mubr.f32.gmra.mxu0 %v546
      %v740 = vpop.f32.mrf.mxu0
      %v741 = vadd.f32 0.0, %v740
      %v742 = vpop.f32.mrf.mxu0
      %743 = vmatprep.mubr.f32.mxu0 0.0
      %744 = vmatmul.mubr.f32.gmra.mxu0 %v548
      %v745 = vpop.f32.mrf.mxu0
      %v746 = vadd.f32 0.0, %v745
      %v747 = vpop.f32.mrf.mxu0
      %748 = vmatprep.mubr.f32.mxu0 0.0
      %749 = vmatmul.mubr.f32.gmra.mxu0 %v550
      %v750 = vpop.f32.mrf.mxu0
      %v751 = vadd.f32 0.0, %v750
      %v752 = vpop.f32.mrf.mxu0
      %753 = vmatprep.mubr.f32.mxu0 0.0
      %754 = vmatmul.mubr.f32.gmra.mxu0 %v552
      %v755 = vpop.f32.mrf.mxu0
      %v756 = vadd.f32 0.0, %v755
      %v757 = vpop.f32.mrf.mxu0
      %758 = vmatprep.mubr.f32.mxu0 0.0
      %759 = vmatmul.mubr.f32.gmra.mxu0 %v554
      %v760 = vpop.f32.mrf.mxu0
      %v761 = vadd.f32 0.0, %v760
      %v762 = vpop.f32.mrf.mxu0
      %763 = vmatprep.mubr.f32.mxu0 0.0
      %764 = vmatmul.mubr.f32.gmra.mxu0 %v556
      %v765 = vpop.f32.mrf.mxu0
      %v766 = vadd.f32 0.0, %v765
      %v767 = vpop.f32.mrf.mxu0
      %768 = vmatprep.mubr.f32.mxu0 0.0
      %769 = vmatmul.mubr.f32.gmra.mxu0 %v558
      %v770 = vpop.f32.mrf.mxu0
      %v771 = vadd.f32 0.0, %v770
      %v772 = vpop.f32.mrf.mxu0
      %773 = vmatprep.mubr.f32.mxu0 0.0
      %774 = vmatmul.mubr.f32.gmra.mxu0 %v560
      %v775 = vpop.f32.mrf.mxu0
      %v776 = vadd.f32 0.0, %v775
      %v777 = vpop.f32.mrf.mxu0
      %778 = vmatprep.mubr.f32.mxu0 0.0
      %779 = vmatmul.mubr.f32.gmra.mxu0 %v562
      %v780 = vpop.f32.mrf.mxu0
      %v781 = vadd.f32 0.0, %v780
      %v782 = vpop.f32.mrf.mxu0
      %783 = vmatprep.mubr.f32.mxu0 0.0
      %784 = vmatmul.mubr.f32.gmra.mxu0 %v564
      %v785 = vpop.f32.mrf.mxu0
      %v786 = vadd.f32 0.0, %v785
      %v787 = vpop.f32.mrf.mxu0
      %788 = vmatprep.mubr.f32.mxu0 0.0
      %789 = vmatmul.mubr.f32.gmra.mxu0 %v566
      %v790 = vpop.f32.mrf.mxu0
      %v791 = vadd.f32 0.0, %v790
      %v792 = vpop.f32.mrf.mxu0
      %793 = vmatprep.mubr.f32.mxu0 0.0
      %794 = vmatmul.mubr.f32.gmra.mxu0 %v568
      %v795 = vpop.f32.mrf.mxu0
      %v796 = vadd.f32 0.0, %v795
      %v797 = vpop.f32.mrf.mxu0
      %798 = vdwg.mxu0
      %v799 = vsel %vm505, %v320, 0
      %v801 = vsel %vm505, %v321, 0
      %v803 = vsel %vm505, %v323, 0
      %v805 = vsel %vm505, %v324, 0
      %v807 = vsel %vm505, %v326, 0
      %v809 = vsel %vm505, %v327, 0
      %v811 = vsel %vm505, %v329, 0
      %v813 = vsel %vm505, %v330, 0
      %v815 = vsel %vm505, %v332, 0
      %v817 = vsel %vm505, %v333, 0
      %v819 = vsel %vm505, %v335, 0
      %v821 = vsel %vm505, %v336, 0
      %v823 = vsel %vm505, %v338, 0
      %v825 = vsel %vm505, %v339, 0
      %v827 = vsel %vm505, %v341, 0
      %v829 = vsel %vm505, %v342, 0
      %v831 = vsel %vm505, %v344, 0
      %v833 = vsel %vm505, %v345, 0
      %v835 = vsel %vm505, %v347, 0
      %v837 = vsel %vm505, %v348, 0
      %v839 = vsel %vm505, %v350, 0
      %v841 = vsel %vm505, %v351, 0
      %v843 = vsel %vm505, %v353, 0
      %v845 = vsel %vm505, %v354, 0
      %v847 = vsel %vm505, %v356, 0
      %v849 = vsel %vm505, %v357, 0
      %v851 = vsel %vm505, %v359, 0
      %v853 = vsel %vm505, %v360, 0
      %v855 = vsel %vm505, %v362, 0
      %v857 = vsel %vm505, %v363, 0
      %v859 = vsel %vm505, %v365, 0
      %v861 = vsel %vm505, %v366, 0
      %v864 = vsel %vm570, %v374, 0
      %866 = vmatprep.subr.mxu0 0.0
      %867 = vmatpush1.msra.mxu0 0.0
      %868 = vmatprep.subr.mxu0 0.0
      %869 = vmatpush1.msra.mxu0 0.0
      %870 = vmatprep.subr.mxu0 0.0
      %871 = vmatpush1.msra.mxu0 0.0
      %872 = vmatprep.subr.mxu0 0.0
      %873 = vmatpush1.msra.mxu0 0.0
      %874 = vmatprep.subr.mxu0 0.0
      %875 = vmatpush1.msra.mxu0 0.0
      %876 = vmatprep.subr.mxu0 0.0
      %877 = vmatpush1.msra.mxu0 0.0
      %878 = vmatprep.subr.mxu0 0.0
      %879 = vmatpush1.msra.mxu0 0.0
      %880 = vmatprep.subr.mxu0 0.0
      %881 = vmatpush1.msra.mxu0 0.0
      %882 = vmatprep.subr.mxu0 0.0
      %883 = vmatpush1.msra.mxu0 0.0
      %884 = vmatprep.subr.mxu0 0.0
      %885 = vmatpush1.msra.mxu0 0.0
      %886 = vmatprep.subr.mxu0 0.0
      %887 = vmatpush1.msra.mxu0 0.0
      %888 = vmatprep.subr.mxu0 0.0
      %889 = vmatpush1.msra.mxu0 0.0
      %890 = vmatprep.subr.mxu0 0.0
      %891 = vmatpush1.msra.mxu0 0.0
      %892 = vmatprep.subr.mxu0 0.0
      %893 = vmatpush1.msra.mxu0 0.0
      %894 = vmatprep.subr.mxu0 0.0
      %895 = vmatpush1.msra.mxu0 0.0
      %896 = vmatprep.subr.mxu0 0.0
      %897 = vmatpush1.msra.mxu0 %v864
      %898 = vmatprep.subr.mxu0 0.0
      %899 = vmatpush2.msra.mxu0 0.0
      %900 = vmatprep.subr.mxu0 0.0
      %901 = vmatpush2.msra.mxu0 0.0
      %902 = vmatprep.subr.mxu0 0.0
      %903 = vmatpush2.msra.mxu0 0.0
      %904 = vmatprep.subr.mxu0 0.0
      %905 = vmatpush2.msra.mxu0 0.0
      %906 = vmatprep.subr.mxu0 0.0
      %907 = vmatpush2.msra.mxu0 0.0
      %908 = vmatprep.subr.mxu0 0.0
      %909 = vmatpush2.msra.mxu0 0.0
      %910 = vmatprep.subr.mxu0 0.0
      %911 = vmatpush2.msra.mxu0 0.0
      %912 = vmatprep.subr.mxu0 0.0
      %913 = vmatpush2.msra.mxu0 0.0
      %914 = vmatprep.subr.mxu0 0.0
      %915 = vmatpush2.msra.mxu0 0.0
      %916 = vmatprep.subr.mxu0 0.0
      %917 = vmatpush2.msra.mxu0 0.0
      %918 = vmatprep.subr.mxu0 0.0
      %919 = vmatpush2.msra.mxu0 0.0
      %920 = vmatprep.subr.mxu0 0.0
      %921 = vmatpush2.msra.mxu0 0.0
      %922 = vmatprep.subr.mxu0 0.0
      %923 = vmatpush2.msra.mxu0 0.0
      %924 = vmatprep.subr.mxu0 0.0
      %925 = vmatpush2.msra.mxu0 0.0
      %926 = vmatprep.subr.mxu0 0.0
      %927 = vmatpush2.msra.mxu0 0.0
      %928 = vmatprep.subr.mxu0 0.0
      %929 = vmatpush2.msra.mxu0 0.0
      %930 = vmatprep.mubr.f32.mxu0 0.0
      %931 = vmatmul.mubr.f32.gmra.mxu0 %v799
      %v932 = vpop.f32.mrf.mxu0
      %v933 = vadd.f32 %v641, %v932
      %v934 = vpop.f32.mrf.mxu0
      %935 = vmatprep.mubr.f32.mxu0 0.0
      %936 = vmatmul.mubr.f32.gmra.mxu0 %v801
      %v937 = vpop.f32.mrf.mxu0
      %v938 = vadd.f32 %v646, %v937
      %v939 = vpop.f32.mrf.mxu0
      %940 = vmatprep.mubr.f32.mxu0 0.0
      %941 = vmatmul.mubr.f32.gmra.mxu0 %v803
      %v942 = vpop.f32.mrf.mxu0
      %v943 = vadd.f32 %v651, %v942
      %v944 = vpop.f32.mrf.mxu0
      %945 = vmatprep.mubr.f32.mxu0 0.0
      %946 = vmatmul.mubr.f32.gmra.mxu0 %v805
      %v947 = vpop.f32.mrf.mxu0
      %v948 = vadd.f32 %v656, %v947
      %v949 = vpop.f32.mrf.mxu0
      %950 = vmatprep.mubr.f32.mxu0 0.0
      %951 = vmatmul.mubr.f32.gmra.mxu0 %v807
      %v952 = vpop.f32.mrf.mxu0
      %v953 = vadd.f32 %v661, %v952
      %v954 = vpop.f32.mrf.mxu0
      %955 = vmatprep.mubr.f32.mxu0 0.0
      %956 = vmatmul.mubr.f32.gmra.mxu0 %v809
      %v957 = vpop.f32.mrf.mxu0
      %v958 = vadd.f32 %v666, %v957
      %v959 = vpop.f32.mrf.mxu0
      %960 = vmatprep.mubr.f32.mxu0 0.0
      %961 = vmatmul.mubr.f32.gmra.mxu0 %v811
      %v962 = vpop.f32.mrf.mxu0
      %v963 = vadd.f32 %v671, %v962
      %v964 = vpop.f32.mrf.mxu0
      %965 = vmatprep.mubr.f32.mxu0 0.0
      %966 = vmatmul.mubr.f32.gmra.mxu0 %v813
      %v967 = vpop.f32.mrf.mxu0
      %v968 = vadd.f32 %v676, %v967
      %v969 = vpop.f32.mrf.mxu0
      %970 = vmatprep.mubr.f32.mxu0 0.0
      %971 = vmatmul.mubr.f32.gmra.mxu0 %v815
      %v972 = vpop.f32.mrf.mxu0
      %v973 = vadd.f32 %v681, %v972
      %v974 = vpop.f32.mrf.mxu0
      %975 = vmatprep.mubr.f32.mxu0 0.0
      %976 = vmatmul.mubr.f32.gmra.mxu0 %v817
      %v977 = vpop.f32.mrf.mxu0
      %v978 = vadd.f32 %v686, %v977
      %v979 = vpop.f32.mrf.mxu0
      %980 = vmatprep.mubr.f32.mxu0 0.0
      %981 = vmatmul.mubr.f32.gmra.mxu0 %v819
      %v982 = vpop.f32.mrf.mxu0
      %v983 = vadd.f32 %v691, %v982
      %v984 = vpop.f32.mrf.mxu0
      %985 = vmatprep.mubr.f32.mxu0 0.0
      %986 = vmatmul.mubr.f32.gmra.mxu0 %v821
      %v987 = vpop.f32.mrf.mxu0
      %v988 = vadd.f32 %v696, %v987
      %v989 = vpop.f32.mrf.mxu0
      %990 = vmatprep.mubr.f32.mxu0 0.0
      %991 = vmatmul.mubr.f32.gmra.mxu0 %v823
      %v992 = vpop.f32.mrf.mxu0
      %v993 = vadd.f32 %v701, %v992
      %v994 = vpop.f32.mrf.mxu0
      %995 = vmatprep.mubr.f32.mxu0 0.0
      %996 = vmatmul.mubr.f32.gmra.mxu0 %v825
      %v997 = vpop.f32.mrf.mxu0
      %v998 = vadd.f32 %v706, %v997
      %v999 = vpop.f32.mrf.mxu0
      %1000 = vmatprep.mubr.f32.mxu0 0.0
      %1001 = vmatmul.mubr.f32.gmra.mxu0 %v827
      %v1002 = vpop.f32.mrf.mxu0
      %v1003 = vadd.f32 %v711, %v1002
      %v1004 = vpop.f32.mrf.mxu0
      %1005 = vmatprep.mubr.f32.mxu0 0.0
      %1006 = vmatmul.mubr.f32.gmra.mxu0 %v829
      %v1007 = vpop.f32.mrf.mxu0
      %v1008 = vadd.f32 %v716, %v1007
      %v1009 = vpop.f32.mrf.mxu0
      %1010 = vmatprep.mubr.f32.mxu0 0.0
      %1011 = vmatmul.mubr.f32.gmra.mxu0 %v831
      %v1012 = vpop.f32.mrf.mxu0
      %v1013 = vadd.f32 %v721, %v1012
      %v1014 = vpop.f32.mrf.mxu0
      %1015 = vmatprep.mubr.f32.mxu0 0.0
      %1016 = vmatmul.mubr.f32.gmra.mxu0 %v833
      %v1017 = vpop.f32.mrf.mxu0
      %v1018 = vadd.f32 %v726, %v1017
      %v1019 = vpop.f32.mrf.mxu0
      %1020 = vmatprep.mubr.f32.mxu0 0.0
      %1021 = vmatmul.mubr.f32.gmra.mxu0 %v835
      %v1022 = vpop.f32.mrf.mxu0
      %v1023 = vadd.f32 %v731, %v1022
      %v1024 = vpop.f32.mrf.mxu0
      %1025 = vmatprep.mubr.f32.mxu0 0.0
      %1026 = vmatmul.mubr.f32.gmra.mxu0 %v837
      %v1027 = vpop.f32.mrf.mxu0
      %v1028 = vadd.f32 %v736, %v1027
      %v1029 = vpop.f32.mrf.mxu0
      %1030 = vmatprep.mubr.f32.mxu0 0.0
      %1031 = vmatmul.mubr.f32.gmra.mxu0 %v839
      %v1032 = vpop.f32.mrf.mxu0
      %v1033 = vadd.f32 %v741, %v1032
      %v1034 = vpop.f32.mrf.mxu0
      %1035 = vmatprep.mubr.f32.mxu0 0.0
      %1036 = vmatmul.mubr.f32.gmra.mxu0 %v841
      %v1037 = vpop.f32.mrf.mxu0
      %v1038 = vadd.f32 %v746, %v1037
      %v1039 = vpop.f32.mrf.mxu0
      %1040 = vmatprep.mubr.f32.mxu0 0.0
      %1041 = vmatmul.mubr.f32.gmra.mxu0 %v843
      %v1042 = vpop.f32.mrf.mxu0
      %v1043 = vadd.f32 %v751, %v1042
      %v1044 = vpop.f32.mrf.mxu0
      %1045 = vmatprep.mubr.f32.mxu0 0.0
      %1046 = vmatmul.mubr.f32.gmra.mxu0 %v845
      %v1047 = vpop.f32.mrf.mxu0
      %v1048 = vadd.f32 %v756, %v1047
      %v1049 = vpop.f32.mrf.mxu0
      %1050 = vmatprep.mubr.f32.mxu0 0.0
      %1051 = vmatmul.mubr.f32.gmra.mxu0 %v847
      %v1052 = vpop.f32.mrf.mxu0
      %v1053 = vadd.f32 %v761, %v1052
      %v1054 = vpop.f32.mrf.mxu0
      %1055 = vmatprep.mubr.f32.mxu0 0.0
      %1056 = vmatmul.mubr.f32.gmra.mxu0 %v849
      %v1057 = vpop.f32.mrf.mxu0
      %v1058 = vadd.f32 %v766, %v1057
      %v1059 = vpop.f32.mrf.mxu0
      %1060 = vmatprep.mubr.f32.mxu0 0.0
      %1061 = vmatmul.mubr.f32.gmra.mxu0 %v851
      %v1062 = vpop.f32.mrf.mxu0
      %v1063 = vadd.f32 %v771, %v1062
      %v1064 = vpop.f32.mrf.mxu0
      %1065 = vmatprep.mubr.f32.mxu0 0.0
      %1066 = vmatmul.mubr.f32.gmra.mxu0 %v853
      %v1067 = vpop.f32.mrf.mxu0
      %v1068 = vadd.f32 %v776, %v1067
      %v1069 = vpop.f32.mrf.mxu0
      %1070 = vmatprep.mubr.f32.mxu0 0.0
      %1071 = vmatmul.mubr.f32.gmra.mxu0 %v855
      %v1072 = vpop.f32.mrf.mxu0
      %v1073 = vadd.f32 %v781, %v1072
      %v1074 = vpop.f32.mrf.mxu0
      %1075 = vmatprep.mubr.f32.mxu0 0.0
      %1076 = vmatmul.mubr.f32.gmra.mxu0 %v857
      %v1077 = vpop.f32.mrf.mxu0
      %v1078 = vadd.f32 %v786, %v1077
      %v1079 = vpop.f32.mrf.mxu0
      %1080 = vmatprep.mubr.f32.mxu0 0.0
      %1081 = vmatmul.mubr.f32.gmra.mxu0 %v859
      %v1082 = vpop.f32.mrf.mxu0
      %v1083 = vadd.f32 %v791, %v1082
      %v1084 = vpop.f32.mrf.mxu0
      %1085 = vmatprep.mubr.f32.mxu0 0.0
      %1086 = vmatmul.mubr.f32.gmra.mxu0 %v861
      %v1087 = vpop.f32.mrf.mxu0
      %v1088 = vadd.f32 %v796, %v1087
      %v1089 = vpop.f32.mrf.mxu0
      %1090 = vdwg.mxu0
      %vm1091 = vcmask 1045504
      %v1092 = vrot.slane %v320, 2
      %v1093 = vrot.slane %v321, 2
      %v1094 = vsel %vm1091, %v1092, %v1093
      %v1095 = vrot.slane %v322, 2
      %v1096 = vsel %vm1091, %v1093, %v1095
      %v1097 = vrot.slane %v323, 2
      %v1098 = vrot.slane %v324, 2
      %v1099 = vsel %vm1091, %v1097, %v1098
      %v1100 = vrot.slane %v325, 2
      %v1101 = vsel %vm1091, %v1098, %v1100
      %v1102 = vrot.slane %v326, 2
      %v1103 = vrot.slane %v327, 2
      %v1104 = vsel %vm1091, %v1102, %v1103
      %v1105 = vrot.slane %v328, 2
      %v1106 = vsel %vm1091, %v1103, %v1105
      %v1107 = vrot.slane %v329, 2
      %v1108 = vrot.slane %v330, 2
      %v1109 = vsel %vm1091, %v1107, %v1108
      %v1110 = vrot.slane %v331, 2
      %v1111 = vsel %vm1091, %v1108, %v1110
      %v1112 = vrot.slane %v332, 2
      %v1113 = vrot.slane %v333, 2
      %v1114 = vsel %vm1091, %v1112, %v1113
      %v1115 = vrot.slane %v334, 2
      %v1116 = vsel %vm1091, %v1113, %v1115
      %v1117 = vrot.slane %v335, 2
      %v1118 = vrot.slane %v336, 2
      %v1119 = vsel %vm1091, %v1117, %v1118
      %v1120 = vrot.slane %v337, 2
      %v1121 = vsel %vm1091, %v1118, %v1120
      %v1122 = vrot.slane %v338, 2
      %v1123 = vrot.slane %v339, 2
      %v1124 = vsel %vm1091, %v1122, %v1123
      %v1125 = vrot.slane %v340, 2
      %v1126 = vsel %vm1091, %v1123, %v1125
      %v1127 = vrot.slane %v341, 2
      %v1128 = vrot.slane %v342, 2
      %v1129 = vsel %vm1091, %v1127, %v1128
      %v1130 = vrot.slane %v343, 2
      %v1131 = vsel %vm1091, %v1128, %v1130
      %v1132 = vrot.slane %v344, 2
      %v1133 = vrot.slane %v345, 2
      %v1134 = vsel %vm1091, %v1132, %v1133
      %v1135 = vrot.slane %v346, 2
      %v1136 = vsel %vm1091, %v1133, %v1135
      %v1137 = vrot.slane %v347, 2
      %v1138 = vrot.slane %v348, 2
      %v1139 = vsel %vm1091, %v1137, %v1138
      %v1140 = vrot.slane %v349, 2
      %v1141 = vsel %vm1091, %v1138, %v1140
      %v1142 = vrot.slane %v350, 2
      %v1143 = vrot.slane %v351, 2
      %v1144 = vsel %vm1091, %v1142, %v1143
      %v1145 = vrot.slane %v352, 2
      %v1146 = vsel %vm1091, %v1143, %v1145
      %v1147 = vrot.slane %v353, 2
      %v1148 = vrot.slane %v354, 2
      %v1149 = vsel %vm1091, %v1147, %v1148
      %v1150 = vrot.slane %v355, 2
      %v1151 = vsel %vm1091, %v1148, %v1150
      %v1152 = vrot.slane %v356, 2
      %v1153 = vrot.slane %v357, 2
      %v1154 = vsel %vm1091, %v1152, %v1153
      %v1155 = vrot.slane %v358, 2
      %v1156 = vsel %vm1091, %v1153, %v1155
      %v1157 = vrot.slane %v359, 2
      %v1158 = vrot.slane %v360, 2
      %v1159 = vsel %vm1091, %v1157, %v1158
      %v1160 = vrot.slane %v361, 2
      %v1161 = vsel %vm1091, %v1158, %v1160
      %v1162 = vrot.slane %v362, 2
      %v1163 = vrot.slane %v363, 2
      %v1164 = vsel %vm1091, %v1162, %v1163
      %v1165 = vrot.slane %v364, 2
      %v1166 = vsel %vm1091, %v1163, %v1165
      %v1167 = vrot.slane %v365, 2
      %v1168 = vrot.slane %v366, 2
      %v1169 = vsel %vm1091, %v1167, %v1168
      %v1170 = vrot.slane %v367, 2
      %v1171 = vsel %vm1091, %v1168, %v1170
      %v1172 = vld [vmem:[%s2 + $0x8] sm:$0xf]
      %v1173 = vsel %vm505, %v1094, 0
      %v1175 = vsel %vm505, %v1096, 0
      %v1177 = vsel %vm505, %v1099, 0
      %v1179 = vsel %vm505, %v1101, 0
      %v1181 = vsel %vm505, %v1104, 0
      %v1183 = vsel %vm505, %v1106, 0
      %v1185 = vsel %vm505, %v1109, 0
      %v1187 = vsel %vm505, %v1111, 0
      %v1189 = vsel %vm505, %v1114, 0
      %v1191 = vsel %vm505, %v1116, 0
      %v1193 = vsel %vm505, %v1119, 0
      %v1195 = vsel %vm505, %v1121, 0
      %v1197 = vsel %vm505, %v1124, 0
      %v1199 = vsel %vm505, %v1126, 0
      %v1201 = vsel %vm505, %v1129, 0
      %v1203 = vsel %vm505, %v1131, 0
      %v1205 = vsel %vm505, %v1134, 0
      %v1207 = vsel %vm505, %v1136, 0
      %v1209 = vsel %vm505, %v1139, 0
      %v1211 = vsel %vm505, %v1141, 0
      %v1213 = vsel %vm505, %v1144, 0
      %v1215 = vsel %vm505, %v1146, 0
      %v1217 = vsel %vm505, %v1149, 0
      %v1219 = vsel %vm505, %v1151, 0
      %v1221 = vsel %vm505, %v1154, 0
      %v1223 = vsel %vm505, %v1156, 0
      %v1225 = vsel %vm505, %v1159, 0
      %v1227 = vsel %vm505, %v1161, 0
      %v1229 = vsel %vm505, %v1164, 0
      %v1231 = vsel %vm505, %v1166, 0
      %v1233 = vsel %vm505, %v1169, 0
      %v1235 = vsel %vm505, %v1171, 0
      %v1238 = vsel %vm570, %v1172, 0
      %1240 = vmatprep.subr.mxu0 0.0
      %1241 = vmatpush1.msra.mxu0 0.0
      %1242 = vmatprep.subr.mxu0 0.0
      %1243 = vmatpush1.msra.mxu0 0.0
      %1244 = vmatprep.subr.mxu0 0.0
      %1245 = vmatpush1.msra.mxu0 0.0
      %1246 = vmatprep.subr.mxu0 0.0
      %1247 = vmatpush1.msra.mxu0 0.0
      %1248 = vmatprep.subr.mxu0 0.0
      %1249 = vmatpush1.msra.mxu0 0.0
      %1250 = vmatprep.subr.mxu0 0.0
      %1251 = vmatpush1.msra.mxu0 0.0
      %1252 = vmatprep.subr.mxu0 0.0
      %1253 = vmatpush1.msra.mxu0 0.0
      %1254 = vmatprep.subr.mxu0 0.0
      %1255 = vmatpush1.msra.mxu0 0.0
      %1256 = vmatprep.subr.mxu0 0.0
      %1257 = vmatpush1.msra.mxu0 0.0
      %1258 = vmatprep.subr.mxu0 0.0
      %1259 = vmatpush1.msra.mxu0 0.0
      %1260 = vmatprep.subr.mxu0 0.0
      %1261 = vmatpush1.msra.mxu0 0.0
      %1262 = vmatprep.subr.mxu0 0.0
      %1263 = vmatpush1.msra.mxu0 0.0
      %1264 = vmatprep.subr.mxu0 0.0
      %1265 = vmatpush1.msra.mxu0 0.0
      %1266 = vmatprep.subr.mxu0 0.0
      %1267 = vmatpush1.msra.mxu0 0.0
      %1268 = vmatprep.subr.mxu0 0.0
      %1269 = vmatpush1.msra.mxu0 0.0
      %1270 = vmatprep.subr.mxu0 0.0
      %1271 = vmatpush1.msra.mxu0 %v1238
      %1272 = vmatprep.subr.mxu0 0.0
      %1273 = vmatpush2.msra.mxu0 0.0
      %1274 = vmatprep.subr.mxu0 0.0
      %1275 = vmatpush2.msra.mxu0 0.0
      %1276 = vmatprep.subr.mxu0 0.0
      %1277 = vmatpush2.msra.mxu0 0.0
      %1278 = vmatprep.subr.mxu0 0.0
      %1279 = vmatpush2.msra.mxu0 0.0
      %1280 = vmatprep.subr.mxu0 0.0
      %1281 = vmatpush2.msra.mxu0 0.0
      %1282 = vmatprep.subr.mxu0 0.0
      %1283 = vmatpush2.msra.mxu0 0.0
      %1284 = vmatprep.subr.mxu0 0.0
      %1285 = vmatpush2.msra.mxu0 0.0
      %1286 = vmatprep.subr.mxu0 0.0
      %1287 = vmatpush2.msra.mxu0 0.0
      %1288 = vmatprep.subr.mxu0 0.0
      %1289 = vmatpush2.msra.mxu0 0.0
      %1290 = vmatprep.subr.mxu0 0.0
      %1291 = vmatpush2.msra.mxu0 0.0
      %1292 = vmatprep.subr.mxu0 0.0
      %1293 = vmatpush2.msra.mxu0 0.0
      %1294 = vmatprep.subr.mxu0 0.0
      %1295 = vmatpush2.msra.mxu0 0.0
      %1296 = vmatprep.subr.mxu0 0.0
      %1297 = vmatpush2.msra.mxu0 0.0
      %1298 = vmatprep.subr.mxu0 0.0
      %1299 = vmatpush2.msra.mxu0 0.0
      %1300 = vmatprep.subr.mxu0 0.0
      %1301 = vmatpush2.msra.mxu0 0.0
      %1302 = vmatprep.subr.mxu0 0.0
      %1303 = vmatpush2.msra.mxu0 0.0
      %1304 = vmatprep.mubr.f32.mxu0 0.0
      %1305 = vmatmul.mubr.f32.gmra.mxu0 %v1173
      %v1306 = vpop.f32.mrf.mxu0
      %v1307 = vadd.f32 0.0, %v1306
      %v1308 = vpop.f32.mrf.mxu0
      %1309 = vmatprep.mubr.f32.mxu0 0.0
      %1310 = vmatmul.mubr.f32.gmra.mxu0 %v1175
      %v1311 = vpop.f32.mrf.mxu0
      %v1312 = vadd.f32 0.0, %v1311
      %v1313 = vpop.f32.mrf.mxu0
      %1314 = vmatprep.mubr.f32.mxu0 0.0
      %1315 = vmatmul.mubr.f32.gmra.mxu0 %v1177
      %v1316 = vpop.f32.mrf.mxu0
      %v1317 = vadd.f32 0.0, %v1316
      %v1318 = vpop.f32.mrf.mxu0
      %1319 = vmatprep.mubr.f32.mxu0 0.0
      %1320 = vmatmul.mubr.f32.gmra.mxu0 %v1179
      %v1321 = vpop.f32.mrf.mxu0
      %v1322 = vadd.f32 0.0, %v1321
      %v1323 = vpop.f32.mrf.mxu0
      %1324 = vmatprep.mubr.f32.mxu0 0.0
      %1325 = vmatmul.mubr.f32.gmra.mxu0 %v1181
      %v1326 = vpop.f32.mrf.mxu0
      %v1327 = vadd.f32 0.0, %v1326
      %v1328 = vpop.f32.mrf.mxu0
      %1329 = vmatprep.mubr.f32.mxu0 0.0
      %1330 = vmatmul.mubr.f32.gmra.mxu0 %v1183
      %v1331 = vpop.f32.mrf.mxu0
      %v1332 = vadd.f32 0.0, %v1331
      %v1333 = vpop.f32.mrf.mxu0
      %1334 = vmatprep.mubr.f32.mxu0 0.0
      %1335 = vmatmul.mubr.f32.gmra.mxu0 %v1185
      %v1336 = vpop.f32.mrf.mxu0
      %v1337 = vadd.f32 0.0, %v1336
      %v1338 = vpop.f32.mrf.mxu0
      %1339 = vmatprep.mubr.f32.mxu0 0.0
      %1340 = vmatmul.mubr.f32.gmra.mxu0 %v1187
      %v1341 = vpop.f32.mrf.mxu0
      %v1342 = vadd.f32 0.0, %v1341
      %v1343 = vpop.f32.mrf.mxu0
      %1344 = vmatprep.mubr.f32.mxu0 0.0
      %1345 = vmatmul.mubr.f32.gmra.mxu0 %v1189
      %v1346 = vpop.f32.mrf.mxu0
      %v1347 = vadd.f32 0.0, %v1346
      %v1348 = vpop.f32.mrf.mxu0
      %1349 = vmatprep.mubr.f32.mxu0 0.0
      %1350 = vmatmul.mubr.f32.gmra.mxu0 %v1191
      %v1351 = vpop.f32.mrf.mxu0
      %v1352 = vadd.f32 0.0, %v1351
      %v1353 = vpop.f32.mrf.mxu0
      %1354 = vmatprep.mubr.f32.mxu0 0.0
      %1355 = vmatmul.mubr.f32.gmra.mxu0 %v1193
      %v1356 = vpop.f32.mrf.mxu0
      %v1357 = vadd.f32 0.0, %v1356
      %v1358 = vpop.f32.mrf.mxu0
      %1359 = vmatprep.mubr.f32.mxu0 0.0
      %1360 = vmatmul.mubr.f32.gmra.mxu0 %v1195
      %v1361 = vpop.f32.mrf.mxu0
      %v1362 = vadd.f32 0.0, %v1361
      %v1363 = vpop.f32.mrf.mxu0
      %1364 = vmatprep.mubr.f32.mxu0 0.0
      %1365 = vmatmul.mubr.f32.gmra.mxu0 %v1197
      %v1366 = vpop.f32.mrf.mxu0
      %v1367 = vadd.f32 0.0, %v1366
      %v1368 = vpop.f32.mrf.mxu0
      %1369 = vmatprep.mubr.f32.mxu0 0.0
      %1370 = vmatmul.mubr.f32.gmra.mxu0 %v1199
      %v1371 = vpop.f32.mrf.mxu0
      %v1372 = vadd.f32 0.0, %v1371
      %v1373 = vpop.f32.mrf.mxu0
      %1374 = vmatprep.mubr.f32.mxu0 0.0
      %1375 = vmatmul.mubr.f32.gmra.mxu0 %v1201
      %v1376 = vpop.f32.mrf.mxu0
      %v1377 = vadd.f32 0.0, %v1376
      %v1378 = vpop.f32.mrf.mxu0
      %1379 = vmatprep.mubr.f32.mxu0 0.0
      %1380 = vmatmul.mubr.f32.gmra.mxu0 %v1203
      %v1381 = vpop.f32.mrf.mxu0
      %v1382 = vadd.f32 0.0, %v1381
      %v1383 = vpop.f32.mrf.mxu0
      %1384 = vmatprep.mubr.f32.mxu0 0.0
      %1385 = vmatmul.mubr.f32.gmra.mxu0 %v1205
      %v1386 = vpop.f32.mrf.mxu0
      %v1387 = vadd.f32 0.0, %v1386
      %v1388 = vpop.f32.mrf.mxu0
      %1389 = vmatprep.mubr.f32.mxu0 0.0
      %1390 = vmatmul.mubr.f32.gmra.mxu0 %v1207
      %v1391 = vpop.f32.mrf.mxu0
      %v1392 = vadd.f32 0.0, %v1391
      %v1393 = vpop.f32.mrf.mxu0
      %1394 = vmatprep.mubr.f32.mxu0 0.0
      %1395 = vmatmul.mubr.f32.gmra.mxu0 %v1209
      %v1396 = vpop.f32.mrf.mxu0
      %v1397 = vadd.f32 0.0, %v1396
      %v1398 = vpop.f32.mrf.mxu0
      %1399 = vmatprep.mubr.f32.mxu0 0.0
      %1400 = vmatmul.mubr.f32.gmra.mxu0 %v1211
      %v1401 = vpop.f32.mrf.mxu0
      %v1402 = vadd.f32 0.0, %v1401
      %v1403 = vpop.f32.mrf.mxu0
      %1404 = vmatprep.mubr.f32.mxu0 0.0
      %1405 = vmatmul.mubr.f32.gmra.mxu0 %v1213
      %v1406 = vpop.f32.mrf.mxu0
      %v1407 = vadd.f32 0.0, %v1406
      %v1408 = vpop.f32.mrf.mxu0
      %1409 = vmatprep.mubr.f32.mxu0 0.0
      %1410 = vmatmul.mubr.f32.gmra.mxu0 %v1215
      %v1411 = vpop.f32.mrf.mxu0
      %v1412 = vadd.f32 0.0, %v1411
      %v1413 = vpop.f32.mrf.mxu0
      %1414 = vmatprep.mubr.f32.mxu0 0.0
      %1415 = vmatmul.mubr.f32.gmra.mxu0 %v1217
      %v1416 = vpop.f32.mrf.mxu0
      %v1417 = vadd.f32 0.0, %v1416
      %v1418 = vpop.f32.mrf.mxu0
      %1419 = vmatprep.mubr.f32.mxu0 0.0
      %1420 = vmatmul.mubr.f32.gmra.mxu0 %v1219
      %v1421 = vpop.f32.mrf.mxu0
      %v1422 = vadd.f32 0.0, %v1421
      %v1423 = vpop.f32.mrf.mxu0
      %1424 = vmatprep.mubr.f32.mxu0 0.0
      %1425 = vmatmul.mubr.f32.gmra.mxu0 %v1221
      %v1426 = vpop.f32.mrf.mxu0
      %v1427 = vadd.f32 0.0, %v1426
      %v1428 = vpop.f32.mrf.mxu0
      %1429 = vmatprep.mubr.f32.mxu0 0.0
      %1430 = vmatmul.mubr.f32.gmra.mxu0 %v1223
      %v1431 = vpop.f32.mrf.mxu0
      %v1432 = vadd.f32 0.0, %v1431
      %v1433 = vpop.f32.mrf.mxu0
      %1434 = vmatprep.mubr.f32.mxu0 0.0
      %1435 = vmatmul.mubr.f32.gmra.mxu0 %v1225
      %v1436 = vpop.f32.mrf.mxu0
      %v1437 = vadd.f32 0.0, %v1436
      %v1438 = vpop.f32.mrf.mxu0
      %1439 = vmatprep.mubr.f32.mxu0 0.0
      %1440 = vmatmul.mubr.f32.gmra.mxu0 %v1227
      %v1441 = vpop.f32.mrf.mxu0
      %v1442 = vadd.f32 0.0, %v1441
      %v1443 = vpop.f32.mrf.mxu0
      %1444 = vmatprep.mubr.f32.mxu0 0.0
      %1445 = vmatmul.mubr.f32.gmra.mxu0 %v1229
      %v1446 = vpop.f32.mrf.mxu0
      %v1447 = vadd.f32 0.0, %v1446
      %v1448 = vpop.f32.mrf.mxu0
      %1449 = vmatprep.mubr.f32.mxu0 0.0
      %1450 = vmatmul.mubr.f32.gmra.mxu0 %v1231
      %v1451 = vpop.f32.mrf.mxu0
      %v1452 = vadd.f32 0.0, %v1451
      %v1453 = vpop.f32.mrf.mxu0
      %1454 = vmatprep.mubr.f32.mxu0 0.0
      %1455 = vmatmul.mubr.f32.gmra.mxu0 %v1233
      %v1456 = vpop.f32.mrf.mxu0
      %v1457 = vadd.f32 0.0, %v1456
      %v1458 = vpop.f32.mrf.mxu0
      %1459 = vmatprep.mubr.f32.mxu0 0.0
      %1460 = vmatmul.mubr.f32.gmra.mxu0 %v1235
      %v1461 = vpop.f32.mrf.mxu0
      %v1462 = vadd.f32 0.0, %v1461
      %v1463 = vpop.f32.mrf.mxu0
      %1464 = vdwg.mxu0
      %v1465 = vadd.f32 %v933, %v1307
      %v1466 = vadd.f32 %v938, %v1312
      %v1467 = vadd.f32 %v943, %v1317
      %v1468 = vadd.f32 %v948, %v1322
      %v1469 = vadd.f32 %v953, %v1327
      %v1470 = vadd.f32 %v958, %v1332
      %v1471 = vadd.f32 %v963, %v1337
      %v1472 = vadd.f32 %v968, %v1342
      %v1473 = vadd.f32 %v973, %v1347
      %v1474 = vadd.f32 %v978, %v1352
      %v1475 = vadd.f32 %v983, %v1357
      %v1476 = vadd.f32 %v988, %v1362
      %v1477 = vadd.f32 %v993, %v1367
      %v1478 = vadd.f32 %v998, %v1372
      %v1479 = vadd.f32 %v1003, %v1377
      %v1480 = vadd.f32 %v1008, %v1382
      %v1481 = vadd.f32 %v1013, %v1387
      %v1482 = vadd.f32 %v1018, %v1392
      %v1483 = vadd.f32 %v1023, %v1397
      %v1484 = vadd.f32 %v1028, %v1402
      %v1485 = vadd.f32 %v1033, %v1407
      %v1486 = vadd.f32 %v1038, %v1412
      %v1487 = vadd.f32 %v1043, %v1417
      %v1488 = vadd.f32 %v1048, %v1422
      %v1489 = vadd.f32 %v1053, %v1427
      %v1490 = vadd.f32 %v1058, %v1432
      %v1491 = vadd.f32 %v1063, %v1437
      %v1492 = vadd.f32 %v1068, %v1442
      %v1493 = vadd.f32 %v1073, %v1447
      %v1494 = vadd.f32 %v1078, %v1452
      %v1495 = vadd.f32 %v1083, %v1457
      %v1496 = vadd.f32 %v1088, %v1462
      %v1497 = vld [vmem:[%s2 + $0xc] sm:$0xf]
      %v1499 = vsel %vm505, %v368, 0
      %v1502 = vsel %vm505, %v369, 0
      %v1505 = vsel %vm570, %v1497, 0
      %1507 = vmatprep.subr.mxu0 0.0
      %1508 = vmatpush1.msra.mxu0 0.0
      %1509 = vmatprep.subr.mxu0 0.0
      %1510 = vmatpush1.msra.mxu0 0.0
      %1511 = vmatprep.subr.mxu0 0.0
      %1512 = vmatpush1.msra.mxu0 0.0
      %1513 = vmatprep.subr.mxu0 0.0
      %1514 = vmatpush1.msra.mxu0 0.0
      %1515 = vmatprep.subr.mxu0 0.0
      %1516 = vmatpush1.msra.mxu0 0.0
      %1517 = vmatprep.subr.mxu0 0.0
      %1518 = vmatpush1.msra.mxu0 0.0
      %1519 = vmatprep.subr.mxu0 0.0
      %1520 = vmatpush1.msra.mxu0 0.0
      %1521 = vmatprep.subr.mxu0 0.0
      %1522 = vmatpush1.msra.mxu0 0.0
      %1523 = vmatprep.subr.mxu0 0.0
      %1524 = vmatpush1.msra.mxu0 0.0
      %1525 = vmatprep.subr.mxu0 0.0
      %1526 = vmatpush1.msra.mxu0 0.0
      %1527 = vmatprep.subr.mxu0 0.0
      %1528 = vmatpush1.msra.mxu0 0.0
      %1529 = vmatprep.subr.mxu0 0.0
      %1530 = vmatpush1.msra.mxu0 0.0
      %1531 = vmatprep.subr.mxu0 0.0
      %1532 = vmatpush1.msra.mxu0 0.0
      %1533 = vmatprep.subr.mxu0 0.0
      %1534 = vmatpush1.msra.mxu0 0.0
      %1535 = vmatprep.subr.mxu0 0.0
      %1536 = vmatpush1.msra.mxu0 0.0
      %1537 = vmatprep.subr.mxu0 0.0
      %1538 = vmatpush1.msra.mxu0 %v1505
      %1539 = vmatprep.subr.mxu0 0.0
      %1540 = vmatpush2.msra.mxu0 0.0
      %1541 = vmatprep.subr.mxu0 0.0
      %1542 = vmatpush2.msra.mxu0 0.0
      %1543 = vmatprep.subr.mxu0 0.0
      %1544 = vmatpush2.msra.mxu0 0.0
      %1545 = vmatprep.subr.mxu0 0.0
      %1546 = vmatpush2.msra.mxu0 0.0
      %1547 = vmatprep.subr.mxu0 0.0
      %1548 = vmatpush2.msra.mxu0 0.0
      %1549 = vmatprep.subr.mxu0 0.0
      %1550 = vmatpush2.msra.mxu0 0.0
      %1551 = vmatprep.subr.mxu0 0.0
      %1552 = vmatpush2.msra.mxu0 0.0
      %1553 = vmatprep.subr.mxu0 0.0
      %1554 = vmatpush2.msra.mxu0 0.0
      %1555 = vmatprep.subr.mxu0 0.0
      %1556 = vmatpush2.msra.mxu0 0.0
      %1557 = vmatprep.subr.mxu0 0.0
      %1558 = vmatpush2.msra.mxu0 0.0
      %1559 = vmatprep.subr.mxu0 0.0
      %1560 = vmatpush2.msra.mxu0 0.0
      %1561 = vmatprep.subr.mxu0 0.0
      %1562 = vmatpush2.msra.mxu0 0.0
      %1563 = vmatprep.subr.mxu0 0.0
      %1564 = vmatpush2.msra.mxu0 0.0
      %1565 = vmatprep.subr.mxu0 0.0
      %1566 = vmatpush2.msra.mxu0 0.0
      %1567 = vmatprep.subr.mxu0 0.0
      %1568 = vmatpush2.msra.mxu0 0.0
      %1569 = vmatprep.subr.mxu0 0.0
      %1570 = vmatpush2.msra.mxu0 0.0
      %1571 = vmatprep.mubr.f32.mxu0 0.0
      %1572 = vmatmul.mubr.f32.gmra.mxu0 %v803
      %v1573 = vpop.f32.mrf.mxu0
      %v1574 = vadd.f32 0.0, %v1573
      %v1575 = vpop.f32.mrf.mxu0
      %1576 = vmatprep.mubr.f32.mxu0 0.0
      %1577 = vmatmul.mubr.f32.gmra.mxu0 %v805
      %v1578 = vpop.f32.mrf.mxu0
      %v1579 = vadd.f32 0.0, %v1578
      %v1580 = vpop.f32.mrf.mxu0
      %1581 = vmatprep.mubr.f32.mxu0 0.0
      %1582 = vmatmul.mubr.f32.gmra.mxu0 %v807
      %v1583 = vpop.f32.mrf.mxu0
      %v1584 = vadd.f32 0.0, %v1583
      %v1585 = vpop.f32.mrf.mxu0
      %1586 = vmatprep.mubr.f32.mxu0 0.0
      %1587 = vmatmul.mubr.f32.gmra.mxu0 %v809
      %v1588 = vpop.f32.mrf.mxu0
      %v1589 = vadd.f32 0.0, %v1588
      %v1590 = vpop.f32.mrf.mxu0
      %1591 = vmatprep.mubr.f32.mxu0 0.0
      %1592 = vmatmul.mubr.f32.gmra.mxu0 %v811
      %v1593 = vpop.f32.mrf.mxu0
      %v1594 = vadd.f32 0.0, %v1593
      %v1595 = vpop.f32.mrf.mxu0
      %1596 = vmatprep.mubr.f32.mxu0 0.0
      %1597 = vmatmul.mubr.f32.gmra.mxu0 %v813
      %v1598 = vpop.f32.mrf.mxu0
      %v1599 = vadd.f32 0.0, %v1598
      %v1600 = vpop.f32.mrf.mxu0
      %1601 = vmatprep.mubr.f32.mxu0 0.0
      %1602 = vmatmul.mubr.f32.gmra.mxu0 %v815
      %v1603 = vpop.f32.mrf.mxu0
      %v1604 = vadd.f32 0.0, %v1603
      %v1605 = vpop.f32.mrf.mxu0
      %1606 = vmatprep.mubr.f32.mxu0 0.0
      %1607 = vmatmul.mubr.f32.gmra.mxu0 %v817
      %v1608 = vpop.f32.mrf.mxu0
      %v1609 = vadd.f32 0.0, %v1608
      %v1610 = vpop.f32.mrf.mxu0
      %1611 = vmatprep.mubr.f32.mxu0 0.0
      %1612 = vmatmul.mubr.f32.gmra.mxu0 %v819
      %v1613 = vpop.f32.mrf.mxu0
      %v1614 = vadd.f32 0.0, %v1613
      %v1615 = vpop.f32.mrf.mxu0
      %1616 = vmatprep.mubr.f32.mxu0 0.0
      %1617 = vmatmul.mubr.f32.gmra.mxu0 %v821
      %v1618 = vpop.f32.mrf.mxu0
      %v1619 = vadd.f32 0.0, %v1618
      %v1620 = vpop.f32.mrf.mxu0
      %1621 = vmatprep.mubr.f32.mxu0 0.0
      %1622 = vmatmul.mubr.f32.gmra.mxu0 %v823
      %v1623 = vpop.f32.mrf.mxu0
      %v1624 = vadd.f32 0.0, %v1623
      %v1625 = vpop.f32.mrf.mxu0
      %1626 = vmatprep.mubr.f32.mxu0 0.0
      %1627 = vmatmul.mubr.f32.gmra.mxu0 %v825
      %v1628 = vpop.f32.mrf.mxu0
      %v1629 = vadd.f32 0.0, %v1628
      %v1630 = vpop.f32.mrf.mxu0
      %1631 = vmatprep.mubr.f32.mxu0 0.0
      %1632 = vmatmul.mubr.f32.gmra.mxu0 %v827
      %v1633 = vpop.f32.mrf.mxu0
      %v1634 = vadd.f32 0.0, %v1633
      %v1635 = vpop.f32.mrf.mxu0
      %1636 = vmatprep.mubr.f32.mxu0 0.0
      %1637 = vmatmul.mubr.f32.gmra.mxu0 %v829
      %v1638 = vpop.f32.mrf.mxu0
      %v1639 = vadd.f32 0.0, %v1638
      %v1640 = vpop.f32.mrf.mxu0
      %1641 = vmatprep.mubr.f32.mxu0 0.0
      %1642 = vmatmul.mubr.f32.gmra.mxu0 %v831
      %v1643 = vpop.f32.mrf.mxu0
      %v1644 = vadd.f32 0.0, %v1643
      %v1645 = vpop.f32.mrf.mxu0
      %1646 = vmatprep.mubr.f32.mxu0 0.0
      %1647 = vmatmul.mubr.f32.gmra.mxu0 %v833
      %v1648 = vpop.f32.mrf.mxu0
      %v1649 = vadd.f32 0.0, %v1648
      %v1650 = vpop.f32.mrf.mxu0
      %1651 = vmatprep.mubr.f32.mxu0 0.0
      %1652 = vmatmul.mubr.f32.gmra.mxu0 %v835
      %v1653 = vpop.f32.mrf.mxu0
      %v1654 = vadd.f32 0.0, %v1653
      %v1655 = vpop.f32.mrf.mxu0
      %1656 = vmatprep.mubr.f32.mxu0 0.0
      %1657 = vmatmul.mubr.f32.gmra.mxu0 %v837
      %v1658 = vpop.f32.mrf.mxu0
      %v1659 = vadd.f32 0.0, %v1658
      %v1660 = vpop.f32.mrf.mxu0
      %1661 = vmatprep.mubr.f32.mxu0 0.0
      %1662 = vmatmul.mubr.f32.gmra.mxu0 %v839
      %v1663 = vpop.f32.mrf.mxu0
      %v1664 = vadd.f32 0.0, %v1663
      %v1665 = vpop.f32.mrf.mxu0
      %1666 = vmatprep.mubr.f32.mxu0 0.0
      %1667 = vmatmul.mubr.f32.gmra.mxu0 %v841
      %v1668 = vpop.f32.mrf.mxu0
      %v1669 = vadd.f32 0.0, %v1668
      %v1670 = vpop.f32.mrf.mxu0
      %1671 = vmatprep.mubr.f32.mxu0 0.0
      %1672 = vmatmul.mubr.f32.gmra.mxu0 %v843
      %v1673 = vpop.f32.mrf.mxu0
      %v1674 = vadd.f32 0.0, %v1673
      %v1675 = vpop.f32.mrf.mxu0
      %1676 = vmatprep.mubr.f32.mxu0 0.0
      %1677 = vmatmul.mubr.f32.gmra.mxu0 %v845
      %v1678 = vpop.f32.mrf.mxu0
      %v1679 = vadd.f32 0.0, %v1678
      %v1680 = vpop.f32.mrf.mxu0
      %1681 = vmatprep.mubr.f32.mxu0 0.0
      %1682 = vmatmul.mubr.f32.gmra.mxu0 %v847
      %v1683 = vpop.f32.mrf.mxu0
      %v1684 = vadd.f32 0.0, %v1683
      %v1685 = vpop.f32.mrf.mxu0
      %1686 = vmatprep.mubr.f32.mxu0 0.0
      %1687 = vmatmul.mubr.f32.gmra.mxu0 %v849
      %v1688 = vpop.f32.mrf.mxu0
      %v1689 = vadd.f32 0.0, %v1688
      %v1690 = vpop.f32.mrf.mxu0
      %1691 = vmatprep.mubr.f32.mxu0 0.0
      %1692 = vmatmul.mubr.f32.gmra.mxu0 %v851
      %v1693 = vpop.f32.mrf.mxu0
      %v1694 = vadd.f32 0.0, %v1693
      %v1695 = vpop.f32.mrf.mxu0
      %1696 = vmatprep.mubr.f32.mxu0 0.0
      %1697 = vmatmul.mubr.f32.gmra.mxu0 %v853
      %v1698 = vpop.f32.mrf.mxu0
      %v1699 = vadd.f32 0.0, %v1698
      %v1700 = vpop.f32.mrf.mxu0
      %1701 = vmatprep.mubr.f32.mxu0 0.0
      %1702 = vmatmul.mubr.f32.gmra.mxu0 %v855
      %v1703 = vpop.f32.mrf.mxu0
      %v1704 = vadd.f32 0.0, %v1703
      %v1705 = vpop.f32.mrf.mxu0
      %1706 = vmatprep.mubr.f32.mxu0 0.0
      %1707 = vmatmul.mubr.f32.gmra.mxu0 %v857
      %v1708 = vpop.f32.mrf.mxu0
      %v1709 = vadd.f32 0.0, %v1708
      %v1710 = vpop.f32.mrf.mxu0
      %1711 = vmatprep.mubr.f32.mxu0 0.0
      %1712 = vmatmul.mubr.f32.gmra.mxu0 %v859
      %v1713 = vpop.f32.mrf.mxu0
      %v1714 = vadd.f32 0.0, %v1713
      %v1715 = vpop.f32.mrf.mxu0
      %1716 = vmatprep.mubr.f32.mxu0 0.0
      %1717 = vmatmul.mubr.f32.gmra.mxu0 %v861
      %v1718 = vpop.f32.mrf.mxu0
      %v1719 = vadd.f32 0.0, %v1718
      %v1720 = vpop.f32.mrf.mxu0
      %1721 = vmatprep.mubr.f32.mxu0 0.0
      %1722 = vmatmul.mubr.f32.gmra.mxu0 %v1499
      %v1723 = vpop.f32.mrf.mxu0
      %v1724 = vadd.f32 0.0, %v1723
      %v1725 = vpop.f32.mrf.mxu0
      %1726 = vmatprep.mubr.f32.mxu0 0.0
      %1727 = vmatmul.mubr.f32.gmra.mxu0 %v1502
      %v1728 = vpop.f32.mrf.mxu0
      %v1729 = vadd.f32 0.0, %v1728
      %v1730 = vpop.f32.mrf.mxu0
      %1731 = vdwg.mxu0
      %v1732 = vadd.f32 %v1465, %v1574
      %v1733 = vadd.f32 %v1466, %v1579
      %v1734 = vadd.f32 %v1467, %v1584
      %v1735 = vadd.f32 %v1468, %v1589
      %v1736 = vadd.f32 %v1469, %v1594
      %v1737 = vadd.f32 %v1470, %v1599
      %v1738 = vadd.f32 %v1471, %v1604
      %v1739 = vadd.f32 %v1472, %v1609
      %v1740 = vadd.f32 %v1473, %v1614
      %v1741 = vadd.f32 %v1474, %v1619
      %v1742 = vadd.f32 %v1475, %v1624
      %v1743 = vadd.f32 %v1476, %v1629
      %v1744 = vadd.f32 %v1477, %v1634
      %v1745 = vadd.f32 %v1478, %v1639
      %v1746 = vadd.f32 %v1479, %v1644
      %v1747 = vadd.f32 %v1480, %v1649
      %v1748 = vadd.f32 %v1481, %v1654
      %v1749 = vadd.f32 %v1482, %v1659
      %v1750 = vadd.f32 %v1483, %v1664
      %v1751 = vadd.f32 %v1484, %v1669
      %v1752 = vadd.f32 %v1485, %v1674
      %v1753 = vadd.f32 %v1486, %v1679
      %v1754 = vadd.f32 %v1487, %v1684
      %v1755 = vadd.f32 %v1488, %v1689
      %v1756 = vadd.f32 %v1489, %v1694
      %v1757 = vadd.f32 %v1490, %v1699
      %v1758 = vadd.f32 %v1491, %v1704
      %v1759 = vadd.f32 %v1492, %v1709
      %v1760 = vadd.f32 %v1493, %v1714
      %v1761 = vadd.f32 %v1494, %v1719
      %v1762 = vadd.f32 %v1495, %v1724
      %v1763 = vadd.f32 %v1496, %v1729
      %v1765 = vrot.slane %v368, 1
      %v1766 = vrot.slane %v369, 1
      %v1767 = vsel %vm423, %v1765, %v1766
      %v1768 = vrot.slane %v370, 1
      %v1769 = vsel %vm423, %v1766, %v1768
      %v1770 = vld [vmem:[%s2 + $0x10] sm:$0xf]
      %v1771 = vsel %vm505, %v1767, 0
      %v1773 = vsel %vm505, %v1769, 0
      %v1776 = vsel %vm570, %v1770, 0
      %1778 = vmatprep.subr.mxu0 0.0
      %1779 = vmatpush1.msra.mxu0 0.0
      %1780 = vmatprep.subr.mxu0 0.0
      %1781 = vmatpush1.msra.mxu0 0.0
      %1782 = vmatprep.subr.mxu0 0.0
      %1783 = vmatpush1.msra.mxu0 0.0
      %1784 = vmatprep.subr.mxu0 0.0
      %1785 = vmatpush1.msra.mxu0 0.0
      %1786 = vmatprep.subr.mxu0 0.0
      %1787 = vmatpush1.msra.mxu0 0.0
      %1788 = vmatprep.subr.mxu0 0.0
      %1789 = vmatpush1.msra.mxu0 0.0
      %1790 = vmatprep.subr.mxu0 0.0
      %1791 = vmatpush1.msra.mxu0 0.0
      %1792 = vmatprep.subr.mxu0 0.0
      %1793 = vmatpush1.msra.mxu0 0.0
      %1794 = vmatprep.subr.mxu0 0.0
      %1795 = vmatpush1.msra.mxu0 0.0
      %1796 = vmatprep.subr.mxu0 0.0
      %1797 = vmatpush1.msra.mxu0 0.0
      %1798 = vmatprep.subr.mxu0 0.0
      %1799 = vmatpush1.msra.mxu0 0.0
      %1800 = vmatprep.subr.mxu0 0.0
      %1801 = vmatpush1.msra.mxu0 0.0
      %1802 = vmatprep.subr.mxu0 0.0
      %1803 = vmatpush1.msra.mxu0 0.0
      %1804 = vmatprep.subr.mxu0 0.0
      %1805 = vmatpush1.msra.mxu0 0.0
      %1806 = vmatprep.subr.mxu0 0.0
      %1807 = vmatpush1.msra.mxu0 0.0
      %1808 = vmatprep.subr.mxu0 0.0
      %1809 = vmatpush1.msra.mxu0 %v1776
      %1810 = vmatprep.subr.mxu0 0.0
      %1811 = vmatpush2.msra.mxu0 0.0
      %1812 = vmatprep.subr.mxu0 0.0
      %1813 = vmatpush2.msra.mxu0 0.0
      %1814 = vmatprep.subr.mxu0 0.0
      %1815 = vmatpush2.msra.mxu0 0.0
      %1816 = vmatprep.subr.mxu0 0.0
      %1817 = vmatpush2.msra.mxu0 0.0
      %1818 = vmatprep.subr.mxu0 0.0
      %1819 = vmatpush2.msra.mxu0 0.0
      %1820 = vmatprep.subr.mxu0 0.0
      %1821 = vmatpush2.msra.mxu0 0.0
      %1822 = vmatprep.subr.mxu0 0.0
      %1823 = vmatpush2.msra.mxu0 0.0
      %1824 = vmatprep.subr.mxu0 0.0
      %1825 = vmatpush2.msra.mxu0 0.0
      %1826 = vmatprep.subr.mxu0 0.0
      %1827 = vmatpush2.msra.mxu0 0.0
      %1828 = vmatprep.subr.mxu0 0.0
      %1829 = vmatpush2.msra.mxu0 0.0
      %1830 = vmatprep.subr.mxu0 0.0
      %1831 = vmatpush2.msra.mxu0 0.0
      %1832 = vmatprep.subr.mxu0 0.0
      %1833 = vmatpush2.msra.mxu0 0.0
      %1834 = vmatprep.subr.mxu0 0.0
      %1835 = vmatpush2.msra.mxu0 0.0
      %1836 = vmatprep.subr.mxu0 0.0
      %1837 = vmatpush2.msra.mxu0 0.0
      %1838 = vmatprep.subr.mxu0 0.0
      %1839 = vmatpush2.msra.mxu0 0.0
      %1840 = vmatprep.subr.mxu0 0.0
      %1841 = vmatpush2.msra.mxu0 0.0
      %1842 = vmatprep.mubr.f32.mxu0 0.0
      %1843 = vmatmul.mubr.f32.gmra.mxu0 %v510
      %v1844 = vpop.f32.mrf.mxu0
      %v1845 = vadd.f32 0.0, %v1844
      %v1846 = vpop.f32.mrf.mxu0
      %1847 = vmatprep.mubr.f32.mxu0 0.0
      %1848 = vmatmul.mubr.f32.gmra.mxu0 %v512
      %v1849 = vpop.f32.mrf.mxu0
      %v1850 = vadd.f32 0.0, %v1849
      %v1851 = vpop.f32.mrf.mxu0
      %1852 = vmatprep.mubr.f32.mxu0 0.0
      %1853 = vmatmul.mubr.f32.gmra.mxu0 %v514
      %v1854 = vpop.f32.mrf.mxu0
      %v1855 = vadd.f32 0.0, %v1854
      %v1856 = vpop.f32.mrf.mxu0
      %1857 = vmatprep.mubr.f32.mxu0 0.0
      %1858 = vmatmul.mubr.f32.gmra.mxu0 %v516
      %v1859 = vpop.f32.mrf.mxu0
      %v1860 = vadd.f32 0.0, %v1859
      %v1861 = vpop.f32.mrf.mxu0
      %1862 = vmatprep.mubr.f32.mxu0 0.0
      %1863 = vmatmul.mubr.f32.gmra.mxu0 %v518
      %v1864 = vpop.f32.mrf.mxu0
      %v1865 = vadd.f32 0.0, %v1864
      %v1866 = vpop.f32.mrf.mxu0
      %1867 = vmatprep.mubr.f32.mxu0 0.0
      %1868 = vmatmul.mubr.f32.gmra.mxu0 %v520
      %v1869 = vpop.f32.mrf.mxu0
      %v1870 = vadd.f32 0.0, %v1869
      %v1871 = vpop.f32.mrf.mxu0
      %1872 = vmatprep.mubr.f32.mxu0 0.0
      %1873 = vmatmul.mubr.f32.gmra.mxu0 %v522
      %v1874 = vpop.f32.mrf.mxu0
      %v1875 = vadd.f32 0.0, %v1874
      %v1876 = vpop.f32.mrf.mxu0
      %1877 = vmatprep.mubr.f32.mxu0 0.0
      %1878 = vmatmul.mubr.f32.gmra.mxu0 %v524
      %v1879 = vpop.f32.mrf.mxu0
      %v1880 = vadd.f32 0.0, %v1879
      %v1881 = vpop.f32.mrf.mxu0
      %1882 = vmatprep.mubr.f32.mxu0 0.0
      %1883 = vmatmul.mubr.f32.gmra.mxu0 %v526
      %v1884 = vpop.f32.mrf.mxu0
      %v1885 = vadd.f32 0.0, %v1884
      %v1886 = vpop.f32.mrf.mxu0
      %1887 = vmatprep.mubr.f32.mxu0 0.0
      %1888 = vmatmul.mubr.f32.gmra.mxu0 %v528
      %v1889 = vpop.f32.mrf.mxu0
      %v1890 = vadd.f32 0.0, %v1889
      %v1891 = vpop.f32.mrf.mxu0
      %1892 = vmatprep.mubr.f32.mxu0 0.0
      %1893 = vmatmul.mubr.f32.gmra.mxu0 %v530
      %v1894 = vpop.f32.mrf.mxu0
      %v1895 = vadd.f32 0.0, %v1894
      %v1896 = vpop.f32.mrf.mxu0
      %1897 = vmatprep.mubr.f32.mxu0 0.0
      %1898 = vmatmul.mubr.f32.gmra.mxu0 %v532
      %v1899 = vpop.f32.mrf.mxu0
      %v1900 = vadd.f32 0.0, %v1899
      %v1901 = vpop.f32.mrf.mxu0
      %1902 = vmatprep.mubr.f32.mxu0 0.0
      %1903 = vmatmul.mubr.f32.gmra.mxu0 %v534
      %v1904 = vpop.f32.mrf.mxu0
      %v1905 = vadd.f32 0.0, %v1904
      %v1906 = vpop.f32.mrf.mxu0
      %1907 = vmatprep.mubr.f32.mxu0 0.0
      %1908 = vmatmul.mubr.f32.gmra.mxu0 %v536
      %v1909 = vpop.f32.mrf.mxu0
      %v1910 = vadd.f32 0.0, %v1909
      %v1911 = vpop.f32.mrf.mxu0
      %1912 = vmatprep.mubr.f32.mxu0 0.0
      %1913 = vmatmul.mubr.f32.gmra.mxu0 %v538
      %v1914 = vpop.f32.mrf.mxu0
      %v1915 = vadd.f32 0.0, %v1914
      %v1916 = vpop.f32.mrf.mxu0
      %1917 = vmatprep.mubr.f32.mxu0 0.0
      %1918 = vmatmul.mubr.f32.gmra.mxu0 %v540
      %v1919 = vpop.f32.mrf.mxu0
      %v1920 = vadd.f32 0.0, %v1919
      %v1921 = vpop.f32.mrf.mxu0
      %1922 = vmatprep.mubr.f32.mxu0 0.0
      %1923 = vmatmul.mubr.f32.gmra.mxu0 %v542
      %v1924 = vpop.f32.mrf.mxu0
      %v1925 = vadd.f32 0.0, %v1924
      %v1926 = vpop.f32.mrf.mxu0
      %1927 = vmatprep.mubr.f32.mxu0 0.0
      %1928 = vmatmul.mubr.f32.gmra.mxu0 %v544
      %v1929 = vpop.f32.mrf.mxu0
      %v1930 = vadd.f32 0.0, %v1929
      %v1931 = vpop.f32.mrf.mxu0
      %1932 = vmatprep.mubr.f32.mxu0 0.0
      %1933 = vmatmul.mubr.f32.gmra.mxu0 %v546
      %v1934 = vpop.f32.mrf.mxu0
      %v1935 = vadd.f32 0.0, %v1934
      %v1936 = vpop.f32.mrf.mxu0
      %1937 = vmatprep.mubr.f32.mxu0 0.0
      %1938 = vmatmul.mubr.f32.gmra.mxu0 %v548
      %v1939 = vpop.f32.mrf.mxu0
      %v1940 = vadd.f32 0.0, %v1939
      %v1941 = vpop.f32.mrf.mxu0
      %1942 = vmatprep.mubr.f32.mxu0 0.0
      %1943 = vmatmul.mubr.f32.gmra.mxu0 %v550
      %v1944 = vpop.f32.mrf.mxu0
      %v1945 = vadd.f32 0.0, %v1944
      %v1946 = vpop.f32.mrf.mxu0
      %1947 = vmatprep.mubr.f32.mxu0 0.0
      %1948 = vmatmul.mubr.f32.gmra.mxu0 %v552
      %v1949 = vpop.f32.mrf.mxu0
      %v1950 = vadd.f32 0.0, %v1949
      %v1951 = vpop.f32.mrf.mxu0
      %1952 = vmatprep.mubr.f32.mxu0 0.0
      %1953 = vmatmul.mubr.f32.gmra.mxu0 %v554
      %v1954 = vpop.f32.mrf.mxu0
      %v1955 = vadd.f32 0.0, %v1954
      %v1956 = vpop.f32.mrf.mxu0
      %1957 = vmatprep.mubr.f32.mxu0 0.0
      %1958 = vmatmul.mubr.f32.gmra.mxu0 %v556
      %v1959 = vpop.f32.mrf.mxu0
      %v1960 = vadd.f32 0.0, %v1959
      %v1961 = vpop.f32.mrf.mxu0
      %1962 = vmatprep.mubr.f32.mxu0 0.0
      %1963 = vmatmul.mubr.f32.gmra.mxu0 %v558
      %v1964 = vpop.f32.mrf.mxu0
      %v1965 = vadd.f32 0.0, %v1964
      %v1966 = vpop.f32.mrf.mxu0
      %1967 = vmatprep.mubr.f32.mxu0 0.0
      %1968 = vmatmul.mubr.f32.gmra.mxu0 %v560
      %v1969 = vpop.f32.mrf.mxu0
      %v1970 = vadd.f32 0.0, %v1969
      %v1971 = vpop.f32.mrf.mxu0
      %1972 = vmatprep.mubr.f32.mxu0 0.0
      %1973 = vmatmul.mubr.f32.gmra.mxu0 %v562
      %v1974 = vpop.f32.mrf.mxu0
      %v1975 = vadd.f32 0.0, %v1974
      %v1976 = vpop.f32.mrf.mxu0
      %1977 = vmatprep.mubr.f32.mxu0 0.0
      %1978 = vmatmul.mubr.f32.gmra.mxu0 %v564
      %v1979 = vpop.f32.mrf.mxu0
      %v1980 = vadd.f32 0.0, %v1979
      %v1981 = vpop.f32.mrf.mxu0
      %1982 = vmatprep.mubr.f32.mxu0 0.0
      %1983 = vmatmul.mubr.f32.gmra.mxu0 %v566
      %v1984 = vpop.f32.mrf.mxu0
      %v1985 = vadd.f32 0.0, %v1984
      %v1986 = vpop.f32.mrf.mxu0
      %1987 = vmatprep.mubr.f32.mxu0 0.0
      %1988 = vmatmul.mubr.f32.gmra.mxu0 %v568
      %v1989 = vpop.f32.mrf.mxu0
      %v1990 = vadd.f32 0.0, %v1989
      %v1991 = vpop.f32.mrf.mxu0
      %1992 = vmatprep.mubr.f32.mxu0 0.0
      %1993 = vmatmul.mubr.f32.gmra.mxu0 %v1771
      %v1994 = vpop.f32.mrf.mxu0
      %v1995 = vadd.f32 0.0, %v1994
      %v1996 = vpop.f32.mrf.mxu0
      %1997 = vmatprep.mubr.f32.mxu0 0.0
      %1998 = vmatmul.mubr.f32.gmra.mxu0 %v1773
      %v1999 = vpop.f32.mrf.mxu0
      %v2000 = vadd.f32 0.0, %v1999
      %v2001 = vpop.f32.mrf.mxu0
      %2002 = vdwg.mxu0
      %v2003 = vadd.f32 %v1732, %v1845
      %v2004 = vadd.f32 %v1733, %v1850
      %v2005 = vadd.f32 %v1734, %v1855
      %v2006 = vadd.f32 %v1735, %v1860
      %v2007 = vadd.f32 %v1736, %v1865
      %v2008 = vadd.f32 %v1737, %v1870
      %v2009 = vadd.f32 %v1738, %v1875
      %v2010 = vadd.f32 %v1739, %v1880
      %v2011 = vadd.f32 %v1740, %v1885
      %v2012 = vadd.f32 %v1741, %v1890
      %v2013 = vadd.f32 %v1742, %v1895
      %v2014 = vadd.f32 %v1743, %v1900
      %v2015 = vadd.f32 %v1744, %v1905
      %v2016 = vadd.f32 %v1745, %v1910
      %v2017 = vadd.f32 %v1746, %v1915
      %v2018 = vadd.f32 %v1747, %v1920
      %v2019 = vadd.f32 %v1748, %v1925
      %v2020 = vadd.f32 %v1749, %v1930
      %v2021 = vadd.f32 %v1750, %v1935
      %v2022 = vadd.f32 %v1751, %v1940
      %v2023 = vadd.f32 %v1752, %v1945
      %v2024 = vadd.f32 %v1753, %v1950
      %v2025 = vadd.f32 %v1754, %v1955
      %v2026 = vadd.f32 %v1755, %v1960
      %v2027 = vadd.f32 %v1756, %v1965
      %v2028 = vadd.f32 %v1757, %v1970
      %v2029 = vadd.f32 %v1758, %v1975
      %v2030 = vadd.f32 %v1759, %v1980
      %v2031 = vadd.f32 %v1760, %v1985
      %v2032 = vadd.f32 %v1761, %v1990
      %v2033 = vadd.f32 %v1762, %v1995
      %v2034 = vadd.f32 %v1763, %v2000
      %v2035 = vrot.slane %v368, 2
      %v2036 = vrot.slane %v369, 2
      %v2037 = vsel %vm1091, %v2035, %v2036
      %v2038 = vrot.slane %v370, 2
      %v2039 = vsel %vm1091, %v2036, %v2038
      %v2040 = vld [vmem:[%s2 + $0x14] sm:$0xf]
      %v2041 = vsel %vm505, %v2037, 0
      %v2043 = vsel %vm505, %v2039, 0
      %v2046 = vsel %vm570, %v2040, 0
      %2048 = vmatprep.subr.mxu0 0.0
      %2049 = vmatpush1.msra.mxu0 0.0
      %2050 = vmatprep.subr.mxu0 0.0
      %2051 = vmatpush1.msra.mxu0 0.0
      %2052 = vmatprep.subr.mxu0 0.0
      %2053 = vmatpush1.msra.mxu0 0.0
      %2054 = vmatprep.subr.mxu0 0.0
      %2055 = vmatpush1.msra.mxu0 0.0
      %2056 = vmatprep.subr.mxu0 0.0
      %2057 = vmatpush1.msra.mxu0 0.0
      %2058 = vmatprep.subr.mxu0 0.0
      %2059 = vmatpush1.msra.mxu0 0.0
      %2060 = vmatprep.subr.mxu0 0.0
      %2061 = vmatpush1.msra.mxu0 0.0
      %2062 = vmatprep.subr.mxu0 0.0
      %2063 = vmatpush1.msra.mxu0 0.0
      %2064 = vmatprep.subr.mxu0 0.0
      %2065 = vmatpush1.msra.mxu0 0.0
      %2066 = vmatprep.subr.mxu0 0.0
      %2067 = vmatpush1.msra.mxu0 0.0
      %2068 = vmatprep.subr.mxu0 0.0
      %2069 = vmatpush1.msra.mxu0 0.0
      %2070 = vmatprep.subr.mxu0 0.0
      %2071 = vmatpush1.msra.mxu0 0.0
      %2072 = vmatprep.subr.mxu0 0.0
      %2073 = vmatpush1.msra.mxu0 0.0
      %2074 = vmatprep.subr.mxu0 0.0
      %2075 = vmatpush1.msra.mxu0 0.0
      %2076 = vmatprep.subr.mxu0 0.0
      %2077 = vmatpush1.msra.mxu0 0.0
      %2078 = vmatprep.subr.mxu0 0.0
      %2079 = vmatpush1.msra.mxu0 %v2046
      %2080 = vmatprep.subr.mxu0 0.0
      %2081 = vmatpush2.msra.mxu0 0.0
      %2082 = vmatprep.subr.mxu0 0.0
      %2083 = vmatpush2.msra.mxu0 0.0
      %2084 = vmatprep.subr.mxu0 0.0
      %2085 = vmatpush2.msra.mxu0 0.0
      %2086 = vmatprep.subr.mxu0 0.0
      %2087 = vmatpush2.msra.mxu0 0.0
      %2088 = vmatprep.subr.mxu0 0.0
      %2089 = vmatpush2.msra.mxu0 0.0
      %2090 = vmatprep.subr.mxu0 0.0
      %2091 = vmatpush2.msra.mxu0 0.0
      %2092 = vmatprep.subr.mxu0 0.0
      %2093 = vmatpush2.msra.mxu0 0.0
      %2094 = vmatprep.subr.mxu0 0.0
      %2095 = vmatpush2.msra.mxu0 0.0
      %2096 = vmatprep.subr.mxu0 0.0
      %2097 = vmatpush2.msra.mxu0 0.0
      %2098 = vmatprep.subr.mxu0 0.0
      %2099 = vmatpush2.msra.mxu0 0.0
      %2100 = vmatprep.subr.mxu0 0.0
      %2101 = vmatpush2.msra.mxu0 0.0
      %2102 = vmatprep.subr.mxu0 0.0
      %2103 = vmatpush2.msra.mxu0 0.0
      %2104 = vmatprep.subr.mxu0 0.0
      %2105 = vmatpush2.msra.mxu0 0.0
      %2106 = vmatprep.subr.mxu0 0.0
      %2107 = vmatpush2.msra.mxu0 0.0
      %2108 = vmatprep.subr.mxu0 0.0
      %2109 = vmatpush2.msra.mxu0 0.0
      %2110 = vmatprep.subr.mxu0 0.0
      %2111 = vmatpush2.msra.mxu0 0.0
      %2112 = vmatprep.mubr.f32.mxu0 0.0
      %2113 = vmatmul.mubr.f32.gmra.mxu0 %v1177
      %v2114 = vpop.f32.mrf.mxu0
      %v2115 = vadd.f32 0.0, %v2114
      %v2116 = vpop.f32.mrf.mxu0
      %2117 = vmatprep.mubr.f32.mxu0 0.0
      %2118 = vmatmul.mubr.f32.gmra.mxu0 %v1179
      %v2119 = vpop.f32.mrf.mxu0
      %v2120 = vadd.f32 0.0, %v2119
      %v2121 = vpop.f32.mrf.mxu0
      %2122 = vmatprep.mubr.f32.mxu0 0.0
      %2123 = vmatmul.mubr.f32.gmra.mxu0 %v1181
      %v2124 = vpop.f32.mrf.mxu0
      %v2125 = vadd.f32 0.0, %v2124
      %v2126 = vpop.f32.mrf.mxu0
      %2127 = vmatprep.mubr.f32.mxu0 0.0
      %2128 = vmatmul.mubr.f32.gmra.mxu0 %v1183
      %v2129 = vpop.f32.mrf.mxu0
      %v2130 = vadd.f32 0.0, %v2129
      %v2131 = vpop.f32.mrf.mxu0
      %2132 = vmatprep.mubr.f32.mxu0 0.0
      %2133 = vmatmul.mubr.f32.gmra.mxu0 %v1185
      %v2134 = vpop.f32.mrf.mxu0
      %v2135 = vadd.f32 0.0, %v2134
      %v2136 = vpop.f32.mrf.mxu0
      %2137 = vmatprep.mubr.f32.mxu0 0.0
      %2138 = vmatmul.mubr.f32.gmra.mxu0 %v1187
      %v2139 = vpop.f32.mrf.mxu0
      %v2140 = vadd.f32 0.0, %v2139
      %v2141 = vpop.f32.mrf.mxu0
      %2142 = vmatprep.mubr.f32.mxu0 0.0
      %2143 = vmatmul.mubr.f32.gmra.mxu0 %v1189
      %v2144 = vpop.f32.mrf.mxu0
      %v2145 = vadd.f32 0.0, %v2144
      %v2146 = vpop.f32.mrf.mxu0
      %2147 = vmatprep.mubr.f32.mxu0 0.0
      %2148 = vmatmul.mubr.f32.gmra.mxu0 %v1191
      %v2149 = vpop.f32.mrf.mxu0
      %v2150 = vadd.f32 0.0, %v2149
      %v2151 = vpop.f32.mrf.mxu0
      %2152 = vmatprep.mubr.f32.mxu0 0.0
      %2153 = vmatmul.mubr.f32.gmra.mxu0 %v1193
      %v2154 = vpop.f32.mrf.mxu0
      %v2155 = vadd.f32 0.0, %v2154
      %v2156 = vpop.f32.mrf.mxu0
      %2157 = vmatprep.mubr.f32.mxu0 0.0
      %2158 = vmatmul.mubr.f32.gmra.mxu0 %v1195
      %v2159 = vpop.f32.mrf.mxu0
      %v2160 = vadd.f32 0.0, %v2159
      %v2161 = vpop.f32.mrf.mxu0
      %2162 = vmatprep.mubr.f32.mxu0 0.0
      %2163 = vmatmul.mubr.f32.gmra.mxu0 %v1197
      %v2164 = vpop.f32.mrf.mxu0
      %v2165 = vadd.f32 0.0, %v2164
      %v2166 = vpop.f32.mrf.mxu0
      %2167 = vmatprep.mubr.f32.mxu0 0.0
      %2168 = vmatmul.mubr.f32.gmra.mxu0 %v1199
      %v2169 = vpop.f32.mrf.mxu0
      %v2170 = vadd.f32 0.0, %v2169
      %v2171 = vpop.f32.mrf.mxu0
      %2172 = vmatprep.mubr.f32.mxu0 0.0
      %2173 = vmatmul.mubr.f32.gmra.mxu0 %v1201
      %v2174 = vpop.f32.mrf.mxu0
      %v2175 = vadd.f32 0.0, %v2174
      %v2176 = vpop.f32.mrf.mxu0
      %2177 = vmatprep.mubr.f32.mxu0 0.0
      %2178 = vmatmul.mubr.f32.gmra.mxu0 %v1203
      %v2179 = vpop.f32.mrf.mxu0
      %v2180 = vadd.f32 0.0, %v2179
      %v2181 = vpop.f32.mrf.mxu0
      %2182 = vmatprep.mubr.f32.mxu0 0.0
      %2183 = vmatmul.mubr.f32.gmra.mxu0 %v1205
      %v2184 = vpop.f32.mrf.mxu0
      %v2185 = vadd.f32 0.0, %v2184
      %v2186 = vpop.f32.mrf.mxu0
      %2187 = vmatprep.mubr.f32.mxu0 0.0
      %2188 = vmatmul.mubr.f32.gmra.mxu0 %v1207
      %v2189 = vpop.f32.mrf.mxu0
      %v2190 = vadd.f32 0.0, %v2189
      %v2191 = vpop.f32.mrf.mxu0
      %2192 = vmatprep.mubr.f32.mxu0 0.0
      %2193 = vmatmul.mubr.f32.gmra.mxu0 %v1209
      %v2194 = vpop.f32.mrf.mxu0
      %v2195 = vadd.f32 0.0, %v2194
      %v2196 = vpop.f32.mrf.mxu0
      %2197 = vmatprep.mubr.f32.mxu0 0.0
      %2198 = vmatmul.mubr.f32.gmra.mxu0 %v1211
      %v2199 = vpop.f32.mrf.mxu0
      %v2200 = vadd.f32 0.0, %v2199
      %v2201 = vpop.f32.mrf.mxu0
      %2202 = vmatprep.mubr.f32.mxu0 0.0
      %2203 = vmatmul.mubr.f32.gmra.mxu0 %v1213
      %v2204 = vpop.f32.mrf.mxu0
      %v2205 = vadd.f32 0.0, %v2204
      %v2206 = vpop.f32.mrf.mxu0
      %2207 = vmatprep.mubr.f32.mxu0 0.0
      %2208 = vmatmul.mubr.f32.gmra.mxu0 %v1215
      %v2209 = vpop.f32.mrf.mxu0
      %v2210 = vadd.f32 0.0, %v2209
      %v2211 = vpop.f32.mrf.mxu0
      %2212 = vmatprep.mubr.f32.mxu0 0.0
      %2213 = vmatmul.mubr.f32.gmra.mxu0 %v1217
      %v2214 = vpop.f32.mrf.mxu0
      %v2215 = vadd.f32 0.0, %v2214
      %v2216 = vpop.f32.mrf.mxu0
      %2217 = vmatprep.mubr.f32.mxu0 0.0
      %2218 = vmatmul.mubr.f32.gmra.mxu0 %v1219
      %v2219 = vpop.f32.mrf.mxu0
      %v2220 = vadd.f32 0.0, %v2219
      %v2221 = vpop.f32.mrf.mxu0
      %2222 = vmatprep.mubr.f32.mxu0 0.0
      %2223 = vmatmul.mubr.f32.gmra.mxu0 %v1221
      %v2224 = vpop.f32.mrf.mxu0
      %v2225 = vadd.f32 0.0, %v2224
      %v2226 = vpop.f32.mrf.mxu0
      %2227 = vmatprep.mubr.f32.mxu0 0.0
      %2228 = vmatmul.mubr.f32.gmra.mxu0 %v1223
      %v2229 = vpop.f32.mrf.mxu0
      %v2230 = vadd.f32 0.0, %v2229
      %v2231 = vpop.f32.mrf.mxu0
      %2232 = vmatprep.mubr.f32.mxu0 0.0
      %2233 = vmatmul.mubr.f32.gmra.mxu0 %v1225
      %v2234 = vpop.f32.mrf.mxu0
      %v2235 = vadd.f32 0.0, %v2234
      %v2236 = vpop.f32.mrf.mxu0
      %2237 = vmatprep.mubr.f32.mxu0 0.0
      %2238 = vmatmul.mubr.f32.gmra.mxu0 %v1227
      %v2239 = vpop.f32.mrf.mxu0
      %v2240 = vadd.f32 0.0, %v2239
      %v2241 = vpop.f32.mrf.mxu0
      %2242 = vmatprep.mubr.f32.mxu0 0.0
      %2243 = vmatmul.mubr.f32.gmra.mxu0 %v1229
      %v2244 = vpop.f32.mrf.mxu0
      %v2245 = vadd.f32 0.0, %v2244
      %v2246 = vpop.f32.mrf.mxu0
      %2247 = vmatprep.mubr.f32.mxu0 0.0
      %2248 = vmatmul.mubr.f32.gmra.mxu0 %v1231
      %v2249 = vpop.f32.mrf.mxu0
      %v2250 = vadd.f32 0.0, %v2249
      %v2251 = vpop.f32.mrf.mxu0
      %2252 = vmatprep.mubr.f32.mxu0 0.0
      %2253 = vmatmul.mubr.f32.gmra.mxu0 %v1233
      %v2254 = vpop.f32.mrf.mxu0
      %v2255 = vadd.f32 0.0, %v2254
      %v2256 = vpop.f32.mrf.mxu0
      %2257 = vmatprep.mubr.f32.mxu0 0.0
      %2258 = vmatmul.mubr.f32.gmra.mxu0 %v1235
      %v2259 = vpop.f32.mrf.mxu0
      %v2260 = vadd.f32 0.0, %v2259
      %v2261 = vpop.f32.mrf.mxu0
      %2262 = vmatprep.mubr.f32.mxu0 0.0
      %2263 = vmatmul.mubr.f32.gmra.mxu0 %v2041
      %v2264 = vpop.f32.mrf.mxu0
      %v2265 = vadd.f32 0.0, %v2264
      %v2266 = vpop.f32.mrf.mxu0
      %2267 = vmatprep.mubr.f32.mxu0 0.0
      %2268 = vmatmul.mubr.f32.gmra.mxu0 %v2043
      %v2269 = vpop.f32.mrf.mxu0
      %v2270 = vadd.f32 0.0, %v2269
      %v2271 = vpop.f32.mrf.mxu0
      %2272 = vdwg.mxu0
      %v2273 = vadd.f32 %v2003, %v2115
      %v2274 = vadd.f32 %v2004, %v2120
      %v2275 = vadd.f32 %v2005, %v2125
      %v2276 = vadd.f32 %v2006, %v2130
      %v2277 = vadd.f32 %v2007, %v2135
      %v2278 = vadd.f32 %v2008, %v2140
      %v2279 = vadd.f32 %v2009, %v2145
      %v2280 = vadd.f32 %v2010, %v2150
      %v2281 = vadd.f32 %v2011, %v2155
      %v2282 = vadd.f32 %v2012, %v2160
      %v2283 = vadd.f32 %v2013, %v2165
      %v2284 = vadd.f32 %v2014, %v2170
      %v2285 = vadd.f32 %v2015, %v2175
      %v2286 = vadd.f32 %v2016, %v2180
      %v2287 = vadd.f32 %v2017, %v2185
      %v2288 = vadd.f32 %v2018, %v2190
      %v2289 = vadd.f32 %v2019, %v2195
      %v2290 = vadd.f32 %v2020, %v2200
      %v2291 = vadd.f32 %v2021, %v2205
      %v2292 = vadd.f32 %v2022, %v2210
      %v2293 = vadd.f32 %v2023, %v2215
      %v2294 = vadd.f32 %v2024, %v2220
      %v2295 = vadd.f32 %v2025, %v2225
      %v2296 = vadd.f32 %v2026, %v2230
      %v2297 = vadd.f32 %v2027, %v2235
      %v2298 = vadd.f32 %v2028, %v2240
      %v2299 = vadd.f32 %v2029, %v2245
      %v2300 = vadd.f32 %v2030, %v2250
      %v2301 = vadd.f32 %v2031, %v2255
      %v2302 = vadd.f32 %v2032, %v2260
      %v2303 = vadd.f32 %v2033, %v2265
      %v2304 = vadd.f32 %v2034, %v2270
      %v2305 = vld [vmem:[%s2 + $0x18] sm:$0xf]
      %v2307 = vsel %vm505, %v371, 0
      %v2310 = vsel %vm505, %v372, 0
      %v2313 = vsel %vm570, %v2305, 0
      %2315 = vmatprep.subr.mxu0 0.0
      %2316 = vmatpush1.msra.mxu0 0.0
      %2317 = vmatprep.subr.mxu0 0.0
      %2318 = vmatpush1.msra.mxu0 0.0
      %2319 = vmatprep.subr.mxu0 0.0
      %2320 = vmatpush1.msra.mxu0 0.0
      %2321 = vmatprep.subr.mxu0 0.0
      %2322 = vmatpush1.msra.mxu0 0.0
      %2323 = vmatprep.subr.mxu0 0.0
      %2324 = vmatpush1.msra.mxu0 0.0
      %2325 = vmatprep.subr.mxu0 0.0
      %2326 = vmatpush1.msra.mxu0 0.0
      %2327 = vmatprep.subr.mxu0 0.0
      %2328 = vmatpush1.msra.mxu0 0.0
      %2329 = vmatprep.subr.mxu0 0.0
      %2330 = vmatpush1.msra.mxu0 0.0
      %2331 = vmatprep.subr.mxu0 0.0
      %2332 = vmatpush1.msra.mxu0 0.0
      %2333 = vmatprep.subr.mxu0 0.0
      %2334 = vmatpush1.msra.mxu0 0.0
      %2335 = vmatprep.subr.mxu0 0.0
      %2336 = vmatpush1.msra.mxu0 0.0
      %2337 = vmatprep.subr.mxu0 0.0
      %2338 = vmatpush1.msra.mxu0 0.0
      %2339 = vmatprep.subr.mxu0 0.0
      %2340 = vmatpush1.msra.mxu0 0.0
      %2341 = vmatprep.subr.mxu0 0.0
      %2342 = vmatpush1.msra.mxu0 0.0
      %2343 = vmatprep.subr.mxu0 0.0
      %2344 = vmatpush1.msra.mxu0 0.0
      %2345 = vmatprep.subr.mxu0 0.0
      %2346 = vmatpush1.msra.mxu0 %v2313
      %2347 = vmatprep.subr.mxu0 0.0
      %2348 = vmatpush2.msra.mxu0 0.0
      %2349 = vmatprep.subr.mxu0 0.0
      %2350 = vmatpush2.msra.mxu0 0.0
      %2351 = vmatprep.subr.mxu0 0.0
      %2352 = vmatpush2.msra.mxu0 0.0
      %2353 = vmatprep.subr.mxu0 0.0
      %2354 = vmatpush2.msra.mxu0 0.0
      %2355 = vmatprep.subr.mxu0 0.0
      %2356 = vmatpush2.msra.mxu0 0.0
      %2357 = vmatprep.subr.mxu0 0.0
      %2358 = vmatpush2.msra.mxu0 0.0
      %2359 = vmatprep.subr.mxu0 0.0
      %2360 = vmatpush2.msra.mxu0 0.0
      %2361 = vmatprep.subr.mxu0 0.0
      %2362 = vmatpush2.msra.mxu0 0.0
      %2363 = vmatprep.subr.mxu0 0.0
      %2364 = vmatpush2.msra.mxu0 0.0
      %2365 = vmatprep.subr.mxu0 0.0
      %2366 = vmatpush2.msra.mxu0 0.0
      %2367 = vmatprep.subr.mxu0 0.0
      %2368 = vmatpush2.msra.mxu0 0.0
      %2369 = vmatprep.subr.mxu0 0.0
      %2370 = vmatpush2.msra.mxu0 0.0
      %2371 = vmatprep.subr.mxu0 0.0
      %2372 = vmatpush2.msra.mxu0 0.0
      %2373 = vmatprep.subr.mxu0 0.0
      %2374 = vmatpush2.msra.mxu0 0.0
      %2375 = vmatprep.subr.mxu0 0.0
      %2376 = vmatpush2.msra.mxu0 0.0
      %2377 = vmatprep.subr.mxu0 0.0
      %2378 = vmatpush2.msra.mxu0 0.0
      %2379 = vmatprep.mubr.f32.mxu0 0.0
      %2380 = vmatmul.mubr.f32.gmra.mxu0 %v807
      %v2381 = vpop.f32.mrf.mxu0
      %v2382 = vadd.f32 0.0, %v2381
      %v2383 = vpop.f32.mrf.mxu0
      %2384 = vmatprep.mubr.f32.mxu0 0.0
      %2385 = vmatmul.mubr.f32.gmra.mxu0 %v809
      %v2386 = vpop.f32.mrf.mxu0
      %v2387 = vadd.f32 0.0, %v2386
      %v2388 = vpop.f32.mrf.mxu0
      %2389 = vmatprep.mubr.f32.mxu0 0.0
      %2390 = vmatmul.mubr.f32.gmra.mxu0 %v811
      %v2391 = vpop.f32.mrf.mxu0
      %v2392 = vadd.f32 0.0, %v2391
      %v2393 = vpop.f32.mrf.mxu0
      %2394 = vmatprep.mubr.f32.mxu0 0.0
      %2395 = vmatmul.mubr.f32.gmra.mxu0 %v813
      %v2396 = vpop.f32.mrf.mxu0
      %v2397 = vadd.f32 0.0, %v2396
      %v2398 = vpop.f32.mrf.mxu0
      %2399 = vmatprep.mubr.f32.mxu0 0.0
      %2400 = vmatmul.mubr.f32.gmra.mxu0 %v815
      %v2401 = vpop.f32.mrf.mxu0
      %v2402 = vadd.f32 0.0, %v2401
      %v2403 = vpop.f32.mrf.mxu0
      %2404 = vmatprep.mubr.f32.mxu0 0.0
      %2405 = vmatmul.mubr.f32.gmra.mxu0 %v817
      %v2406 = vpop.f32.mrf.mxu0
      %v2407 = vadd.f32 0.0, %v2406
      %v2408 = vpop.f32.mrf.mxu0
      %2409 = vmatprep.mubr.f32.mxu0 0.0
      %2410 = vmatmul.mubr.f32.gmra.mxu0 %v819
      %v2411 = vpop.f32.mrf.mxu0
      %v2412 = vadd.f32 0.0, %v2411
      %v2413 = vpop.f32.mrf.mxu0
      %2414 = vmatprep.mubr.f32.mxu0 0.0
      %2415 = vmatmul.mubr.f32.gmra.mxu0 %v821
      %v2416 = vpop.f32.mrf.mxu0
      %v2417 = vadd.f32 0.0, %v2416
      %v2418 = vpop.f32.mrf.mxu0
      %2419 = vmatprep.mubr.f32.mxu0 0.0
      %2420 = vmatmul.mubr.f32.gmra.mxu0 %v823
      %v2421 = vpop.f32.mrf.mxu0
      %v2422 = vadd.f32 0.0, %v2421
      %v2423 = vpop.f32.mrf.mxu0
      %2424 = vmatprep.mubr.f32.mxu0 0.0
      %2425 = vmatmul.mubr.f32.gmra.mxu0 %v825
      %v2426 = vpop.f32.mrf.mxu0
      %v2427 = vadd.f32 0.0, %v2426
      %v2428 = vpop.f32.mrf.mxu0
      %2429 = vmatprep.mubr.f32.mxu0 0.0
      %2430 = vmatmul.mubr.f32.gmra.mxu0 %v827
      %v2431 = vpop.f32.mrf.mxu0
      %v2432 = vadd.f32 0.0, %v2431
      %v2433 = vpop.f32.mrf.mxu0
      %2434 = vmatprep.mubr.f32.mxu0 0.0
      %2435 = vmatmul.mubr.f32.gmra.mxu0 %v829
      %v2436 = vpop.f32.mrf.mxu0
      %v2437 = vadd.f32 0.0, %v2436
      %v2438 = vpop.f32.mrf.mxu0
      %2439 = vmatprep.mubr.f32.mxu0 0.0
      %2440 = vmatmul.mubr.f32.gmra.mxu0 %v831
      %v2441 = vpop.f32.mrf.mxu0
      %v2442 = vadd.f32 0.0, %v2441
      %v2443 = vpop.f32.mrf.mxu0
      %2444 = vmatprep.mubr.f32.mxu0 0.0
      %2445 = vmatmul.mubr.f32.gmra.mxu0 %v833
      %v2446 = vpop.f32.mrf.mxu0
      %v2447 = vadd.f32 0.0, %v2446
      %v2448 = vpop.f32.mrf.mxu0
      %2449 = vmatprep.mubr.f32.mxu0 0.0
      %2450 = vmatmul.mubr.f32.gmra.mxu0 %v835
      %v2451 = vpop.f32.mrf.mxu0
      %v2452 = vadd.f32 0.0, %v2451
      %v2453 = vpop.f32.mrf.mxu0
      %2454 = vmatprep.mubr.f32.mxu0 0.0
      %2455 = vmatmul.mubr.f32.gmra.mxu0 %v837
      %v2456 = vpop.f32.mrf.mxu0
      %v2457 = vadd.f32 0.0, %v2456
      %v2458 = vpop.f32.mrf.mxu0
      %2459 = vmatprep.mubr.f32.mxu0 0.0
      %2460 = vmatmul.mubr.f32.gmra.mxu0 %v839
      %v2461 = vpop.f32.mrf.mxu0
      %v2462 = vadd.f32 0.0, %v2461
      %v2463 = vpop.f32.mrf.mxu0
      %2464 = vmatprep.mubr.f32.mxu0 0.0
      %2465 = vmatmul.mubr.f32.gmra.mxu0 %v841
      %v2466 = vpop.f32.mrf.mxu0
      %v2467 = vadd.f32 0.0, %v2466
      %v2468 = vpop.f32.mrf.mxu0
      %2469 = vmatprep.mubr.f32.mxu0 0.0
      %2470 = vmatmul.mubr.f32.gmra.mxu0 %v843
      %v2471 = vpop.f32.mrf.mxu0
      %v2472 = vadd.f32 0.0, %v2471
      %v2473 = vpop.f32.mrf.mxu0
      %2474 = vmatprep.mubr.f32.mxu0 0.0
      %2475 = vmatmul.mubr.f32.gmra.mxu0 %v845
      %v2476 = vpop.f32.mrf.mxu0
      %v2477 = vadd.f32 0.0, %v2476
      %v2478 = vpop.f32.mrf.mxu0
      %2479 = vmatprep.mubr.f32.mxu0 0.0
      %2480 = vmatmul.mubr.f32.gmra.mxu0 %v847
      %v2481 = vpop.f32.mrf.mxu0
      %v2482 = vadd.f32 0.0, %v2481
      %v2483 = vpop.f32.mrf.mxu0
      %2484 = vmatprep.mubr.f32.mxu0 0.0
      %2485 = vmatmul.mubr.f32.gmra.mxu0 %v849
      %v2486 = vpop.f32.mrf.mxu0
      %v2487 = vadd.f32 0.0, %v2486
      %v2488 = vpop.f32.mrf.mxu0
      %2489 = vmatprep.mubr.f32.mxu0 0.0
      %2490 = vmatmul.mubr.f32.gmra.mxu0 %v851
      %v2491 = vpop.f32.mrf.mxu0
      %v2492 = vadd.f32 0.0, %v2491
      %v2493 = vpop.f32.mrf.mxu0
      %2494 = vmatprep.mubr.f32.mxu0 0.0
      %2495 = vmatmul.mubr.f32.gmra.mxu0 %v853
      %v2496 = vpop.f32.mrf.mxu0
      %v2497 = vadd.f32 0.0, %v2496
      %v2498 = vpop.f32.mrf.mxu0
      %2499 = vmatprep.mubr.f32.mxu0 0.0
      %2500 = vmatmul.mubr.f32.gmra.mxu0 %v855
      %v2501 = vpop.f32.mrf.mxu0
      %v2502 = vadd.f32 0.0, %v2501
      %v2503 = vpop.f32.mrf.mxu0
      %2504 = vmatprep.mubr.f32.mxu0 0.0
      %2505 = vmatmul.mubr.f32.gmra.mxu0 %v857
      %v2506 = vpop.f32.mrf.mxu0
      %v2507 = vadd.f32 0.0, %v2506
      %v2508 = vpop.f32.mrf.mxu0
      %2509 = vmatprep.mubr.f32.mxu0 0.0
      %2510 = vmatmul.mubr.f32.gmra.mxu0 %v859
      %v2511 = vpop.f32.mrf.mxu0
      %v2512 = vadd.f32 0.0, %v2511
      %v2513 = vpop.f32.mrf.mxu0
      %2514 = vmatprep.mubr.f32.mxu0 0.0
      %2515 = vmatmul.mubr.f32.gmra.mxu0 %v861
      %v2516 = vpop.f32.mrf.mxu0
      %v2517 = vadd.f32 0.0, %v2516
      %v2518 = vpop.f32.mrf.mxu0
      %2519 = vmatprep.mubr.f32.mxu0 0.0
      %2520 = vmatmul.mubr.f32.gmra.mxu0 %v1499
      %v2521 = vpop.f32.mrf.mxu0
      %v2522 = vadd.f32 0.0, %v2521
      %v2523 = vpop.f32.mrf.mxu0
      %2524 = vmatprep.mubr.f32.mxu0 0.0
      %2525 = vmatmul.mubr.f32.gmra.mxu0 %v1502
      %v2526 = vpop.f32.mrf.mxu0
      %v2527 = vadd.f32 0.0, %v2526
      %v2528 = vpop.f32.mrf.mxu0
      %2529 = vmatprep.mubr.f32.mxu0 0.0
      %2530 = vmatmul.mubr.f32.gmra.mxu0 %v2307
      %v2531 = vpop.f32.mrf.mxu0
      %v2532 = vadd.f32 0.0, %v2531
      %v2533 = vpop.f32.mrf.mxu0
      %2534 = vmatprep.mubr.f32.mxu0 0.0
      %2535 = vmatmul.mubr.f32.gmra.mxu0 %v2310
      %v2536 = vpop.f32.mrf.mxu0
      %v2537 = vadd.f32 0.0, %v2536
      %v2538 = vpop.f32.mrf.mxu0
      %2539 = vdwg.mxu0
      %v2540 = vadd.f32 %v2273, %v2382
      %v2541 = vadd.f32 %v2274, %v2387
      %v2542 = vadd.f32 %v2275, %v2392
      %v2543 = vadd.f32 %v2276, %v2397
      %v2544 = vadd.f32 %v2277, %v2402
      %v2545 = vadd.f32 %v2278, %v2407
      %v2546 = vadd.f32 %v2279, %v2412
      %v2547 = vadd.f32 %v2280, %v2417
      %v2548 = vadd.f32 %v2281, %v2422
      %v2549 = vadd.f32 %v2282, %v2427
      %v2550 = vadd.f32 %v2283, %v2432
      %v2551 = vadd.f32 %v2284, %v2437
      %v2552 = vadd.f32 %v2285, %v2442
      %v2553 = vadd.f32 %v2286, %v2447
      %v2554 = vadd.f32 %v2287, %v2452
      %v2555 = vadd.f32 %v2288, %v2457
      %v2556 = vadd.f32 %v2289, %v2462
      %v2557 = vadd.f32 %v2290, %v2467
      %v2558 = vadd.f32 %v2291, %v2472
      %v2559 = vadd.f32 %v2292, %v2477
      %v2560 = vadd.f32 %v2293, %v2482
      %v2561 = vadd.f32 %v2294, %v2487
      %v2562 = vadd.f32 %v2295, %v2492
      %v2563 = vadd.f32 %v2296, %v2497
      %v2564 = vadd.f32 %v2297, %v2502
      %v2565 = vadd.f32 %v2298, %v2507
      %v2566 = vadd.f32 %v2299, %v2512
      %v2567 = vadd.f32 %v2300, %v2517
      %v2568 = vadd.f32 %v2301, %v2522
      %v2569 = vadd.f32 %v2302, %v2527
      %v2570 = vadd.f32 %v2303, %v2532
      %v2571 = vadd.f32 %v2304, %v2537
      %v2573 = vrot.slane %v371, 1
      %v2574 = vrot.slane %v372, 1
      %v2575 = vsel %vm423, %v2573, %v2574
      %v2576 = vrot.slane %v373, 1
      %v2577 = vsel %vm423, %v2574, %v2576
      %v2578 = vld [vmem:[%s2 + $0x1c] sm:$0xf]
      %v2579 = vsel %vm505, %v2575, 0
      %v2581 = vsel %vm505, %v2577, 0
      %v2584 = vsel %vm570, %v2578, 0
      %2586 = vmatprep.subr.mxu0 0.0
      %2587 = vmatpush1.msra.mxu0 0.0
      %2588 = vmatprep.subr.mxu0 0.0
      %2589 = vmatpush1.msra.mxu0 0.0
      %2590 = vmatprep.subr.mxu0 0.0
      %2591 = vmatpush1.msra.mxu0 0.0
      %2592 = vmatprep.subr.mxu0 0.0
      %2593 = vmatpush1.msra.mxu0 0.0
      %2594 = vmatprep.subr.mxu0 0.0
      %2595 = vmatpush1.msra.mxu0 0.0
      %2596 = vmatprep.subr.mxu0 0.0
      %2597 = vmatpush1.msra.mxu0 0.0
      %2598 = vmatprep.subr.mxu0 0.0
      %2599 = vmatpush1.msra.mxu0 0.0
      %2600 = vmatprep.subr.mxu0 0.0
      %2601 = vmatpush1.msra.mxu0 0.0
      %2602 = vmatprep.subr.mxu0 0.0
      %2603 = vmatpush1.msra.mxu0 0.0
      %2604 = vmatprep.subr.mxu0 0.0
      %2605 = vmatpush1.msra.mxu0 0.0
      %2606 = vmatprep.subr.mxu0 0.0
      %2607 = vmatpush1.msra.mxu0 0.0
      %2608 = vmatprep.subr.mxu0 0.0
      %2609 = vmatpush1.msra.mxu0 0.0
      %2610 = vmatprep.subr.mxu0 0.0
      %2611 = vmatpush1.msra.mxu0 0.0
      %2612 = vmatprep.subr.mxu0 0.0
      %2613 = vmatpush1.msra.mxu0 0.0
      %2614 = vmatprep.subr.mxu0 0.0
      %2615 = vmatpush1.msra.mxu0 0.0
      %2616 = vmatprep.subr.mxu0 0.0
      %2617 = vmatpush1.msra.mxu0 %v2584
      %2618 = vmatprep.subr.mxu0 0.0
      %2619 = vmatpush2.msra.mxu0 0.0
      %2620 = vmatprep.subr.mxu0 0.0
      %2621 = vmatpush2.msra.mxu0 0.0
      %2622 = vmatprep.subr.mxu0 0.0
      %2623 = vmatpush2.msra.mxu0 0.0
      %2624 = vmatprep.subr.mxu0 0.0
      %2625 = vmatpush2.msra.mxu0 0.0
      %2626 = vmatprep.subr.mxu0 0.0
      %2627 = vmatpush2.msra.mxu0 0.0
      %2628 = vmatprep.subr.mxu0 0.0
      %2629 = vmatpush2.msra.mxu0 0.0
      %2630 = vmatprep.subr.mxu0 0.0
      %2631 = vmatpush2.msra.mxu0 0.0
      %2632 = vmatprep.subr.mxu0 0.0
      %2633 = vmatpush2.msra.mxu0 0.0
      %2634 = vmatprep.subr.mxu0 0.0
      %2635 = vmatpush2.msra.mxu0 0.0
      %2636 = vmatprep.subr.mxu0 0.0
      %2637 = vmatpush2.msra.mxu0 0.0
      %2638 = vmatprep.subr.mxu0 0.0
      %2639 = vmatpush2.msra.mxu0 0.0
      %2640 = vmatprep.subr.mxu0 0.0
      %2641 = vmatpush2.msra.mxu0 0.0
      %2642 = vmatprep.subr.mxu0 0.0
      %2643 = vmatpush2.msra.mxu0 0.0
      %2644 = vmatprep.subr.mxu0 0.0
      %2645 = vmatpush2.msra.mxu0 0.0
      %2646 = vmatprep.subr.mxu0 0.0
      %2647 = vmatpush2.msra.mxu0 0.0
      %2648 = vmatprep.subr.mxu0 0.0
      %2649 = vmatpush2.msra.mxu0 0.0
      %2650 = vmatprep.mubr.f32.mxu0 0.0
      %2651 = vmatmul.mubr.f32.gmra.mxu0 %v514
      %v2652 = vpop.f32.mrf.mxu0
      %v2653 = vadd.f32 0.0, %v2652
      %v2654 = vpop.f32.mrf.mxu0
      %2655 = vmatprep.mubr.f32.mxu0 0.0
      %2656 = vmatmul.mubr.f32.gmra.mxu0 %v516
      %v2657 = vpop.f32.mrf.mxu0
      %v2658 = vadd.f32 0.0, %v2657
      %v2659 = vpop.f32.mrf.mxu0
      %2660 = vmatprep.mubr.f32.mxu0 0.0
      %2661 = vmatmul.mubr.f32.gmra.mxu0 %v518
      %v2662 = vpop.f32.mrf.mxu0
      %v2663 = vadd.f32 0.0, %v2662
      %v2664 = vpop.f32.mrf.mxu0
      %2665 = vmatprep.mubr.f32.mxu0 0.0
      %2666 = vmatmul.mubr.f32.gmra.mxu0 %v520
      %v2667 = vpop.f32.mrf.mxu0
      %v2668 = vadd.f32 0.0, %v2667
      %v2669 = vpop.f32.mrf.mxu0
      %2670 = vmatprep.mubr.f32.mxu0 0.0
      %2671 = vmatmul.mubr.f32.gmra.mxu0 %v522
      %v2672 = vpop.f32.mrf.mxu0
      %v2673 = vadd.f32 0.0, %v2672
      %v2674 = vpop.f32.mrf.mxu0
      %2675 = vmatprep.mubr.f32.mxu0 0.0
      %2676 = vmatmul.mubr.f32.gmra.mxu0 %v524
      %v2677 = vpop.f32.mrf.mxu0
      %v2678 = vadd.f32 0.0, %v2677
      %v2679 = vpop.f32.mrf.mxu0
      %2680 = vmatprep.mubr.f32.mxu0 0.0
      %2681 = vmatmul.mubr.f32.gmra.mxu0 %v526
      %v2682 = vpop.f32.mrf.mxu0
      %v2683 = vadd.f32 0.0, %v2682
      %v2684 = vpop.f32.mrf.mxu0
      %2685 = vmatprep.mubr.f32.mxu0 0.0
      %2686 = vmatmul.mubr.f32.gmra.mxu0 %v528
      %v2687 = vpop.f32.mrf.mxu0
      %v2688 = vadd.f32 0.0, %v2687
      %v2689 = vpop.f32.mrf.mxu0
      %2690 = vmatprep.mubr.f32.mxu0 0.0
      %2691 = vmatmul.mubr.f32.gmra.mxu0 %v530
      %v2692 = vpop.f32.mrf.mxu0
      %v2693 = vadd.f32 0.0, %v2692
      %v2694 = vpop.f32.mrf.mxu0
      %2695 = vmatprep.mubr.f32.mxu0 0.0
      %2696 = vmatmul.mubr.f32.gmra.mxu0 %v532
      %v2697 = vpop.f32.mrf.mxu0
      %v2698 = vadd.f32 0.0, %v2697
      %v2699 = vpop.f32.mrf.mxu0
      %2700 = vmatprep.mubr.f32.mxu0 0.0
      %2701 = vmatmul.mubr.f32.gmra.mxu0 %v534
      %v2702 = vpop.f32.mrf.mxu0
      %v2703 = vadd.f32 0.0, %v2702
      %v2704 = vpop.f32.mrf.mxu0
      %2705 = vmatprep.mubr.f32.mxu0 0.0
      %2706 = vmatmul.mubr.f32.gmra.mxu0 %v536
      %v2707 = vpop.f32.mrf.mxu0
      %v2708 = vadd.f32 0.0, %v2707
      %v2709 = vpop.f32.mrf.mxu0
      %2710 = vmatprep.mubr.f32.mxu0 0.0
      %2711 = vmatmul.mubr.f32.gmra.mxu0 %v538
      %v2712 = vpop.f32.mrf.mxu0
      %v2713 = vadd.f32 0.0, %v2712
      %v2714 = vpop.f32.mrf.mxu0
      %2715 = vmatprep.mubr.f32.mxu0 0.0
      %2716 = vmatmul.mubr.f32.gmra.mxu0 %v540
      %v2717 = vpop.f32.mrf.mxu0
      %v2718 = vadd.f32 0.0, %v2717
      %v2719 = vpop.f32.mrf.mxu0
      %2720 = vmatprep.mubr.f32.mxu0 0.0
      %2721 = vmatmul.mubr.f32.gmra.mxu0 %v542
      %v2722 = vpop.f32.mrf.mxu0
      %v2723 = vadd.f32 0.0, %v2722
      %v2724 = vpop.f32.mrf.mxu0
      %2725 = vmatprep.mubr.f32.mxu0 0.0
      %2726 = vmatmul.mubr.f32.gmra.mxu0 %v544
      %v2727 = vpop.f32.mrf.mxu0
      %v2728 = vadd.f32 0.0, %v2727
      %v2729 = vpop.f32.mrf.mxu0
      %2730 = vmatprep.mubr.f32.mxu0 0.0
      %2731 = vmatmul.mubr.f32.gmra.mxu0 %v546
      %v2732 = vpop.f32.mrf.mxu0
      %v2733 = vadd.f32 0.0, %v2732
      %v2734 = vpop.f32.mrf.mxu0
      %2735 = vmatprep.mubr.f32.mxu0 0.0
      %2736 = vmatmul.mubr.f32.gmra.mxu0 %v548
      %v2737 = vpop.f32.mrf.mxu0
      %v2738 = vadd.f32 0.0, %v2737
      %v2739 = vpop.f32.mrf.mxu0
      %2740 = vmatprep.mubr.f32.mxu0 0.0
      %2741 = vmatmul.mubr.f32.gmra.mxu0 %v550
      %v2742 = vpop.f32.mrf.mxu0
      %v2743 = vadd.f32 0.0, %v2742
      %v2744 = vpop.f32.mrf.mxu0
      %2745 = vmatprep.mubr.f32.mxu0 0.0
      %2746 = vmatmul.mubr.f32.gmra.mxu0 %v552
      %v2747 = vpop.f32.mrf.mxu0
      %v2748 = vadd.f32 0.0, %v2747
      %v2749 = vpop.f32.mrf.mxu0
      %2750 = vmatprep.mubr.f32.mxu0 0.0
      %2751 = vmatmul.mubr.f32.gmra.mxu0 %v554
      %v2752 = vpop.f32.mrf.mxu0
      %v2753 = vadd.f32 0.0, %v2752
      %v2754 = vpop.f32.mrf.mxu0
      %2755 = vmatprep.mubr.f32.mxu0 0.0
      %2756 = vmatmul.mubr.f32.gmra.mxu0 %v556
      %v2757 = vpop.f32.mrf.mxu0
      %v2758 = vadd.f32 0.0, %v2757
      %v2759 = vpop.f32.mrf.mxu0
      %2760 = vmatprep.mubr.f32.mxu0 0.0
      %2761 = vmatmul.mubr.f32.gmra.mxu0 %v558
      %v2762 = vpop.f32.mrf.mxu0
      %v2763 = vadd.f32 0.0, %v2762
      %v2764 = vpop.f32.mrf.mxu0
      %2765 = vmatprep.mubr.f32.mxu0 0.0
      %2766 = vmatmul.mubr.f32.gmra.mxu0 %v560
      %v2767 = vpop.f32.mrf.mxu0
      %v2768 = vadd.f32 0.0, %v2767
      %v2769 = vpop.f32.mrf.mxu0
      %2770 = vmatprep.mubr.f32.mxu0 0.0
      %2771 = vmatmul.mubr.f32.gmra.mxu0 %v562
      %v2772 = vpop.f32.mrf.mxu0
      %v2773 = vadd.f32 0.0, %v2772
      %v2774 = vpop.f32.mrf.mxu0
      %2775 = vmatprep.mubr.f32.mxu0 0.0
      %2776 = vmatmul.mubr.f32.gmra.mxu0 %v564
      %v2777 = vpop.f32.mrf.mxu0
      %v2778 = vadd.f32 0.0, %v2777
      %v2779 = vpop.f32.mrf.mxu0
      %2780 = vmatprep.mubr.f32.mxu0 0.0
      %2781 = vmatmul.mubr.f32.gmra.mxu0 %v566
      %v2782 = vpop.f32.mrf.mxu0
      %v2783 = vadd.f32 0.0, %v2782
      %v2784 = vpop.f32.mrf.mxu0
      %2785 = vmatprep.mubr.f32.mxu0 0.0
      %2786 = vmatmul.mubr.f32.gmra.mxu0 %v568
      %v2787 = vpop.f32.mrf.mxu0
      %v2788 = vadd.f32 0.0, %v2787
      %v2789 = vpop.f32.mrf.mxu0
      %2790 = vmatprep.mubr.f32.mxu0 0.0
      %2791 = vmatmul.mubr.f32.gmra.mxu0 %v1771
      %v2792 = vpop.f32.mrf.mxu0
      %v2793 = vadd.f32 0.0, %v2792
      %v2794 = vpop.f32.mrf.mxu0
      %2795 = vmatprep.mubr.f32.mxu0 0.0
      %2796 = vmatmul.mubr.f32.gmra.mxu0 %v1773
      %v2797 = vpop.f32.mrf.mxu0
      %v2798 = vadd.f32 0.0, %v2797
      %v2799 = vpop.f32.mrf.mxu0
      %2800 = vmatprep.mubr.f32.mxu0 0.0
      %2801 = vmatmul.mubr.f32.gmra.mxu0 %v2579
      %v2802 = vpop.f32.mrf.mxu0
      %v2803 = vadd.f32 0.0, %v2802
      %v2804 = vpop.f32.mrf.mxu0
      %2805 = vmatprep.mubr.f32.mxu0 0.0
      %2806 = vmatmul.mubr.f32.gmra.mxu0 %v2581
      %v2807 = vpop.f32.mrf.mxu0
      %v2808 = vadd.f32 0.0, %v2807
      %v2809 = vpop.f32.mrf.mxu0
      %2810 = vdwg.mxu0
      %v2811 = vadd.f32 %v2540, %v2653
      %v2812 = vadd.f32 %v2541, %v2658
      %v2813 = vadd.f32 %v2542, %v2663
      %v2814 = vadd.f32 %v2543, %v2668
      %v2815 = vadd.f32 %v2544, %v2673
      %v2816 = vadd.f32 %v2545, %v2678
      %v2817 = vadd.f32 %v2546, %v2683
      %v2818 = vadd.f32 %v2547, %v2688
      %v2819 = vadd.f32 %v2548, %v2693
      %v2820 = vadd.f32 %v2549, %v2698
      %v2821 = vadd.f32 %v2550, %v2703
      %v2822 = vadd.f32 %v2551, %v2708
      %v2823 = vadd.f32 %v2552, %v2713
      %v2824 = vadd.f32 %v2553, %v2718
      %v2825 = vadd.f32 %v2554, %v2723
      %v2826 = vadd.f32 %v2555, %v2728
      %v2827 = vadd.f32 %v2556, %v2733
      %v2828 = vadd.f32 %v2557, %v2738
      %v2829 = vadd.f32 %v2558, %v2743
      %v2830 = vadd.f32 %v2559, %v2748
      %v2831 = vadd.f32 %v2560, %v2753
      %v2832 = vadd.f32 %v2561, %v2758
      %v2833 = vadd.f32 %v2562, %v2763
      %v2834 = vadd.f32 %v2563, %v2768
      %v2835 = vadd.f32 %v2564, %v2773
      %v2836 = vadd.f32 %v2565, %v2778
      %v2837 = vadd.f32 %v2566, %v2783
      %v2838 = vadd.f32 %v2567, %v2788
      %v2839 = vadd.f32 %v2568, %v2793
      %v2840 = vadd.f32 %v2569, %v2798
      %v2841 = vadd.f32 %v2570, %v2803
      %v2842 = vadd.f32 %v2571, %v2808
      %v2843 = vrot.slane %v371, 2
      %v2844 = vrot.slane %v372, 2
      %v2845 = vsel %vm1091, %v2843, %v2844
      %v2846 = vrot.slane %v373, 2
      %v2847 = vsel %vm1091, %v2844, %v2846
      %v2848 = vld [vmem:[%s2 + $0x20] sm:$0xf]
      %v2849 = vsel %vm505, %v2845, 0
      %v2851 = vsel %vm505, %v2847, 0
      %v2854 = vsel %vm570, %v2848, 0
      %2856 = vmatprep.subr.mxu0 0.0
      %2857 = vmatpush1.msra.mxu0 0.0
      %2858 = vmatprep.subr.mxu0 0.0
      %2859 = vmatpush1.msra.mxu0 0.0
      %2860 = vmatprep.subr.mxu0 0.0
      %2861 = vmatpush1.msra.mxu0 0.0
      %2862 = vmatprep.subr.mxu0 0.0
      %2863 = vmatpush1.msra.mxu0 0.0
      %2864 = vmatprep.subr.mxu0 0.0
      %2865 = vmatpush1.msra.mxu0 0.0
      %2866 = vmatprep.subr.mxu0 0.0
      %2867 = vmatpush1.msra.mxu0 0.0
      %2868 = vmatprep.subr.mxu0 0.0
      %2869 = vmatpush1.msra.mxu0 0.0
      %2870 = vmatprep.subr.mxu0 0.0
      %2871 = vmatpush1.msra.mxu0 0.0
      %2872 = vmatprep.subr.mxu0 0.0
      %2873 = vmatpush1.msra.mxu0 0.0
      %2874 = vmatprep.subr.mxu0 0.0
      %2875 = vmatpush1.msra.mxu0 0.0
      %2876 = vmatprep.subr.mxu0 0.0
      %2877 = vmatpush1.msra.mxu0 0.0
      %2878 = vmatprep.subr.mxu0 0.0
      %2879 = vmatpush1.msra.mxu0 0.0
      %2880 = vmatprep.subr.mxu0 0.0
      %2881 = vmatpush1.msra.mxu0 0.0
      %2882 = vmatprep.subr.mxu0 0.0
      %2883 = vmatpush1.msra.mxu0 0.0
      %2884 = vmatprep.subr.mxu0 0.0
      %2885 = vmatpush1.msra.mxu0 0.0
      %2886 = vmatprep.subr.mxu0 0.0
      %2887 = vmatpush1.msra.mxu0 %v2854
      %2888 = vmatprep.subr.mxu0 0.0
      %2889 = vmatpush2.msra.mxu0 0.0
      %2890 = vmatprep.subr.mxu0 0.0
      %2891 = vmatpush2.msra.mxu0 0.0
      %2892 = vmatprep.subr.mxu0 0.0
      %2893 = vmatpush2.msra.mxu0 0.0
      %2894 = vmatprep.subr.mxu0 0.0
      %2895 = vmatpush2.msra.mxu0 0.0
      %2896 = vmatprep.subr.mxu0 0.0
      %2897 = vmatpush2.msra.mxu0 0.0
      %2898 = vmatprep.subr.mxu0 0.0
      %2899 = vmatpush2.msra.mxu0 0.0
      %2900 = vmatprep.subr.mxu0 0.0
      %2901 = vmatpush2.msra.mxu0 0.0
      %2902 = vmatprep.subr.mxu0 0.0
      %2903 = vmatpush2.msra.mxu0 0.0
      %2904 = vmatprep.subr.mxu0 0.0
      %2905 = vmatpush2.msra.mxu0 0.0
      %2906 = vmatprep.subr.mxu0 0.0
      %2907 = vmatpush2.msra.mxu0 0.0
      %2908 = vmatprep.subr.mxu0 0.0
      %2909 = vmatpush2.msra.mxu0 0.0
      %2910 = vmatprep.subr.mxu0 0.0
      %2911 = vmatpush2.msra.mxu0 0.0
      %2912 = vmatprep.subr.mxu0 0.0
      %2913 = vmatpush2.msra.mxu0 0.0
      %2914 = vmatprep.subr.mxu0 0.0
      %2915 = vmatpush2.msra.mxu0 0.0
      %2916 = vmatprep.subr.mxu0 0.0
      %2917 = vmatpush2.msra.mxu0 0.0
      %2918 = vmatprep.subr.mxu0 0.0
      %2919 = vmatpush2.msra.mxu0 0.0
      %2920 = vmatprep.mubr.f32.mxu0 0.0
      %2921 = vmatmul.mubr.f32.gmra.mxu0 %v1181
      %v2922 = vpop.f32.mrf.mxu0
      %v2923 = vadd.f32 0.0, %v2922
      %v2924 = vpop.f32.mrf.mxu0
      %2925 = vmatprep.mubr.f32.mxu0 0.0
      %2926 = vmatmul.mubr.f32.gmra.mxu0 %v1183
      %v2927 = vpop.f32.mrf.mxu0
      %v2928 = vadd.f32 0.0, %v2927
      %v2929 = vpop.f32.mrf.mxu0
      %2930 = vmatprep.mubr.f32.mxu0 0.0
      %2931 = vmatmul.mubr.f32.gmra.mxu0 %v1185
      %v2932 = vpop.f32.mrf.mxu0
      %v2933 = vadd.f32 0.0, %v2932
      %v2934 = vpop.f32.mrf.mxu0
      %2935 = vmatprep.mubr.f32.mxu0 0.0
      %2936 = vmatmul.mubr.f32.gmra.mxu0 %v1187
      %v2937 = vpop.f32.mrf.mxu0
      %v2938 = vadd.f32 0.0, %v2937
      %v2939 = vpop.f32.mrf.mxu0
      %2940 = vmatprep.mubr.f32.mxu0 0.0
      %2941 = vmatmul.mubr.f32.gmra.mxu0 %v1189
      %v2942 = vpop.f32.mrf.mxu0
      %v2943 = vadd.f32 0.0, %v2942
      %v2944 = vpop.f32.mrf.mxu0
      %2945 = vmatprep.mubr.f32.mxu0 0.0
      %2946 = vmatmul.mubr.f32.gmra.mxu0 %v1191
      %v2947 = vpop.f32.mrf.mxu0
      %v2948 = vadd.f32 0.0, %v2947
      %v2949 = vpop.f32.mrf.mxu0
      %2950 = vmatprep.mubr.f32.mxu0 0.0
      %2951 = vmatmul.mubr.f32.gmra.mxu0 %v1193
      %v2952 = vpop.f32.mrf.mxu0
      %v2953 = vadd.f32 0.0, %v2952
      %v2954 = vpop.f32.mrf.mxu0
      %2955 = vmatprep.mubr.f32.mxu0 0.0
      %2956 = vmatmul.mubr.f32.gmra.mxu0 %v1195
      %v2957 = vpop.f32.mrf.mxu0
      %v2958 = vadd.f32 0.0, %v2957
      %v2959 = vpop.f32.mrf.mxu0
      %2960 = vmatprep.mubr.f32.mxu0 0.0
      %2961 = vmatmul.mubr.f32.gmra.mxu0 %v1197
      %v2962 = vpop.f32.mrf.mxu0
      %v2963 = vadd.f32 0.0, %v2962
      %v2964 = vpop.f32.mrf.mxu0
      %2965 = vmatprep.mubr.f32.mxu0 0.0
      %2966 = vmatmul.mubr.f32.gmra.mxu0 %v1199
      %v2967 = vpop.f32.mrf.mxu0
      %v2968 = vadd.f32 0.0, %v2967
      %v2969 = vpop.f32.mrf.mxu0
      %2970 = vmatprep.mubr.f32.mxu0 0.0
      %2971 = vmatmul.mubr.f32.gmra.mxu0 %v1201
      %v2972 = vpop.f32.mrf.mxu0
      %v2973 = vadd.f32 0.0, %v2972
      %v2974 = vpop.f32.mrf.mxu0
      %2975 = vmatprep.mubr.f32.mxu0 0.0
      %2976 = vmatmul.mubr.f32.gmra.mxu0 %v1203
      %v2977 = vpop.f32.mrf.mxu0
      %v2978 = vadd.f32 0.0, %v2977
      %v2979 = vpop.f32.mrf.mxu0
      %2980 = vmatprep.mubr.f32.mxu0 0.0
      %2981 = vmatmul.mubr.f32.gmra.mxu0 %v1205
      %v2982 = vpop.f32.mrf.mxu0
      %v2983 = vadd.f32 0.0, %v2982
      %v2984 = vpop.f32.mrf.mxu0
      %2985 = vmatprep.mubr.f32.mxu0 0.0
      %2986 = vmatmul.mubr.f32.gmra.mxu0 %v1207
      %v2987 = vpop.f32.mrf.mxu0
      %v2988 = vadd.f32 0.0, %v2987
      %v2989 = vpop.f32.mrf.mxu0
      %2990 = vmatprep.mubr.f32.mxu0 0.0
      %2991 = vmatmul.mubr.f32.gmra.mxu0 %v1209
      %v2992 = vpop.f32.mrf.mxu0
      %v2993 = vadd.f32 0.0, %v2992
      %v2994 = vpop.f32.mrf.mxu0
      %2995 = vmatprep.mubr.f32.mxu0 0.0
      %2996 = vmatmul.mubr.f32.gmra.mxu0 %v1211
      %v2997 = vpop.f32.mrf.mxu0
      %v2998 = vadd.f32 0.0, %v2997
      %v2999 = vpop.f32.mrf.mxu0
      %3000 = vmatprep.mubr.f32.mxu0 0.0
      %3001 = vmatmul.mubr.f32.gmra.mxu0 %v1213
      %v3002 = vpop.f32.mrf.mxu0
      %v3003 = vadd.f32 0.0, %v3002
      %v3004 = vpop.f32.mrf.mxu0
      %3005 = vmatprep.mubr.f32.mxu0 0.0
      %3006 = vmatmul.mubr.f32.gmra.mxu0 %v1215
      %v3007 = vpop.f32.mrf.mxu0
      %v3008 = vadd.f32 0.0, %v3007
      %v3009 = vpop.f32.mrf.mxu0
      %3010 = vmatprep.mubr.f32.mxu0 0.0
      %3011 = vmatmul.mubr.f32.gmra.mxu0 %v1217
      %v3012 = vpop.f32.mrf.mxu0
      %v3013 = vadd.f32 0.0, %v3012
      %v3014 = vpop.f32.mrf.mxu0
      %3015 = vmatprep.mubr.f32.mxu0 0.0
      %3016 = vmatmul.mubr.f32.gmra.mxu0 %v1219
      %v3017 = vpop.f32.mrf.mxu0
      %v3018 = vadd.f32 0.0, %v3017
      %v3019 = vpop.f32.mrf.mxu0
      %3020 = vmatprep.mubr.f32.mxu0 0.0
      %3021 = vmatmul.mubr.f32.gmra.mxu0 %v1221
      %v3022 = vpop.f32.mrf.mxu0
      %v3023 = vadd.f32 0.0, %v3022
      %v3024 = vpop.f32.mrf.mxu0
      %3025 = vmatprep.mubr.f32.mxu0 0.0
      %3026 = vmatmul.mubr.f32.gmra.mxu0 %v1223
      %v3027 = vpop.f32.mrf.mxu0
      %v3028 = vadd.f32 0.0, %v3027
      %v3029 = vpop.f32.mrf.mxu0
      %3030 = vmatprep.mubr.f32.mxu0 0.0
      %3031 = vmatmul.mubr.f32.gmra.mxu0 %v1225
      %v3032 = vpop.f32.mrf.mxu0
      %v3033 = vadd.f32 0.0, %v3032
      %v3034 = vpop.f32.mrf.mxu0
      %3035 = vmatprep.mubr.f32.mxu0 0.0
      %3036 = vmatmul.mubr.f32.gmra.mxu0 %v1227
      %v3037 = vpop.f32.mrf.mxu0
      %v3038 = vadd.f32 0.0, %v3037
      %v3039 = vpop.f32.mrf.mxu0
      %3040 = vmatprep.mubr.f32.mxu0 0.0
      %3041 = vmatmul.mubr.f32.gmra.mxu0 %v1229
      %v3042 = vpop.f32.mrf.mxu0
      %v3043 = vadd.f32 0.0, %v3042
      %v3044 = vpop.f32.mrf.mxu0
      %3045 = vmatprep.mubr.f32.mxu0 0.0
      %3046 = vmatmul.mubr.f32.gmra.mxu0 %v1231
      %v3047 = vpop.f32.mrf.mxu0
      %v3048 = vadd.f32 0.0, %v3047
      %v3049 = vpop.f32.mrf.mxu0
      %3050 = vmatprep.mubr.f32.mxu0 0.0
      %3051 = vmatmul.mubr.f32.gmra.mxu0 %v1233
      %v3052 = vpop.f32.mrf.mxu0
      %v3053 = vadd.f32 0.0, %v3052
      %v3054 = vpop.f32.mrf.mxu0
      %3055 = vmatprep.mubr.f32.mxu0 0.0
      %3056 = vmatmul.mubr.f32.gmra.mxu0 %v1235
      %v3057 = vpop.f32.mrf.mxu0
      %v3058 = vadd.f32 0.0, %v3057
      %v3059 = vpop.f32.mrf.mxu0
      %3060 = vmatprep.mubr.f32.mxu0 0.0
      %3061 = vmatmul.mubr.f32.gmra.mxu0 %v2041
      %v3062 = vpop.f32.mrf.mxu0
      %v3063 = vadd.f32 0.0, %v3062
      %v3064 = vpop.f32.mrf.mxu0
      %3065 = vmatprep.mubr.f32.mxu0 0.0
      %3066 = vmatmul.mubr.f32.gmra.mxu0 %v2043
      %v3067 = vpop.f32.mrf.mxu0
      %v3068 = vadd.f32 0.0, %v3067
      %v3069 = vpop.f32.mrf.mxu0
      %3070 = vmatprep.mubr.f32.mxu0 0.0
      %3071 = vmatmul.mubr.f32.gmra.mxu0 %v2849
      %v3072 = vpop.f32.mrf.mxu0
      %v3073 = vadd.f32 0.0, %v3072
      %v3074 = vpop.f32.mrf.mxu0
      %3075 = vmatprep.mubr.f32.mxu0 0.0
      %3076 = vmatmul.mubr.f32.gmra.mxu0 %v2851
      %v3077 = vpop.f32.mrf.mxu0
      %v3078 = vadd.f32 0.0, %v3077
      %v3079 = vpop.f32.mrf.mxu0
      %3080 = vdwg.mxu0
      %v3081 = vadd.f32 %v2811, %v2923
      %v3082 = vadd.f32 %v2812, %v2928
      %v3083 = vadd.f32 %v2813, %v2933
      %v3084 = vadd.f32 %v2814, %v2938
      %v3085 = vadd.f32 %v2815, %v2943
      %v3086 = vadd.f32 %v2816, %v2948
      %v3087 = vadd.f32 %v2817, %v2953
      %v3088 = vadd.f32 %v2818, %v2958
      %v3089 = vadd.f32 %v2819, %v2963
      %v3090 = vadd.f32 %v2820, %v2968
      %v3091 = vadd.f32 %v2821, %v2973
      %v3092 = vadd.f32 %v2822, %v2978
      %v3093 = vadd.f32 %v2823, %v2983
      %v3094 = vadd.f32 %v2824, %v2988
      %v3095 = vadd.f32 %v2825, %v2993
      %v3096 = vadd.f32 %v2826, %v2998
      %v3097 = vadd.f32 %v2827, %v3003
      %v3098 = vadd.f32 %v2828, %v3008
      %v3099 = vadd.f32 %v2829, %v3013
      %v3100 = vadd.f32 %v2830, %v3018
      %v3101 = vadd.f32 %v2831, %v3023
      %v3102 = vadd.f32 %v2832, %v3028
      %v3103 = vadd.f32 %v2833, %v3033
      %v3104 = vadd.f32 %v2834, %v3038
      %v3105 = vadd.f32 %v2835, %v3043
      %v3106 = vadd.f32 %v2836, %v3048
      %v3107 = vadd.f32 %v2837, %v3053
      %v3108 = vadd.f32 %v2838, %v3058
      %v3109 = vadd.f32 %v2839, %v3063
      %v3110 = vadd.f32 %v2840, %v3068
      %v3111 = vadd.f32 %v2841, %v3073
      %v3112 = vadd.f32 %v2842, %v3078
      %v3113 = vld [vmem:[%s3] sm:$0x1]
      %v3115 = vlaneseq
      %v3116 = vshrl.u32 %v3115, 7
      %v3117 = vsub.s32 0, %v3116
      %v3118 = vrot.slane %v3113, %v3117
      %v3120 = vadd.f32 %v3081, %v3118
      %v3121 = vadd.f32 %v3082, %v3118
      %v3122 = vadd.f32 %v3083, %v3118
      %v3123 = vadd.f32 %v3084, %v3118
      %v3124 = vadd.f32 %v3085, %v3118
      %v3125 = vadd.f32 %v3086, %v3118
      %v3126 = vadd.f32 %v3087, %v3118
      %v3127 = vadd.f32 %v3088, %v3118
      %v3128 = vadd.f32 %v3089, %v3118
      %v3129 = vadd.f32 %v3090, %v3118
      %v3130 = vadd.f32 %v3091, %v3118
      %v3131 = vadd.f32 %v3092, %v3118
      %v3132 = vadd.f32 %v3093, %v3118
      %v3133 = vadd.f32 %v3094, %v3118
      %v3134 = vadd.f32 %v3095, %v3118
      %v3135 = vadd.f32 %v3096, %v3118
      %v3136 = vadd.f32 %v3097, %v3118
      %v3137 = vadd.f32 %v3098, %v3118
      %v3138 = vadd.f32 %v3099, %v3118
      %v3139 = vadd.f32 %v3100, %v3118
      %v3140 = vadd.f32 %v3101, %v3118
      %v3141 = vadd.f32 %v3102, %v3118
      %v3142 = vadd.f32 %v3103, %v3118
      %v3143 = vadd.f32 %v3104, %v3118
      %v3144 = vadd.f32 %v3105, %v3118
      %v3145 = vadd.f32 %v3106, %v3118
      %v3146 = vadd.f32 %v3107, %v3118
      %v3147 = vadd.f32 %v3108, %v3118
      %v3148 = vadd.f32 %v3109, %v3118
      %v3149 = vadd.f32 %v3110, %v3118
      %v3150 = vadd.f32 %v3111, %v3118
      %v3151 = vadd.f32 %v3112, %v3118
      %v3152 = vmax.f32 %v3120, 0.0
      %v3153 = vmax.f32 %v3121, 0.0
      %v3154 = vmax.f32 %v3122, 0.0
      %v3155 = vmax.f32 %v3123, 0.0
      %v3156 = vmax.f32 %v3124, 0.0
      %v3157 = vmax.f32 %v3125, 0.0
      %v3158 = vmax.f32 %v3126, 0.0
      %v3159 = vmax.f32 %v3127, 0.0
      %v3160 = vmax.f32 %v3128, 0.0
      %v3161 = vmax.f32 %v3129, 0.0
      %v3162 = vmax.f32 %v3130, 0.0
      %v3163 = vmax.f32 %v3131, 0.0
      %v3164 = vmax.f32 %v3132, 0.0
      %v3165 = vmax.f32 %v3133, 0.0
      %v3166 = vmax.f32 %v3134, 0.0
      %v3167 = vmax.f32 %v3135, 0.0
      %v3168 = vmax.f32 %v3136, 0.0
      %v3169 = vmax.f32 %v3137, 0.0
      %v3170 = vmax.f32 %v3138, 0.0
      %v3171 = vmax.f32 %v3139, 0.0
      %v3172 = vmax.f32 %v3140, 0.0
      %v3173 = vmax.f32 %v3141, 0.0
      %v3174 = vmax.f32 %v3142, 0.0
      %v3175 = vmax.f32 %v3143, 0.0
      %v3176 = vmax.f32 %v3144, 0.0
      %v3177 = vmax.f32 %v3145, 0.0
      %v3178 = vmax.f32 %v3146, 0.0
      %v3179 = vmax.f32 %v3147, 0.0
      %v3180 = vmax.f32 %v3148, 0.0
      %v3181 = vmax.f32 %v3149, 0.0
      %v3182 = vmax.f32 %v3150, 0.0
      %v3183 = vmax.f32 %v3151, 0.0
      %vm3184 = vcmask 64512
      %3185 = vst.msk [vmem:[%s318] sm:$0xff] %vm3184, %v3152
      %3186 = vst.msk [vmem:[%s318 + $0x8] sm:$0xff] %vm3184, %v3153
      %3187 = vst.msk [vmem:[%s318 + $0x10] sm:$0xff] %vm3184, %v3154
      %3188 = vst.msk [vmem:[%s318 + $0x18] sm:$0xff] %vm3184, %v3155
      %3189 = vst.msk [vmem:[%s318 + $0x20] sm:$0xff] %vm3184, %v3156
      %3190 = vst.msk [vmem:[%s318 + $0x28] sm:$0xff] %vm3184, %v3157
      %3191 = vst.msk [vmem:[%s318 + $0x30] sm:$0xff] %vm3184, %v3158
      %3192 = vst.msk [vmem:[%s318 + $0x38] sm:$0xff] %vm3184, %v3159
      %3193 = vst.msk [vmem:[%s318 + $0x40] sm:$0xff] %vm3184, %v3160
      %3194 = vst.msk [vmem:[%s318 + $0x48] sm:$0xff] %vm3184, %v3161
      %3195 = vst.msk [vmem:[%s318 + $0x50] sm:$0xff] %vm3184, %v3162
      %3196 = vst.msk [vmem:[%s318 + $0x58] sm:$0xff] %vm3184, %v3163
      %3197 = vst.msk [vmem:[%s318 + $0x60] sm:$0xff] %vm3184, %v3164
      %3198 = vst.msk [vmem:[%s318 + $0x68] sm:$0xff] %vm3184, %v3165
      %3199 = vst.msk [vmem:[%s318 + $0x70] sm:$0xff] %vm3184, %v3166
      %3200 = vst.msk [vmem:[%s318 + $0x78] sm:$0xff] %vm3184, %v3167
      %3201 = vst.msk [vmem:[%s318 + $0x80] sm:$0xff] %vm3184, %v3168
      %3202 = vst.msk [vmem:[%s318 + $0x88] sm:$0xff] %vm3184, %v3169
      %3203 = vst.msk [vmem:[%s318 + $0x90] sm:$0xff] %vm3184, %v3170
      %3204 = vst.msk [vmem:[%s318 + $0x98] sm:$0xff] %vm3184, %v3171
      %3205 = vst.msk [vmem:[%s318 + $0xa0] sm:$0xff] %vm3184, %v3172
      %3206 = vst.msk [vmem:[%s318 + $0xa8] sm:$0xff] %vm3184, %v3173
      %3207 = vst.msk [vmem:[%s318 + $0xb0] sm:$0xff] %vm3184, %v3174
      %3208 = vst.msk [vmem:[%s318 + $0xb8] sm:$0xff] %vm3184, %v3175
      %3209 = vst.msk [vmem:[%s318 + $0xc0] sm:$0xff] %vm3184, %v3176
      %3210 = vst.msk [vmem:[%s318 + $0xc8] sm:$0xff] %vm3184, %v3177
      %3211 = vst.msk [vmem:[%s318 + $0xd0] sm:$0xff] %vm3184, %v3178
      %3212 = vst.msk [vmem:[%s318 + $0xd8] sm:$0xff] %vm3184, %v3179
      %3213 = vst.msk [vmem:[%s318 + $0xe0] sm:$0xff] %vm3184, %v3180
      %3214 = vst.msk [vmem:[%s318 + $0xe8] sm:$0xff] %vm3184, %v3181
      %3215 = vst.msk [vmem:[%s318 + $0xf0] sm:$0xff] %vm3184, %v3182
      %3216 = vst.msk [vmem:[%s318 + $0xf8] sm:$0xff] %vm3184, %v3183
      %s3217 = smul.u32 16, %s20
      %p3218 = scmp.lt.s32.totalorder %s19, 1
      %s3219 = scalar_select %p3218, %s19, 1
      %p3220 = scmp.lt.s32.totalorder %s3217, 15
      %s3221 = scalar_select %p3220, %s3217, 15
      %s3222 = smul.addr %s3221, 2
      %s3223 = smul.addr %s3219, 32
      %s3224 = sadd.s32 %s3222, %s3223
      %s3225 = smul.addr %s3224, 8
      %s3226 = scalar_lea.vmem %s4, %s3225
      // Predicated region
      $region37: #{base_conv.1} parent=35 // pred_check
        %p3227 = pneg %p149
      $region38: #{base_conv.1} parent=35 // pred_check_branch
        %3229 = sbr.rel (%p3227) target = $region40
      $region39: #{base_conv.1} parent=35 // pred_region
        %s3230 = smul.u32 16, %s20
      $region40: #{base_conv.1} parent=35 // pred_fallthru
        _
    $region36: #{base_conv.1} parent=5 // pred_fallthru
      _
    %p3231 = scmp.le.s32.totalorder 2, %s10
    // Predicated region
    $region41: #{base_conv.1} parent=5 // pred_check
      %p3232 = pneg %p3231
    $region42: #{base_conv.1} parent=5 // pred_check_branch
      %3234 = sbr.rel (%p3232) target = $region44
    $region43: #{base_conv.1} parent=5 // pred_region
      %s3235 = ssub.s32 %s10, 2
      // Predicated region
      $region45: #{base_conv.1} parent=43 // pred_check
        %p3236 = pneg %p155
      $region46: #{base_conv.1} parent=43 // pred_check_branch
        %3238 = sbr.rel (%p3236) target = $region48
      $region47: #{base_conv.1} parent=43 // pred_region
        %s3239 = smul.u32 16, %s22
        %p3240 = scmp.lt.s32.totalorder %s21, 1
        %s3241 = scalar_select %p3240, %s21, 1
        %p3242 = scmp.lt.s32.totalorder %s3239, 15
        %s3243 = scalar_select %p3242, %s3239, 15
        %s3244 = smul.addr %s3243, 2
        %s3245 = smul.addr %s3241, 32
        %s3246 = sadd.s32 %s3244, %s3245
        %s3247 = smul.addr %s3246, 8
        %s3248 = scalar_lea.vmem %s4, %s3247
      $region48: #{base_conv.1} parent=43 // pred_fallthru
        _
    $region44: #{base_conv.1} parent=5 // pred_fallthru
      _
  $region6: #{base_conv.1} parent=0 // loop_footer
    %s14 = sadd.s32 1, %s10
  $region7: #{base_conv.1} parent=0 // loop_footer_branch
    %9 = sbr.rel target = $region3
  $region8: #{base_conv.1} parent=0 // loop_exit
    _

</llo_original>
